<compile_context>
chip_gen: v7x
topology: tpu7x:2x2x1
jax: 0.10.0
libtpu: 0.0.40
codegen_flags: <defaults>
</compile_context>

<pallas_src>
import functools
import math

import numpy as np

import jax
import jax.numpy as jnp
from jax.experimental import pallas as pl
from jax.experimental.pallas import tpu as pltpu


# -----------------------------------------------------------------------------
# In-kernel helpers (pure value manipulation; everything stays in VMEM)
# -----------------------------------------------------------------------------
def _reflect_pad1(x):
    """PyTorch 'reflect' padding of 1 on the (H, W) axes of an (H, W, C) value."""
    x = jnp.concatenate([x[1:2], x, x[-2:-1]], axis=0)
    x = jnp.concatenate([x[:, 1:2], x, x[:, -2:-1]], axis=1)
    return x


def _patches3x3(x, H, W):
    """(H, W, C) -> reflect pad 1 -> im2col (H*W, 9*C).

    Column order is (ky, kx, cin), i.e. the row-major flatten of an HWIO
    (3, 3, Cin, Cout) weight, so the conv becomes ONE big-K MXU matmul."""
    C = x.shape[-1]
    xp = _reflect_pad1(x)
    cols = [xp[ky:ky + H, kx:kx + W, :].reshape(H * W, C)
            for ky in range(3) for kx in range(3)]
    return jnp.concatenate(cols, axis=-1)


# -----------------------------------------------------------------------------
# Fused Up2 kernel: upsample + (virtual) concat + conv/BN/ReLU x2
# -----------------------------------------------------------------------------
def _up2_fused_kernel(x1_ref, x2_ref, up_ref, w1a_ref, w1b_ref, s1_ref, b1_ref,
                      w2_ref, s2_ref, b2_ref, o_ref,
                      *, h, w, H, W, C1, C2, Cmid, Cout):
    f32, bf16 = jnp.float32, jnp.bfloat16

    # (1) bilinear x2 upsample (align_corners=True) + F.pad/crop to (H, W),
    #     folded into a constant interpolation matrix -> one MXU matmul.
    x1 = x1_ref[0].reshape(h * w, C1)
    x1u = jnp.dot(up_ref[...], x1, preferred_element_type=f32).reshape(H, W, C1)

    # (2) conv1 over the *virtual* concat([x2, x1u], channel): the concat is
    #     never materialized -- the weight is split along K into two
    #     accumulating big-K im2col matmuls (bf16 inputs, f32 accumulation).
    p2 = _patches3x3(x2_ref[0].astype(bf16), H, W)               # (H*W, 9*C2)
    p1 = _patches3x3(x1u.astype(bf16), H, W)                     # (H*W, 9*C1)
    acc = jnp.dot(p2, w1a_ref[...], preferred_element_type=f32)
    acc = acc + jnp.dot(p1, w1b_ref[...], preferred_element_type=f32)
    y = jnp.maximum(acc * s1_ref[...] + b1_ref[...], 0.0)        # BN(eval)+ReLU
    # Dropout(0.2) is eval-mode identity.

    # (3) conv2 + BN + ReLU; the intermediate never leaves VMEM.
    pm = _patches3x3(y.astype(bf16).reshape(H, W, Cmid), H, W)   # (H*W, 9*Cmid)
    acc2 = jnp.dot(pm, w2_ref[...], preferred_element_type=f32)
    y2 = jnp.maximum(acc2 * s2_ref[...] + b2_ref[...], 0.0)
    o_ref[0] = y2.reshape(H, W, Cout).astype(o_ref.dtype)


# -----------------------------------------------------------------------------
# Trace-time constants / weight preparation
# -----------------------------------------------------------------------------
def _upsample_pad_matrix(h, w, H_out, W_out):
    """(H_out*W_out, h*w) matrix implementing: x2 bilinear upsample with
    align_corners=True of an (h, w) map, followed by Up2's F.pad (zero pad /
    crop) to (H_out, W_out).  Pure numpy, evaluated at trace time."""
    Hup, Wup = 2 * h, 2 * w

    def axis_mat(n_in, n_out):
        A = np.zeros((n_out, n_in), np.float64)
        if n_in == 1:
            A[:, 0] = 1.0
            return A
        scale = (n_in - 1) / (n_out - 1)
        for i in range(n_out):
            src = i * scale
            lo = int(math.floor(src))
            hi = min(lo + 1, n_in - 1)
            t = src - lo
            A[i, lo] += 1.0 - t
            A[i, hi] += t
        return A

    m_full = np.kron(axis_mat(h, Hup), axis_mat(w, Wup))         # (Hup*Wup, h*w)
    pad_top, pad_left = (H_out - Hup) // 2, (W_out - Wup) // 2
    m = np.zeros((H_out * W_out, h * w), np.float64)
    for i in range(H_out):
        si = i - pad_top
        if not (0 <= si < Hup):
            continue
        for j in range(W_out):
            sj = j - pad_left
            if 0 <= sj < Wup:
                m[i * W_out + j] = m_full[si * Wup + sj]
    return jnp.asarray(m, jnp.float32)


def _fold_bn(gamma, beta, mean, var, eps=1e-5):
    """Eval-mode BatchNorm folded to per-channel scale/bias."""
    scale = gamma / jnp.sqrt(var + eps)
    return scale, beta - mean * scale


# -----------------------------------------------------------------------------
# Forward wrapper
# -----------------------------------------------------------------------------
def up2_forward(x1_nchw, x2_nchw, params):
    """Up2.forward (bilinear=True, activation='relu', eval mode).

    x1_nchw: (N, C1, h, w) decoder feature (to be upsampled)
    x2_nchw: (N, C2, H, W) skip connection
    returns: (N, Cout, H, W)
    """
    x1 = jnp.transpose(x1_nchw, (0, 2, 3, 1)).astype(jnp.float32)   # NHWC
    x2 = jnp.transpose(x2_nchw, (0, 2, 3, 1)).astype(jnp.float32)
    N, h, w, C1 = x1.shape
    _, H, W, C2 = x2.shape

    w1 = params["w1"]                   # (3, 3, C2 + C1, Cmid)  HWIO, cin=[x2|x1]
    w2 = params["w2"]                   # (3, 3, Cmid, Cout)     HWIO
    Cmid, Cout = w1.shape[-1], w2.shape[-1]
    assert w1.shape[2] == C1 + C2, "conv1 expects cat([x2, x1]) channels"

    s1, b1 = _fold_bn(**params["bn1"])
    s2, b2 = _fold_bn(**params["bn2"])

    # im2col weight layout, bf16 (halves weight DMA bytes); split along K so the
    # [x2, x1] concat never hits HBM.
    w1a = w1[:, :, :C2, :].reshape(9 * C2, Cmid).astype(jnp.bfloat16)
    w1b = w1[:, :, C2:, :].reshape(9 * C1, Cmid).astype(jnp.bfloat16)
    w2f = w2.reshape(9 * Cmid, Cout).astype(jnp.bfloat16)

    up_mat = _upsample_pad_matrix(h, w, H, W)                 # trace-time constant

    kernel = functools.partial(_up2_fused_kernel, h=h, w=w, H=H, W=W,
                               C1=C1, C2=C2, Cmid=Cmid, Cout=Cout)
    # TODO(synk): for non-toy H, W tile the spatial axis with a 1-row halo
    # (grid=(N, H//TH)) and set vmem_limit_bytes so blocks fit v7x's 64 MiB VMEM.
    out = pl.pallas_call(
        kernel,
        out_shape=jax.ShapeDtypeStruct((N, H, W, Cout), jnp.float32),
        grid=(N,),
        in_specs=[
            pl.BlockSpec((1, h, w, C1), lambda n: (n, 0, 0, 0)),
            pl.BlockSpec((1, H, W, C2), lambda n: (n, 0, 0, 0)),
            pl.BlockSpec((H * W, h * w), lambda n: (0, 0)),
            pl.BlockSpec((9 * C2, Cmid), lambda n: (0, 0)),
            pl.BlockSpec((9 * C1, Cmid), lambda n: (0, 0)),
            pl.BlockSpec((1, Cmid), lambda n: (0, 0)),
            pl.BlockSpec((1, Cmid), lambda n: (0, 0)),
            pl.BlockSpec((9 * Cmid, Cout), lambda n: (0, 0)),
            pl.BlockSpec((1, Cout), lambda n: (0, 0)),
            pl.BlockSpec((1, Cout), lambda n: (0, 0)),
        ],
        out_specs=pl.BlockSpec((1, H, W, Cout), lambda n: (n, 0, 0, 0)),
        compiler_params=pltpu.CompilerParams(
            dimension_semantics=("parallel",),     # shard batch over v7x's 2 TCs
        ),
    )(x1, x2, up_mat, w1a, w1b,
      s1.reshape(1, Cmid), b1.reshape(1, Cmid),
      w2f, s2.reshape(1, Cout), b2.reshape(1, Cout))

    return jnp.transpose(out, (0, 3, 1, 2))                    # NHWC -> NCHW


# -----------------------------------------------------------------------------
# Deterministic parameter init
# -----------------------------------------------------------------------------
def init_up2_params(key, in_channels1, in_channels2, out_channels, mid_channels=None):
    """Conv weights are HWIO (to port real PyTorch weights: permute OIHW ->
    HWIO, i.e. w.permute(2, 3, 1, 0)).  BatchNorm uses eval-mode running stats
    with PyTorch defaults (mean=0, var=1, gamma=1, beta=0)."""
    mid = mid_channels or out_channels
    cat = in_channels1 + in_channels2
    k1, k2 = jax.random.split(key)

    def conv_w(k, cin, cout):
        std = 1.0 / math.sqrt(9 * cin)
        return jax.random.normal(k, (3, 3, cin, cout), jnp.float32) * std

    def bn(c):
        return dict(gamma=jnp.ones((c,), jnp.float32),
                    beta=jnp.zeros((c,), jnp.float32),
                    mean=jnp.zeros((c,), jnp.float32),
                    var=jnp.ones((c,), jnp.float32))

    return dict(w1=conv_w(k1, cat, mid), bn1=bn(mid),
                w2=conv_w(k2, mid, out_channels), bn2=bn(out_channels))


# -----------------------------------------------------------------------------
if __name__ == "__main__":
    key = jax.random.PRNGKey(0)
    k_x1, k_x2, k_p = jax.random.split(key, 3)

    # Typical decoder level: Up2(in_channels1=128, in_channels2=64, out_channels=64)
    N = 2
    C1, h, w = 128, 8, 8          # x1: feature to upsample
    C2, H, W = 64, 16, 16         # x2: skip connection
    Cout = 64

    x1 = jax.random.normal(k_x1, (N, C1, h, w), jnp.float32)    # NCHW
    x2 = jax.random.normal(k_x2, (N, C2, H, W), jnp.float32)    # NCHW
    params = init_up2_params(k_p, C1, C2, Cout)

    fwd = jax.jit(up2_forward)
    out = fwd(x1, x2, params)
    jax.block_until_ready(out)

    assert out.shape == (N, Cout, H, W), out.shape
    assert bool(jnp.all(jnp.isfinite(out)))
    print("KERNEL_OK")
</pallas_src>

<mosaic_0001>
module attributes {stable_mosaic.version = 11 : i64} {
  func.func @_up2_fused_kernel(%arg0: i32, %arg1: memref<1x8x8x128xf32, #tpu.memory_space<vmem>>, %arg2: memref<1x16x16x64xf32, #tpu.memory_space<vmem>>, %arg3: memref<256x64xf32, #tpu.memory_space<vmem>>, %arg4: memref<576x64xbf16, #tpu.memory_space<vmem>>, %arg5: memref<1152x64xbf16, #tpu.memory_space<vmem>>, %arg6: memref<1x64xf32, #tpu.memory_space<vmem>>, %arg7: memref<1x64xf32, #tpu.memory_space<vmem>>, %arg8: memref<576x64xbf16, #tpu.memory_space<vmem>>, %arg9: memref<1x64xf32, #tpu.memory_space<vmem>>, %arg10: memref<1x64xf32, #tpu.memory_space<vmem>>, %arg11: memref<1x16x16x64xf32, #tpu.memory_space<vmem>>) attributes {dimension_semantics = [#tpu.dimension_semantics<parallel>], iteration_bounds = array<i64: 2>, scalar_prefetch = 0 : i64, scratch_operands = 0 : i64, tpu.core_type = #tpu.core_type<tc>, window_params = [{transform_indices = @transform_0, window_bounds = array<i64: 1, 8, 8, 128>}, {transform_indices = @transform_1, window_bounds = array<i64: 1, 16, 16, 64>}, {pipeline_mode = #tpu.pipeline_mode<synchronous>, transform_indices = @transform_2, window_bounds = array<i64: 256, 64>}, {pipeline_mode = #tpu.pipeline_mode<synchronous>, transform_indices = @transform_3, window_bounds = array<i64: 576, 64>}, {pipeline_mode = #tpu.pipeline_mode<synchronous>, transform_indices = @transform_4, window_bounds = array<i64: 1152, 64>}, {pipeline_mode = #tpu.pipeline_mode<synchronous>, transform_indices = @transform_5, window_bounds = array<i64: 1, 64>}, {pipeline_mode = #tpu.pipeline_mode<synchronous>, transform_indices = @transform_6, window_bounds = array<i64: 1, 64>}, {pipeline_mode = #tpu.pipeline_mode<synchronous>, transform_indices = @transform_7, window_bounds = array<i64: 576, 64>}, {pipeline_mode = #tpu.pipeline_mode<synchronous>, transform_indices = @transform_8, window_bounds = array<i64: 1, 64>}, {pipeline_mode = #tpu.pipeline_mode<synchronous>, transform_indices = @transform_9, window_bounds = array<i64: 1, 64>}, {transform_indices = @transform_10, window_bounds = array<i64: 1, 16, 16, 64>}]} {
    %c0 = arith.constant 0 : index
    %c0_0 = arith.constant 0 : index
    %c0_1 = arith.constant 0 : index
    %c0_2 = arith.constant 0 : index
    %0 = vector.load %arg1[%c0, %c0_0, %c0_1, %c0_2] : memref<1x8x8x128xf32, #tpu.memory_space<vmem>>, vector<1x8x8x128xf32>
    %1 = vector.shape_cast %0 : vector<1x8x8x128xf32> to vector<8x8x128xf32>
    %2 = vector.shape_cast %1 : vector<8x8x128xf32> to vector<64x128xf32>
    %c0_3 = arith.constant 0 : index
    %c0_4 = arith.constant 0 : index
    %3 = vector.load %arg3[%c0_3, %c0_4] : memref<256x64xf32, #tpu.memory_space<vmem>>, vector<256x64xf32>
    %cst = arith.constant dense<0.000000e+00> : vector<256x128xf32>
    %4 = tpu.matmul %3, %2, %cst {dimension_numbers = #tpu.dot_dimension_numbers<[1], [0], [0], [1], [0, 0, 1, 1], [], []>} : vector<256x64xf32>, vector<64x128xf32>, vector<256x128xf32> -> vector<256x128xf32>
    %5 = vector.shape_cast %4 : vector<256x128xf32> to vector<16x16x128xf32>
    %c0_5 = arith.constant 0 : index
    %c0_6 = arith.constant 0 : index
    %c0_7 = arith.constant 0 : index
    %c0_8 = arith.constant 0 : index
    %6 = vector.load %arg2[%c0_5, %c0_6, %c0_7, %c0_8] : memref<1x16x16x64xf32, #tpu.memory_space<vmem>>, vector<1x16x16x64xf32>
    %7 = vector.shape_cast %6 : vector<1x16x16x64xf32> to vector<16x16x64xf32>
    %8 = arith.truncf %7 : vector<16x16x64xf32> to vector<16x16x64xbf16>
    %9 = vector.extract_strided_slice %8 {offsets = [1, 0, 0], sizes = [1, 16, 64], strides = [1, 1, 1]} : vector<16x16x64xbf16> to vector<1x16x64xbf16>
    %10 = vector.extract_strided_slice %8 {offsets = [14, 0, 0], sizes = [1, 16, 64], strides = [1, 1, 1]} : vector<16x16x64xbf16> to vector<1x16x64xbf16>
    %11 = tpu.concatenate %9, %8, %10 in 0 : vector<1x16x64xbf16>, vector<16x16x64xbf16>, vector<1x16x64xbf16> -> vector<18x16x64xbf16>
    %12 = vector.extract_strided_slice %11 {offsets = [0, 1, 0], sizes = [18, 1, 64], strides = [1, 1, 1]} : vector<18x16x64xbf16> to vector<18x1x64xbf16>
    %13 = vector.extract_strided_slice %11 {offsets = [0, 14, 0], sizes = [18, 1, 64], strides = [1, 1, 1]} : vector<18x16x64xbf16> to vector<18x1x64xbf16>
    %14 = tpu.concatenate %12, %11, %13 in 1 : vector<18x1x64xbf16>, vector<18x16x64xbf16>, vector<18x1x64xbf16> -> vector<18x18x64xbf16>
    %15 = vector.extract_strided_slice %14 {offsets = [0, 0, 0], sizes = [16, 16, 64], strides = [1, 1, 1]} : vector<18x18x64xbf16> to vector<16x16x64xbf16>
    %16 = vector.shape_cast %15 : vector<16x16x64xbf16> to vector<256x64xbf16>
    %17 = vector.extract_strided_slice %14 {offsets = [0, 1, 0], sizes = [16, 16, 64], strides = [1, 1, 1]} : vector<18x18x64xbf16> to vector<16x16x64xbf16>
    %18 = vector.shape_cast %17 : vector<16x16x64xbf16> to vector<256x64xbf16>
    %19 = vector.extract_strided_slice %14 {offsets = [0, 2, 0], sizes = [16, 16, 64], strides = [1, 1, 1]} : vector<18x18x64xbf16> to vector<16x16x64xbf16>
    %20 = vector.shape_cast %19 : vector<16x16x64xbf16> to vector<256x64xbf16>
    %21 = vector.extract_strided_slice %14 {offsets = [1, 0, 0], sizes = [16, 16, 64], strides = [1, 1, 1]} : vector<18x18x64xbf16> to vector<16x16x64xbf16>
    %22 = vector.shape_cast %21 : vector<16x16x64xbf16> to vector<256x64xbf16>
    %23 = vector.extract_strided_slice %14 {offsets = [1, 1, 0], sizes = [16, 16, 64], strides = [1, 1, 1]} : vector<18x18x64xbf16> to vector<16x16x64xbf16>
    %24 = vector.shape_cast %23 : vector<16x16x64xbf16> to vector<256x64xbf16>
    %25 = vector.extract_strided_slice %14 {offsets = [1, 2, 0], sizes = [16, 16, 64], strides = [1, 1, 1]} : vector<18x18x64xbf16> to vector<16x16x64xbf16>
    %26 = vector.shape_cast %25 : vector<16x16x64xbf16> to vector<256x64xbf16>
    %27 = vector.extract_strided_slice %14 {offsets = [2, 0, 0], sizes = [16, 16, 64], strides = [1, 1, 1]} : vector<18x18x64xbf16> to vector<16x16x64xbf16>
    %28 = vector.shape_cast %27 : vector<16x16x64xbf16> to vector<256x64xbf16>
    %29 = vector.extract_strided_slice %14 {offsets = [2, 1, 0], sizes = [16, 16, 64], strides = [1, 1, 1]} : vector<18x18x64xbf16> to vector<16x16x64xbf16>
    %30 = vector.shape_cast %29 : vector<16x16x64xbf16> to vector<256x64xbf16>
    %31 = vector.extract_strided_slice %14 {offsets = [2, 2, 0], sizes = [16, 16, 64], strides = [1, 1, 1]} : vector<18x18x64xbf16> to vector<16x16x64xbf16>
    %32 = vector.shape_cast %31 : vector<16x16x64xbf16> to vector<256x64xbf16>
    %33 = tpu.concatenate %16, %18, %20, %22, %24, %26, %28, %30, %32 in 1 : vector<256x64xbf16>, vector<256x64xbf16>, vector<256x64xbf16>, vector<256x64xbf16>, vector<256x64xbf16>, vector<256x64xbf16>, vector<256x64xbf16>, vector<256x64xbf16>, vector<256x64xbf16> -> vector<256x576xbf16>
    %34 = arith.truncf %5 : vector<16x16x128xf32> to vector<16x16x128xbf16>
    %35 = vector.extract_strided_slice %34 {offsets = [1, 0, 0], sizes = [1, 16, 128], strides = [1, 1, 1]} : vector<16x16x128xbf16> to vector<1x16x128xbf16>
    %36 = vector.extract_strided_slice %34 {offsets = [14, 0, 0], sizes = [1, 16, 128], strides = [1, 1, 1]} : vector<16x16x128xbf16> to vector<1x16x128xbf16>
    %37 = tpu.concatenate %35, %34, %36 in 0 : vector<1x16x128xbf16>, vector<16x16x128xbf16>, vector<1x16x128xbf16> -> vector<18x16x128xbf16>
    %38 = vector.extract_strided_slice %37 {offsets = [0, 1, 0], sizes = [18, 1, 128], strides = [1, 1, 1]} : vector<18x16x128xbf16> to vector<18x1x128xbf16>
    %39 = vector.extract_strided_slice %37 {offsets = [0, 14, 0], sizes = [18, 1, 128], strides = [1, 1, 1]} : vector<18x16x128xbf16> to vector<18x1x128xbf16>
    %40 = tpu.concatenate %38, %37, %39 in 1 : vector<18x1x128xbf16>, vector<18x16x128xbf16>, vector<18x1x128xbf16> -> vector<18x18x128xbf16>
    %41 = vector.extract_strided_slice %40 {offsets = [0, 0, 0], sizes = [16, 16, 128], strides = [1, 1, 1]} : vector<18x18x128xbf16> to vector<16x16x128xbf16>
    %42 = vector.shape_cast %41 : vector<16x16x128xbf16> to vector<256x128xbf16>
    %43 = vector.extract_strided_slice %40 {offsets = [0, 1, 0], sizes = [16, 16, 128], strides = [1, 1, 1]} : vector<18x18x128xbf16> to vector<16x16x128xbf16>
    %44 = vector.shape_cast %43 : vector<16x16x128xbf16> to vector<256x128xbf16>
    %45 = vector.extract_strided_slice %40 {offsets = [0, 2, 0], sizes = [16, 16, 128], strides = [1, 1, 1]} : vector<18x18x128xbf16> to vector<16x16x128xbf16>
    %46 = vector.shape_cast %45 : vector<16x16x128xbf16> to vector<256x128xbf16>
    %47 = vector.extract_strided_slice %40 {offsets = [1, 0, 0], sizes = [16, 16, 128], strides = [1, 1, 1]} : vector<18x18x128xbf16> to vector<16x16x128xbf16>
    %48 = vector.shape_cast %47 : vector<16x16x128xbf16> to vector<256x128xbf16>
    %49 = vector.extract_strided_slice %40 {offsets = [1, 1, 0], sizes = [16, 16, 128], strides = [1, 1, 1]} : vector<18x18x128xbf16> to vector<16x16x128xbf16>
    %50 = vector.shape_cast %49 : vector<16x16x128xbf16> to vector<256x128xbf16>
    %51 = vector.extract_strided_slice %40 {offsets = [1, 2, 0], sizes = [16, 16, 128], strides = [1, 1, 1]} : vector<18x18x128xbf16> to vector<16x16x128xbf16>
    %52 = vector.shape_cast %51 : vector<16x16x128xbf16> to vector<256x128xbf16>
    %53 = vector.extract_strided_slice %40 {offsets = [2, 0, 0], sizes = [16, 16, 128], strides = [1, 1, 1]} : vector<18x18x128xbf16> to vector<16x16x128xbf16>
    %54 = vector.shape_cast %53 : vector<16x16x128xbf16> to vector<256x128xbf16>
    %55 = vector.extract_strided_slice %40 {offsets = [2, 1, 0], sizes = [16, 16, 128], strides = [1, 1, 1]} : vector<18x18x128xbf16> to vector<16x16x128xbf16>
    %56 = vector.shape_cast %55 : vector<16x16x128xbf16> to vector<256x128xbf16>
    %57 = vector.extract_strided_slice %40 {offsets = [2, 2, 0], sizes = [16, 16, 128], strides = [1, 1, 1]} : vector<18x18x128xbf16> to vector<16x16x128xbf16>
    %58 = vector.shape_cast %57 : vector<16x16x128xbf16> to vector<256x128xbf16>
    %59 = tpu.concatenate %42, %44, %46, %48, %50, %52, %54, %56, %58 in 1 : vector<256x128xbf16>, vector<256x128xbf16>, vector<256x128xbf16>, vector<256x128xbf16>, vector<256x128xbf16>, vector<256x128xbf16>, vector<256x128xbf16>, vector<256x128xbf16>, vector<256x128xbf16> -> vector<256x1152xbf16>
    %c0_9 = arith.constant 0 : index
    %c0_10 = arith.constant 0 : index
    %60 = vector.load %arg4[%c0_9, %c0_10] : memref<576x64xbf16, #tpu.memory_space<vmem>>, vector<576x64xbf16>
    %cst_11 = arith.constant dense<0.000000e+00> : vector<256x64xf32>
    %61 = tpu.matmul %33, %60, %cst_11 {dimension_numbers = #tpu.dot_dimension_numbers<[1], [0], [0], [1], [0, 0, 1, 1], [], []>} : vector<256x576xbf16>, vector<576x64xbf16>, vector<256x64xf32> -> vector<256x64xf32>
    %c0_12 = arith.constant 0 : index
    %c0_13 = arith.constant 0 : index
    %62 = vector.load %arg5[%c0_12, %c0_13] : memref<1152x64xbf16, #tpu.memory_space<vmem>>, vector<1152x64xbf16>
    %cst_14 = arith.constant dense<0.000000e+00> : vector<256x64xf32>
    %63 = tpu.matmul %59, %62, %cst_14 {dimension_numbers = #tpu.dot_dimension_numbers<[1], [0], [0], [1], [0, 0, 1, 1], [], []>} : vector<256x1152xbf16>, vector<1152x64xbf16>, vector<256x64xf32> -> vector<256x64xf32>
    %64 = arith.addf %61, %63 : vector<256x64xf32>
    %c0_15 = arith.constant 0 : index
    %c0_16 = arith.constant 0 : index
    %65 = vector.load %arg6[%c0_15, %c0_16] : memref<1x64xf32, #tpu.memory_space<vmem>>, vector<1x64xf32>
    %66 = vector.broadcast %65 : vector<1x64xf32> to vector<256x64xf32>
    %67 = arith.mulf %64, %66 : vector<256x64xf32>
    %c0_17 = arith.constant 0 : index
    %c0_18 = arith.constant 0 : index
    %68 = vector.load %arg7[%c0_17, %c0_18] : memref<1x64xf32, #tpu.memory_space<vmem>>, vector<1x64xf32>
    %69 = vector.broadcast %68 : vector<1x64xf32> to vector<256x64xf32>
    %70 = arith.addf %67, %69 : vector<256x64xf32>
    %cst_19 = arith.constant 0.000000e+00 : f32
    %71 = vector.broadcast %cst_19 : f32 to vector<256x64xf32>
    %72 = arith.maximumf %70, %71 : vector<256x64xf32>
    %73 = arith.truncf %72 : vector<256x64xf32> to vector<256x64xbf16>
    %74 = vector.shape_cast %73 : vector<256x64xbf16> to vector<16x16x64xbf16>
    %75 = vector.extract_strided_slice %74 {offsets = [1, 0, 0], sizes = [1, 16, 64], strides = [1, 1, 1]} : vector<16x16x64xbf16> to vector<1x16x64xbf16>
    %76 = vector.extract_strided_slice %74 {offsets = [14, 0, 0], sizes = [1, 16, 64], strides = [1, 1, 1]} : vector<16x16x64xbf16> to vector<1x16x64xbf16>
    %77 = tpu.concatenate %75, %74, %76 in 0 : vector<1x16x64xbf16>, vector<16x16x64xbf16>, vector<1x16x64xbf16> -> vector<18x16x64xbf16>
    %78 = vector.extract_strided_slice %77 {offsets = [0, 1, 0], sizes = [18, 1, 64], strides = [1, 1, 1]} : vector<18x16x64xbf16> to vector<18x1x64xbf16>
    %79 = vector.extract_strided_slice %77 {offsets = [0, 14, 0], sizes = [18, 1, 64], strides = [1, 1, 1]} : vector<18x16x64xbf16> to vector<18x1x64xbf16>
    %80 = tpu.concatenate %78, %77, %79 in 1 : vector<18x1x64xbf16>, vector<18x16x64xbf16>, vector<18x1x64xbf16> -> vector<18x18x64xbf16>
    %81 = vector.extract_strided_slice %80 {offsets = [0, 0, 0], sizes = [16, 16, 64], strides = [1, 1, 1]} : vector<18x18x64xbf16> to vector<16x16x64xbf16>
    %82 = vector.shape_cast %81 : vector<16x16x64xbf16> to vector<256x64xbf16>
    %83 = vector.extract_strided_slice %80 {offsets = [0, 1, 0], sizes = [16, 16, 64], strides = [1, 1, 1]} : vector<18x18x64xbf16> to vector<16x16x64xbf16>
    %84 = vector.shape_cast %83 : vector<16x16x64xbf16> to vector<256x64xbf16>
    %85 = vector.extract_strided_slice %80 {offsets = [0, 2, 0], sizes = [16, 16, 64], strides = [1, 1, 1]} : vector<18x18x64xbf16> to vector<16x16x64xbf16>
    %86 = vector.shape_cast %85 : vector<16x16x64xbf16> to vector<256x64xbf16>
    %87 = vector.extract_strided_slice %80 {offsets = [1, 0, 0], sizes = [16, 16, 64], strides = [1, 1, 1]} : vector<18x18x64xbf16> to vector<16x16x64xbf16>
    %88 = vector.shape_cast %87 : vector<16x16x64xbf16> to vector<256x64xbf16>
    %89 = vector.extract_strided_slice %80 {offsets = [1, 1, 0], sizes = [16, 16, 64], strides = [1, 1, 1]} : vector<18x18x64xbf16> to vector<16x16x64xbf16>
    %90 = vector.shape_cast %89 : vector<16x16x64xbf16> to vector<256x64xbf16>
    %91 = vector.extract_strided_slice %80 {offsets = [1, 2, 0], sizes = [16, 16, 64], strides = [1, 1, 1]} : vector<18x18x64xbf16> to vector<16x16x64xbf16>
    %92 = vector.shape_cast %91 : vector<16x16x64xbf16> to vector<256x64xbf16>
    %93 = vector.extract_strided_slice %80 {offsets = [2, 0, 0], sizes = [16, 16, 64], strides = [1, 1, 1]} : vector<18x18x64xbf16> to vector<16x16x64xbf16>
    %94 = vector.shape_cast %93 : vector<16x16x64xbf16> to vector<256x64xbf16>
    %95 = vector.extract_strided_slice %80 {offsets = [2, 1, 0], sizes = [16, 16, 64], strides = [1, 1, 1]} : vector<18x18x64xbf16> to vector<16x16x64xbf16>
    %96 = vector.shape_cast %95 : vector<16x16x64xbf16> to vector<256x64xbf16>
    %97 = vector.extract_strided_slice %80 {offsets = [2, 2, 0], sizes = [16, 16, 64], strides = [1, 1, 1]} : vector<18x18x64xbf16> to vector<16x16x64xbf16>
    %98 = vector.shape_cast %97 : vector<16x16x64xbf16> to vector<256x64xbf16>
    %99 = tpu.concatenate %82, %84, %86, %88, %90, %92, %94, %96, %98 in 1 : vector<256x64xbf16>, vector<256x64xbf16>, vector<256x64xbf16>, vector<256x64xbf16>, vector<256x64xbf16>, vector<256x64xbf16>, vector<256x64xbf16>, vector<256x64xbf16>, vector<256x64xbf16> -> vector<256x576xbf16>
    %c0_20 = arith.constant 0 : index
    %c0_21 = arith.constant 0 : index
    %100 = vector.load %arg8[%c0_20, %c0_21] : memref<576x64xbf16, #tpu.memory_space<vmem>>, vector<576x64xbf16>
    %cst_22 = arith.constant dense<0.000000e+00> : vector<256x64xf32>
    %101 = tpu.matmul %99, %100, %cst_22 {dimension_numbers = #tpu.dot_dimension_numbers<[1], [0], [0], [1], [0, 0, 1, 1], [], []>} : vector<256x576xbf16>, vector<576x64xbf16>, vector<256x64xf32> -> vector<256x64xf32>
    %c0_23 = arith.constant 0 : index
    %c0_24 = arith.constant 0 : index
    %102 = vector.load %arg9[%c0_23, %c0_24] : memref<1x64xf32, #tpu.memory_space<vmem>>, vector<1x64xf32>
    %103 = vector.broadcast %102 : vector<1x64xf32> to vector<256x64xf32>
    %104 = arith.mulf %101, %103 : vector<256x64xf32>
    %c0_25 = arith.constant 0 : index
    %c0_26 = arith.constant 0 : index
    %105 = vector.load %arg10[%c0_25, %c0_26] : memref<1x64xf32, #tpu.memory_space<vmem>>, vector<1x64xf32>
    %106 = vector.broadcast %105 : vector<1x64xf32> to vector<256x64xf32>
    %107 = arith.addf %104, %106 : vector<256x64xf32>
    %cst_27 = arith.constant 0.000000e+00 : f32
    %108 = vector.broadcast %cst_27 : f32 to vector<256x64xf32>
    %109 = arith.maximumf %107, %108 : vector<256x64xf32>
    %110 = vector.shape_cast %109 : vector<256x64xf32> to vector<16x16x64xf32>
    %c0_28 = arith.constant 0 : index
    %c0_29 = arith.constant 0 : index
    %c0_30 = arith.constant 0 : index
    %c0_31 = arith.constant 0 : index
    %111 = vector.load %arg11[%c0_28, %c0_29, %c0_30, %c0_31] : memref<1x16x16x64xf32, #tpu.memory_space<vmem>>, vector<1x16x16x64xf32>
    %112 = vector.shape_cast %111 : vector<1x16x16x64xf32> to vector<16x16x64xf32>
    %113 = vector.shape_cast %110 : vector<16x16x64xf32> to vector<1x16x16x64xf32>
    tpu.vector_store %arg11[%c0_28, %c0_29, %c0_30, %c0_31], %113 {strides = array<i32>} : memref<1x16x16x64xf32, #tpu.memory_space<vmem>>, vector<1x16x16x64xf32>,
    return
  }
  func.func @transform_0(%arg0: i32) -> (i32, i32, i32, i32) {
    %c0_i32 = arith.constant 0 : i32
    %c0_i32_0 = arith.constant 0 : i32
    %c0_i32_1 = arith.constant 0 : i32
    %c0_i32_2 = arith.constant 0 : i32
    return %arg0, %c0_i32, %c0_i32_0, %c0_i32_1 : i32, i32, i32, i32
  }
  func.func @transform_1(%arg0: i32) -> (i32, i32, i32, i32) {
    %c0_i32 = arith.constant 0 : i32
    %c0_i32_0 = arith.constant 0 : i32
    %c0_i32_1 = arith.constant 0 : i32
    %c0_i32_2 = arith.constant 0 : i32
    return %arg0, %c0_i32, %c0_i32_0, %c0_i32_1 : i32, i32, i32, i32
  }
  func.func @transform_2(%arg0: i32) -> (i32, i32) {
    %c0_i32 = arith.constant 0 : i32
    %c0_i32_0 = arith.constant 0 : i32
    %c0_i32_1 = arith.constant 0 : i32
    return %c0_i32, %c0_i32_0 : i32, i32
  }
  func.func @transform_3(%arg0: i32) -> (i32, i32) {
    %c0_i32 = arith.constant 0 : i32
    %c0_i32_0 = arith.constant 0 : i32
    %c0_i32_1 = arith.constant 0 : i32
    return %c0_i32, %c0_i32_0 : i32, i32
  }
  func.func @transform_4(%arg0: i32) -> (i32, i32) {
    %c0_i32 = arith.constant 0 : i32
    %c0_i32_0 = arith.constant 0 : i32
    %c0_i32_1 = arith.constant 0 : i32
    return %c0_i32, %c0_i32_0 : i32, i32
  }
  func.func @transform_5(%arg0: i32) -> (i32, i32) {
    %c0_i32 = arith.constant 0 : i32
    %c0_i32_0 = arith.constant 0 : i32
    %c0_i32_1 = arith.constant 0 : i32
    return %c0_i32, %c0_i32_0 : i32, i32
  }
  func.func @transform_6(%arg0: i32) -> (i32, i32) {
    %c0_i32 = arith.constant 0 : i32
    %c0_i32_0 = arith.constant 0 : i32
    %c0_i32_1 = arith.constant 0 : i32
    return %c0_i32, %c0_i32_0 : i32, i32
  }
  func.func @transform_7(%arg0: i32) -> (i32, i32) {
    %c0_i32 = arith.constant 0 : i32
    %c0_i32_0 = arith.constant 0 : i32
    %c0_i32_1 = arith.constant 0 : i32
    return %c0_i32, %c0_i32_0 : i32, i32
  }
  func.func @transform_8(%arg0: i32) -> (i32, i32) {
    %c0_i32 = arith.constant 0 : i32
    %c0_i32_0 = arith.constant 0 : i32
    %c0_i32_1 = arith.constant 0 : i32
    return %c0_i32, %c0_i32_0 : i32, i32
  }
  func.func @transform_9(%arg0: i32) -> (i32, i32) {
    %c0_i32 = arith.constant 0 : i32
    %c0_i32_0 = arith.constant 0 : i32
    %c0_i32_1 = arith.constant 0 : i32
    return %c0_i32, %c0_i32_0 : i32, i32
  }
  func.func @transform_10(%arg0: i32) -> (i32, i32, i32, i32) {
    %c0_i32 = arith.constant 0 : i32
    %c0_i32_0 = arith.constant 0 : i32
    %c0_i32_1 = arith.constant 0 : i32
    %c0_i32_2 = arith.constant 0 : i32
    return %arg0, %c0_i32, %c0_i32_0, %c0_i32_1 : i32, i32, i32, i32
  }
}

</mosaic_0001>

<llo_original>
// kernel: up2_forward.1
$region0: #{up2_forward.1}
  #allocation0 [shape = 'u32[]', space=smem, size = 0x4, offset = 0x4, fixed_abs, tag = 'smem constant byte address 0x4 - core index']
  #allocation1 [shape = 'u32[144,128]{1,0:T(1,128)}', space=vmem, size = 0x12000, scoped, tag = 'internal scratch']
  %s0 = inlined_call_operand.vmem [shape: f32[2,8,8,128], index: 0, kind: input, shape index: {}]
  %s1 = inlined_call_operand.vmem [shape: f32[2,16,16,64], index: 1, kind: input, shape index: {}]
  %s2 = inlined_call_operand.vmem [shape: f32[256,64], index: 2, kind: input, shape index: {}]
  %s3 = inlined_call_operand.vmem [shape: bf16[576,64], index: 3, kind: input, shape index: {}]
  %s4 = inlined_call_operand.vmem [shape: bf16[1152,64], index: 4, kind: input, shape index: {}]
  %s5 = inlined_call_operand.vmem [shape: f32[1,64], index: 5, kind: input, shape index: {}]
  %s6 = inlined_call_operand.vmem [shape: f32[1,64], index: 6, kind: input, shape index: {}]
  %s7 = inlined_call_operand.vmem [shape: bf16[576,64], index: 7, kind: input, shape index: {}]
  %s8 = inlined_call_operand.vmem [shape: f32[1,64], index: 8, kind: input, shape index: {}]
  %s9 = inlined_call_operand.vmem [shape: f32[1,64], index: 9, kind: input, shape index: {}]
  %s10 = inlined_call_operand.hbm [shape: f32[2,16,16,64], index: 10, kind: output, shape index: {}]
  %s11 = sld [smem:[#allocation0]]
  $region73: #{up2_forward.1} parent=0
    _
  %s13 = ssub.s32 1, %s11
  %s14 = scalar_select 0, %s13, %s11
  $region1: #{up2_forward.1} parent=0
    #allocation2 [shape = 'u8[262144]{0}', space=vmem, size = 0x40000, scoped, tag = 'output window, operand 0']
    #allocation3 [shape = 's32[2]{0}', space=sflag, size = 0x8, scoped, tag = 'scoped memory for up2_forward.1']
    %15 = vsyncpa [#allocation3], 0
    %s16 = scalar_lea.sflag [#allocation3], 1
    %17 = vsyncpa %s16, 0
    loop: start=0, step=1, limit=4
    $region2: #{up2_forward.1} parent=1 // loop_pre_header
      _
    $region3: #{up2_forward.1} parent=1 // loop_header
      %s19 = sphi 0, %s23
      %p20 = scmp.ge.s32.totalorder %s19, 4
      %s29 = sphi 0, %s31
      %s32 = sphi 0, %s29
      %s33 = sphi 0, %s32
      %s49 = sphi 0, %s33
      %s55 = sphi 0, %s57
      %s58 = sphi 0, %s55
      %s59 = sphi 0, %s58
      %s75 = sphi 0, %s59
      %s79 = sphi 0, %s79
      %s81 = sphi 0, %s79
      %s82 = sphi 0, %s81
      %s96 = sphi 0, %s82
      %s100 = sphi 0, %s100
      %s102 = sphi 0, %s100
      %s103 = sphi 0, %s102
      %s117 = sphi 0, %s103
      %s121 = sphi 0, %s121
      %s123 = sphi 0, %s121
      %s124 = sphi 0, %s123
      %s138 = sphi 0, %s124
      %s142 = sphi 0, %s142
      %s144 = sphi 0, %s142
      %s145 = sphi 0, %s144
      %s159 = sphi 0, %s145
      %s163 = sphi 0, %s163
      %s165 = sphi 0, %s163
      %s166 = sphi 0, %s165
      %s180 = sphi 0, %s166
      %s184 = sphi 0, %s184
      %s186 = sphi 0, %s184
      %s187 = sphi 0, %s186
      %s201 = sphi 0, %s187
      %s205 = sphi 0, %s205
      %s207 = sphi 0, %s205
      %s208 = sphi 0, %s207
      %s222 = sphi 0, %s208
      %s226 = sphi 0, %s226
      %s228 = sphi 0, %s226
      %s229 = sphi 0, %s228
      %s243 = sphi 0, %s229
      %s249 = sphi 0, %s251
      %s252 = sphi 0, %s249
      %s253 = sphi 0, %s252
      %s269 = sphi 0, %s253
    $region4: #{up2_forward.1} parent=1 // loop_header_branch
      %22 = sbr.rel (%p20) target = $region8
    $region5: #{up2_forward.1} parent=1 // loop_body
      %s24 = ssub.s32 %s19, 1
      %s25 = ssub.s32 %s19, 2
      %s26 = sadd.s32 %s19, 1
      %s27 = ssub.s32 %s19, %s26
      %p28 = scmp.eq.s32.totalorder %s27, 0
      %s30 = sadd.s32 %s29, 1
      %s31 = scalar_select %p28, %s29, %s30
      %p34 = pneg %p28
      %p35 = scmp.eq.s32.totalorder %s19, 1
      %p36 = por %p34, %p35
      %p37 = scmp.ne.s32.totalorder %s29, %s32
      %p38 = scmp.eq.s32.totalorder %s19, 0
      %p39 = por %p37, %p38
      %p40 = scmp.ne.s32.totalorder %s29, %s32
      %p41 = scmp.eq.s32.totalorder %s24, 1
      %p42 = por %p40, %p41
      %p43 = scmp.ne.s32.totalorder %s32, %s33
      %p44 = scmp.eq.s32.totalorder %s24, 0
      %p45 = por %p43, %p44
      %p46 = scmp.ne.s32.totalorder %s32, %s33
      %p47 = scmp.eq.s32.totalorder %s25, 1
      %p48 = por %p46, %p47
      %p50 = scmp.ne.s32.totalorder %s33, %s49
      %p51 = scmp.eq.s32.totalorder %s25, 0
      %p52 = por %p50, %p51
      %s53 = ssub.s32 %s19, %s26
      %p54 = scmp.eq.s32.totalorder %s53, 0
      %s56 = sadd.s32 %s55, 1
      %s57 = scalar_select %p54, %s55, %s56
      %p60 = pneg %p54
      %p61 = scmp.eq.s32.totalorder %s19, 1
      %p62 = por %p60, %p61
      %p63 = scmp.ne.s32.totalorder %s55, %s58
      %p64 = scmp.eq.s32.totalorder %s19, 0
      %p65 = por %p63, %p64
      %p66 = scmp.ne.s32.totalorder %s55, %s58
      %p67 = scmp.eq.s32.totalorder %s24, 1
      %p68 = por %p66, %p67
      %p69 = scmp.ne.s32.totalorder %s58, %s59
      %p70 = scmp.eq.s32.totalorder %s24, 0
      %p71 = por %p69, %p70
      %p72 = scmp.ne.s32.totalorder %s58, %s59
      %p73 = scmp.eq.s32.totalorder %s25, 1
      %p74 = por %p72, %p73
      %p76 = scmp.ne.s32.totalorder %s59, %s75
      %p77 = scmp.eq.s32.totalorder %s25, 0
      %p78 = por %p76, %p77
      %s80 = sadd.s32 %s79, 1
      %p83 = scmp.eq.s32.totalorder %s19, 1
      %p84 = scmp.ne.s32.totalorder %s79, %s81
      %p85 = scmp.eq.s32.totalorder %s19, 0
      %p86 = por %p84, %p85
      %p87 = scmp.ne.s32.totalorder %s79, %s81
      %p88 = scmp.eq.s32.totalorder %s24, 1
      %p89 = por %p87, %p88
      %p90 = scmp.ne.s32.totalorder %s81, %s82
      %p91 = scmp.eq.s32.totalorder %s24, 0
      %p92 = por %p90, %p91
      %p93 = scmp.ne.s32.totalorder %s81, %s82
      %p94 = scmp.eq.s32.totalorder %s25, 1
      %p95 = por %p93, %p94
      %p97 = scmp.ne.s32.totalorder %s82, %s96
      %p98 = scmp.eq.s32.totalorder %s25, 0
      %p99 = por %p97, %p98
      %s101 = sadd.s32 %s100, 1
      %p104 = scmp.eq.s32.totalorder %s19, 1
      %p105 = scmp.ne.s32.totalorder %s100, %s102
      %p106 = scmp.eq.s32.totalorder %s19, 0
      %p107 = por %p105, %p106
      %p108 = scmp.ne.s32.totalorder %s100, %s102
      %p109 = scmp.eq.s32.totalorder %s24, 1
      %p110 = por %p108, %p109
      %p111 = scmp.ne.s32.totalorder %s102, %s103
      %p112 = scmp.eq.s32.totalorder %s24, 0
      %p113 = por %p111, %p112
      %p114 = scmp.ne.s32.totalorder %s102, %s103
      %p115 = scmp.eq.s32.totalorder %s25, 1
      %p116 = por %p114, %p115
      %p118 = scmp.ne.s32.totalorder %s103, %s117
      %p119 = scmp.eq.s32.totalorder %s25, 0
      %p120 = por %p118, %p119
      %s122 = sadd.s32 %s121, 1
      %p125 = scmp.eq.s32.totalorder %s19, 1
      %p126 = scmp.ne.s32.totalorder %s121, %s123
      %p127 = scmp.eq.s32.totalorder %s19, 0
      %p128 = por %p126, %p127
      %p129 = scmp.ne.s32.totalorder %s121, %s123
      %p130 = scmp.eq.s32.totalorder %s24, 1
      %p131 = por %p129, %p130
      %p132 = scmp.ne.s32.totalorder %s123, %s124
      %p133 = scmp.eq.s32.totalorder %s24, 0
      %p134 = por %p132, %p133
      %p135 = scmp.ne.s32.totalorder %s123, %s124
      %p136 = scmp.eq.s32.totalorder %s25, 1
      %p137 = por %p135, %p136
      %p139 = scmp.ne.s32.totalorder %s124, %s138
      %p140 = scmp.eq.s32.totalorder %s25, 0
      %p141 = por %p139, %p140
      %s143 = sadd.s32 %s142, 1
      %p146 = scmp.eq.s32.totalorder %s19, 1
      %p147 = scmp.ne.s32.totalorder %s142, %s144
      %p148 = scmp.eq.s32.totalorder %s19, 0
      %p149 = por %p147, %p148
      %p150 = scmp.ne.s32.totalorder %s142, %s144
      %p151 = scmp.eq.s32.totalorder %s24, 1
      %p152 = por %p150, %p151
      %p153 = scmp.ne.s32.totalorder %s144, %s145
      %p154 = scmp.eq.s32.totalorder %s24, 0
      %p155 = por %p153, %p154
      %p156 = scmp.ne.s32.totalorder %s144, %s145
      %p157 = scmp.eq.s32.totalorder %s25, 1
      %p158 = por %p156, %p157
      %p160 = scmp.ne.s32.totalorder %s145, %s159
      %p161 = scmp.eq.s32.totalorder %s25, 0
      %p162 = por %p160, %p161
      %s164 = sadd.s32 %s163, 1
      %p167 = scmp.eq.s32.totalorder %s19, 1
      %p168 = scmp.ne.s32.totalorder %s163, %s165
      %p169 = scmp.eq.s32.totalorder %s19, 0
      %p170 = por %p168, %p169
      %p171 = scmp.ne.s32.totalorder %s163, %s165
      %p172 = scmp.eq.s32.totalorder %s24, 1
      %p173 = por %p171, %p172
      %p174 = scmp.ne.s32.totalorder %s165, %s166
      %p175 = scmp.eq.s32.totalorder %s24, 0
      %p176 = por %p174, %p175
      %p177 = scmp.ne.s32.totalorder %s165, %s166
      %p178 = scmp.eq.s32.totalorder %s25, 1
      %p179 = por %p177, %p178
      %p181 = scmp.ne.s32.totalorder %s166, %s180
      %p182 = scmp.eq.s32.totalorder %s25, 0
      %p183 = por %p181, %p182
      %s185 = sadd.s32 %s184, 1
      %p188 = scmp.eq.s32.totalorder %s19, 1
      %p189 = scmp.ne.s32.totalorder %s184, %s186
      %p190 = scmp.eq.s32.totalorder %s19, 0
      %p191 = por %p189, %p190
      %p192 = scmp.ne.s32.totalorder %s184, %s186
      %p193 = scmp.eq.s32.totalorder %s24, 1
      %p194 = por %p192, %p193
      %p195 = scmp.ne.s32.totalorder %s186, %s187
      %p196 = scmp.eq.s32.totalorder %s24, 0
      %p197 = por %p195, %p196
      %p198 = scmp.ne.s32.totalorder %s186, %s187
      %p199 = scmp.eq.s32.totalorder %s25, 1
      %p200 = por %p198, %p199
      %p202 = scmp.ne.s32.totalorder %s187, %s201
      %p203 = scmp.eq.s32.totalorder %s25, 0
      %p204 = por %p202, %p203
      %s206 = sadd.s32 %s205, 1
      %p209 = scmp.eq.s32.totalorder %s19, 1
      %p210 = scmp.ne.s32.totalorder %s205, %s207
      %p211 = scmp.eq.s32.totalorder %s19, 0
      %p212 = por %p210, %p211
      %p213 = scmp.ne.s32.totalorder %s205, %s207
      %p214 = scmp.eq.s32.totalorder %s24, 1
      %p215 = por %p213, %p214
      %p216 = scmp.ne.s32.totalorder %s207, %s208
      %p217 = scmp.eq.s32.totalorder %s24, 0
      %p218 = por %p216, %p217
      %p219 = scmp.ne.s32.totalorder %s207, %s208
      %p220 = scmp.eq.s32.totalorder %s25, 1
      %p221 = por %p219, %p220
      %p223 = scmp.ne.s32.totalorder %s208, %s222
      %p224 = scmp.eq.s32.totalorder %s25, 0
      %p225 = por %p223, %p224
      %s227 = sadd.s32 %s226, 1
      %p230 = scmp.eq.s32.totalorder %s19, 1
      %p231 = scmp.ne.s32.totalorder %s226, %s228
      %p232 = scmp.eq.s32.totalorder %s19, 0
      %p233 = por %p231, %p232
      %p234 = scmp.ne.s32.totalorder %s226, %s228
      %p235 = scmp.eq.s32.totalorder %s24, 1
      %p236 = por %p234, %p235
      %p237 = scmp.ne.s32.totalorder %s228, %s229
      %p238 = scmp.eq.s32.totalorder %s24, 0
      %p239 = por %p237, %p238
      %p240 = scmp.ne.s32.totalorder %s228, %s229
      %p241 = scmp.eq.s32.totalorder %s25, 1
      %p242 = por %p240, %p241
      %p244 = scmp.ne.s32.totalorder %s229, %s243
      %p245 = scmp.eq.s32.totalorder %s25, 0
      %p246 = por %p244, %p245
      %s247 = ssub.s32 %s19, %s26
      %p248 = scmp.eq.s32.totalorder %s247, 0
      %s250 = sadd.s32 %s249, 1
      %s251 = scalar_select %p248, %s249, %s250
      %p254 = pneg %p248
      %p255 = scmp.eq.s32.totalorder %s19, 1
      %p256 = por %p254, %p255
      %p257 = scmp.ne.s32.totalorder %s249, %s252
      %p258 = scmp.eq.s32.totalorder %s19, 0
      %p259 = por %p257, %p258
      %p260 = scmp.ne.s32.totalorder %s249, %s252
      %p261 = scmp.eq.s32.totalorder %s24, 1
      %p262 = por %p260, %p261
      %p263 = scmp.ne.s32.totalorder %s252, %s253
      %p264 = scmp.eq.s32.totalorder %s24, 0
      %p265 = por %p263, %p264
      %p266 = scmp.ne.s32.totalorder %s252, %s253
      %p267 = scmp.eq.s32.totalorder %s25, 1
      %p268 = por %p266, %p267
      %p270 = scmp.ne.s32.totalorder %s253, %s269
      %p271 = scmp.eq.s32.totalorder %s25, 0
      %p272 = por %p270, %p271
      %p273 = scmp.le.s32.totalorder 1, %s19
      %p274 = scmp.lt.s32.totalorder %s19, 3
      %p275 = pnand %p273, %p274
      %p276 = pneg %p275
      // Predicated region
      $region9: #{up2_forward.1} parent=5 // pred_check
        _
      $region10: #{up2_forward.1} parent=5 // pred_check_branch
        %278 = sbr.rel (%p275) target = $region12
      $region11: #{up2_forward.1} parent=5 // pred_region
        %s279 = ssub.s32 %s19, 1
        // Predicated region
        $region13: #{up2_forward.1} parent=11 // pred_check
          %p280 = pneg %p92
        $region14: #{up2_forward.1} parent=11 // pred_check_branch
          %282 = sbr.rel (%p280) target = $region16
        $region15: #{up2_forward.1} parent=11 // pred_region
          _
        $region16: #{up2_forward.1} parent=11 // pred_fallthru
          _
        // Predicated region
        $region17: #{up2_forward.1} parent=11 // pred_check
          %p283 = pneg %p113
        $region18: #{up2_forward.1} parent=11 // pred_check_branch
          %285 = sbr.rel (%p283) target = $region20
        $region19: #{up2_forward.1} parent=11 // pred_region
          _
        $region20: #{up2_forward.1} parent=11 // pred_fallthru
          _
        // Predicated region
        $region21: #{up2_forward.1} parent=11 // pred_check
          %p286 = pneg %p134
        $region22: #{up2_forward.1} parent=11 // pred_check_branch
          %288 = sbr.rel (%p286) target = $region24
        $region23: #{up2_forward.1} parent=11 // pred_region
          _
        $region24: #{up2_forward.1} parent=11 // pred_fallthru
          _
        // Predicated region
        $region25: #{up2_forward.1} parent=11 // pred_check
          %p289 = pneg %p155
        $region26: #{up2_forward.1} parent=11 // pred_check_branch
          %291 = sbr.rel (%p289) target = $region28
        $region27: #{up2_forward.1} parent=11 // pred_region
          _
        $region28: #{up2_forward.1} parent=11 // pred_fallthru
          _
        // Predicated region
        $region29: #{up2_forward.1} parent=11 // pred_check
          %p292 = pneg %p176
        $region30: #{up2_forward.1} parent=11 // pred_check_branch
          %294 = sbr.rel (%p292) target = $region32
        $region31: #{up2_forward.1} parent=11 // pred_region
          _
        $region32: #{up2_forward.1} parent=11 // pred_fallthru
          _
        // Predicated region
        $region33: #{up2_forward.1} parent=11 // pred_check
          %p295 = pneg %p197
        $region34: #{up2_forward.1} parent=11 // pred_check_branch
          %297 = sbr.rel (%p295) target = $region36
        $region35: #{up2_forward.1} parent=11 // pred_region
          _
        $region36: #{up2_forward.1} parent=11 // pred_fallthru
          _
        // Predicated region
        $region37: #{up2_forward.1} parent=11 // pred_check
          %p298 = pneg %p218
        $region38: #{up2_forward.1} parent=11 // pred_check_branch
          %300 = sbr.rel (%p298) target = $region40
        $region39: #{up2_forward.1} parent=11 // pred_region
          _
        $region40: #{up2_forward.1} parent=11 // pred_fallthru
          _
        // Predicated region
        $region41: #{up2_forward.1} parent=11 // pred_check
          %p301 = pneg %p239
        $region42: #{up2_forward.1} parent=11 // pred_check_branch
          %303 = sbr.rel (%p301) target = $region44
        $region43: #{up2_forward.1} parent=11 // pred_region
          _
        $region44: #{up2_forward.1} parent=11 // pred_fallthru
          _
      $region12: #{up2_forward.1} parent=5 // pred_fallthru
        _
      %p304 = scmp.lt.s32.totalorder %s19, 2
      // Predicated region
      $region45: #{up2_forward.1} parent=5 // pred_check
        %p305 = pneg %p304
      $region46: #{up2_forward.1} parent=5 // pred_check_branch
        %307 = sbr.rel (%p305) target = $region48
      $region47: #{up2_forward.1} parent=5 // pred_region
        // Predicated region
        $region49: #{up2_forward.1} parent=47 // pred_check
          %p308 = pneg %p39
        $region50: #{up2_forward.1} parent=47 // pred_check_branch
          %310 = sbr.rel (%p308) target = $region52
        $region51: #{up2_forward.1} parent=47 // pred_region
          %p311 = scmp.lt.s32.totalorder %s19, 1
          %s312 = scalar_select %p311, %s19, 1
          %s313 = smul.addr %s312, 8
          %s314 = smul.addr %s313, 8
          %s315 = scalar_lea.vmem %s0, %s314
        $region52: #{up2_forward.1} parent=47 // pred_fallthru
          _
        // Predicated region
        $region53: #{up2_forward.1} parent=47 // pred_check
          %p316 = pneg %p65
        $region54: #{up2_forward.1} parent=47 // pred_check_branch
          %318 = sbr.rel (%p316) target = $region56
        $region55: #{up2_forward.1} parent=47 // pred_region
          %p319 = scmp.lt.s32.totalorder %s19, 1
          %s320 = scalar_select %p319, %s19, 1
          %s321 = smul.addr %s320, 32
          %s322 = smul.addr %s321, 8
          %s323 = scalar_lea.vmem %s1, %s322
        $region56: #{up2_forward.1} parent=47 // pred_fallthru
          _
      $region48: #{up2_forward.1} parent=5 // pred_fallthru
        _
      %p324 = scmp.le.s32.totalorder 1, %s19
      %p325 = scmp.lt.s32.totalorder %s19, 3
      %p326 = pnand %p324, %p325
      %p327 = pneg %p326
      // Predicated region
      $region57: #{up2_forward.1} parent=5 // pred_check
        _
      $region58: #{up2_forward.1} parent=5 // pred_check_branch
        %329 = sbr.rel (%p326) target = $region60
      $region59: #{up2_forward.1} parent=5 // pred_region
        %s330 = ssub.s32 %s19, 1
        %p331 = scmp.lt.s32.totalorder %s24, 1
        %s332 = scalar_select %p331, %s24, 1
        %s333 = smul.addr %s332, 8
        %s334 = smul.addr %s333, 8
        %s335 = scalar_lea.vmem %s0, %s334
        %p336 = pneg %p45
        %p337 = pneg %p42
        %p338 = scmp.lt.s32.totalorder %s24, 1
        %s339 = scalar_select %p338, %s24, 1
        %s340 = smul.addr %s339, 32
        %s341 = smul.addr %s340, 8
        %s342 = scalar_lea.vmem %s1, %s341
        %p343 = pneg %p71
        %p344 = pneg %p68
        %p345 = pneg %p92
        %p346 = pneg %p89
        %p347 = pneg %p113
        %p348 = pneg %p110
        %p349 = pneg %p134
        %p350 = pneg %p131
        %p351 = pneg %p155
        %p352 = pneg %p152
        %p353 = pneg %p176
        %p354 = pneg %p173
        %p355 = pneg %p197
        %p356 = pneg %p194
        %p357 = pneg %p218
        %p358 = pneg %p215
        %p359 = pneg %p239
        %p360 = pneg %p236
        %p361 = pneg %p265
        %p362 = pneg %p262
        %s363 = sand.u32 %s252, 1
        %s364 = scalar_lea.sflag [#allocation3], %s363
        %s365 = sand.u32 %s252, 1
        %s366 = smul.addr %s365, 256
        %s367 = scalar_lea.vmem [#allocation2], %s366
        %p368 = scmp.lt.s32.totalorder %s24, 1
        %s369 = scalar_select %p368, %s24, 1
        %s370 = smul.addr %s369, 8
        %s371 = smul.addr %s370, 8
        %s372 = scalar_lea.vmem %s0, %s371
        %p373 = scmp.lt.s32.totalorder %s24, 1
        %s374 = scalar_select %p373, %s24, 1
        %s375 = smul.addr %s374, 32
        %s376 = smul.addr %s375, 8
        %s377 = scalar_lea.vmem %s1, %s376
        %v379 = vld [vmem:[%s372] sm:$0xff]
        %v380 = vld [vmem:[%s372 + $0x8] sm:$0xff]
        %v381 = vld [vmem:[%s372 + $0x10] sm:$0xff]
        %v382 = vld [vmem:[%s372 + $0x18] sm:$0xff]
        %v383 = vld [vmem:[%s372 + $0x20] sm:$0xff]
        %v384 = vld [vmem:[%s372 + $0x28] sm:$0xff]
        %v385 = vld [vmem:[%s372 + $0x30] sm:$0xff]
        %v386 = vld [vmem:[%s372 + $0x38] sm:$0xff]
        %v387 = vld [vmem:[%s2] sm:$0xff]
        %v388 = vld [vmem:[%s2 + $0x8] sm:$0xff]
        %v389 = vld [vmem:[%s2 + $0x10] sm:$0xff]
        %v390 = vld [vmem:[%s2 + $0x18] sm:$0xff]
        %v391 = vld [vmem:[%s2 + $0x20] sm:$0xff]
        %v392 = vld [vmem:[%s2 + $0x28] sm:$0xff]
        %v393 = vld [vmem:[%s2 + $0x30] sm:$0xff]
        %v394 = vld [vmem:[%s2 + $0x38] sm:$0xff]
        %v395 = vld [vmem:[%s2 + $0x40] sm:$0xff]
        %v396 = vld [vmem:[%s2 + $0x48] sm:$0xff]
        %v397 = vld [vmem:[%s2 + $0x50] sm:$0xff]
        %v398 = vld [vmem:[%s2 + $0x58] sm:$0xff]
        %v399 = vld [vmem:[%s2 + $0x60] sm:$0xff]
        %v400 = vld [vmem:[%s2 + $0x68] sm:$0xff]
        %v401 = vld [vmem:[%s2 + $0x70] sm:$0xff]
        %v402 = vld [vmem:[%s2 + $0x78] sm:$0xff]
        %v403 = vld [vmem:[%s2 + $0x80] sm:$0xff]
        %v404 = vld [vmem:[%s2 + $0x88] sm:$0xff]
        %v405 = vld [vmem:[%s2 + $0x90] sm:$0xff]
        %v406 = vld [vmem:[%s2 + $0x98] sm:$0xff]
        %v407 = vld [vmem:[%s2 + $0xa0] sm:$0xff]
        %v408 = vld [vmem:[%s2 + $0xa8] sm:$0xff]
        %v409 = vld [vmem:[%s2 + $0xb0] sm:$0xff]
        %v410 = vld [vmem:[%s2 + $0xb8] sm:$0xff]
        %v411 = vld [vmem:[%s2 + $0xc0] sm:$0xff]
        %v412 = vld [vmem:[%s2 + $0xc8] sm:$0xff]
        %v413 = vld [vmem:[%s2 + $0xd0] sm:$0xff]
        %v414 = vld [vmem:[%s2 + $0xd8] sm:$0xff]
        %v415 = vld [vmem:[%s2 + $0xe0] sm:$0xff]
        %v416 = vld [vmem:[%s2 + $0xe8] sm:$0xff]
        %v417 = vld [vmem:[%s2 + $0xf0] sm:$0xff]
        %v418 = vld [vmem:[%s2 + $0xf8] sm:$0xff]
        %vm419 = vcmask 523264
        %v421 = vsel %vm419, %v387, 0
        %v424 = vsel %vm419, %v388, 0
        %v427 = vsel %vm419, %v389, 0
        %v430 = vsel %vm419, %v390, 0
        %v433 = vsel %vm419, %v391, 0
        %v436 = vsel %vm419, %v392, 0
        %v439 = vsel %vm419, %v393, 0
        %v442 = vsel %vm419, %v394, 0
        %v445 = vsel %vm419, %v395, 0
        %v448 = vsel %vm419, %v396, 0
        %v451 = vsel %vm419, %v397, 0
        %v454 = vsel %vm419, %v398, 0
        %v457 = vsel %vm419, %v399, 0
        %v460 = vsel %vm419, %v400, 0
        %v463 = vsel %vm419, %v401, 0
        %v466 = vsel %vm419, %v402, 0
        %v469 = vsel %vm419, %v403, 0
        %v472 = vsel %vm419, %v404, 0
        %v475 = vsel %vm419, %v405, 0
        %v478 = vsel %vm419, %v406, 0
        %v481 = vsel %vm419, %v407, 0
        %v484 = vsel %vm419, %v408, 0
        %v487 = vsel %vm419, %v409, 0
        %v490 = vsel %vm419, %v410, 0
        %v493 = vsel %vm419, %v411, 0
        %v496 = vsel %vm419, %v412, 0
        %v499 = vsel %vm419, %v413, 0
        %v502 = vsel %vm419, %v414, 0
        %v505 = vsel %vm419, %v415, 0
        %v508 = vsel %vm419, %v416, 0
        %v511 = vsel %vm419, %v417, 0
        %v514 = vsel %vm419, %v418, 0
        %516 = vmatprep.subr.mxu0 0.0
        %517 = vmatpush1.msra.mxu0 %v379
        %518 = vmatprep.subr.mxu0 0.0
        %519 = vmatpush1.msra.mxu0 %v380
        %520 = vmatprep.subr.mxu0 0.0
        %521 = vmatpush1.msra.mxu0 %v381
        %522 = vmatprep.subr.mxu0 0.0
        %523 = vmatpush1.msra.mxu0 %v382
        %524 = vmatprep.subr.mxu0 0.0
        %525 = vmatpush1.msra.mxu0 %v383
        %526 = vmatprep.subr.mxu0 0.0
        %527 = vmatpush1.msra.mxu0 %v384
        %528 = vmatprep.subr.mxu0 0.0
        %529 = vmatpush1.msra.mxu0 %v385
        %530 = vmatprep.subr.mxu0 0.0
        %531 = vmatpush1.msra.mxu0 %v386
        %532 = vmatprep.subr.mxu0 0.0
        %533 = vmatpush1.msra.mxu0 0.0
        %534 = vmatprep.subr.mxu0 0.0
        %535 = vmatpush1.msra.mxu0 0.0
        %536 = vmatprep.subr.mxu0 0.0
        %537 = vmatpush1.msra.mxu0 0.0
        %538 = vmatprep.subr.mxu0 0.0
        %539 = vmatpush1.msra.mxu0 0.0
        %540 = vmatprep.subr.mxu0 0.0
        %541 = vmatpush1.msra.mxu0 0.0
        %542 = vmatprep.subr.mxu0 0.0
        %543 = vmatpush1.msra.mxu0 0.0
        %544 = vmatprep.subr.mxu0 0.0
        %545 = vmatpush1.msra.mxu0 0.0
        %546 = vmatprep.subr.mxu0 0.0
        %547 = vmatpush1.msra.mxu0 0.0
        %548 = vmatprep.subr.mxu0 0.0
        %549 = vmatpush1.msra.mxu0 0.0
        %550 = vmatprep.subr.mxu0 0.0
        %551 = vmatpush1.msra.mxu0 0.0
        %552 = vmatprep.subr.mxu0 0.0
        %553 = vmatpush1.msra.mxu0 0.0
        %554 = vmatprep.subr.mxu0 0.0
        %555 = vmatpush1.msra.mxu0 0.0
        %556 = vmatprep.subr.mxu0 0.0
        %557 = vmatpush1.msra.mxu0 0.0
        %558 = vmatprep.subr.mxu0 0.0
        %559 = vmatpush1.msra.mxu0 0.0
        %560 = vmatprep.subr.mxu0 0.0
        %561 = vmatpush1.msra.mxu0 0.0
        %562 = vmatprep.subr.mxu0 0.0
        %563 = vmatpush1.msra.mxu0 0.0
        %564 = vmatprep.subr.mxu0 0.0
        %565 = vmatpush1.msra.mxu0 0.0
        %566 = vmatprep.subr.mxu0 0.0
        %567 = vmatpush1.msra.mxu0 0.0
        %568 = vmatprep.subr.mxu0 0.0
        %569 = vmatpush1.msra.mxu0 0.0
        %570 = vmatprep.subr.mxu0 0.0
        %571 = vmatpush1.msra.mxu0 0.0
        %572 = vmatprep.subr.mxu0 0.0
        %573 = vmatpush1.msra.mxu0 0.0
        %574 = vmatprep.subr.mxu0 0.0
        %575 = vmatpush1.msra.mxu0 0.0
        %576 = vmatprep.subr.mxu0 0.0
        %577 = vmatpush1.msra.mxu0 0.0
        %578 = vmatprep.subr.mxu0 0.0
        %579 = vmatpush1.msra.mxu0 0.0
        %580 = vmatprep.mubr.f32.mxu0 0.0
        %581 = vmatmul.mubr.f32.gmra.mrb[0].mxu0 %v421
        %v582 = vpop.f32.mrb[0].mxu0
        %v583 = vadd.f32 0.0, %v582
        %v584 = vpop.f32.mrb[0].mxu0
        %585 = vmatprep.mubr.f32.mxu0 0.0
        %586 = vmatmul.mubr.f32.gmra.mrb[0].mxu0 %v424
        %v587 = vpop.f32.mrb[0].mxu0
        %v588 = vadd.f32 0.0, %v587
        %v589 = vpop.f32.mrb[0].mxu0
        %590 = vmatprep.mubr.f32.mxu0 0.0
        %591 = vmatmul.mubr.f32.gmra.mrb[0].mxu0 %v427
        %v592 = vpop.f32.mrb[0].mxu0
        %v593 = vadd.f32 0.0, %v592
        %v594 = vpop.f32.mrb[0].mxu0
        %595 = vmatprep.mubr.f32.mxu0 0.0
        %596 = vmatmul.mubr.f32.gmra.mrb[0].mxu0 %v430
        %v597 = vpop.f32.mrb[0].mxu0
        %v598 = vadd.f32 0.0, %v597
        %v599 = vpop.f32.mrb[0].mxu0
        %600 = vmatprep.mubr.f32.mxu0 0.0
        %601 = vmatmul.mubr.f32.gmra.mrb[0].mxu0 %v433
        %v602 = vpop.f32.mrb[0].mxu0
        %v603 = vadd.f32 0.0, %v602
        %v604 = vpop.f32.mrb[0].mxu0
        %605 = vmatprep.mubr.f32.mxu0 0.0
        %606 = vmatmul.mubr.f32.gmra.mrb[0].mxu0 %v436
        %v607 = vpop.f32.mrb[0].mxu0
        %v608 = vadd.f32 0.0, %v607
        %v609 = vpop.f32.mrb[0].mxu0
        %610 = vmatprep.mubr.f32.mxu0 0.0
        %611 = vmatmul.mubr.f32.gmra.mrb[0].mxu0 %v439
        %v612 = vpop.f32.mrb[0].mxu0
        %v613 = vadd.f32 0.0, %v612
        %v614 = vpop.f32.mrb[0].mxu0
        %615 = vmatprep.mubr.f32.mxu0 0.0
        %616 = vmatmul.mubr.f32.gmra.mrb[0].mxu0 %v442
        %v617 = vpop.f32.mrb[0].mxu0
        %v618 = vadd.f32 0.0, %v617
        %v619 = vpop.f32.mrb[0].mxu0
        %620 = vmatprep.mubr.f32.mxu0 0.0
        %621 = vmatmul.mubr.f32.gmra.mrb[0].mxu0 %v445
        %v622 = vpop.f32.mrb[0].mxu0
        %v623 = vadd.f32 0.0, %v622
        %v624 = vpop.f32.mrb[0].mxu0
        %625 = vmatprep.mubr.f32.mxu0 0.0
        %626 = vmatmul.mubr.f32.gmra.mrb[0].mxu0 %v448
        %v627 = vpop.f32.mrb[0].mxu0
        %v628 = vadd.f32 0.0, %v627
        %v629 = vpop.f32.mrb[0].mxu0
        %630 = vmatprep.mubr.f32.mxu0 0.0
        %631 = vmatmul.mubr.f32.gmra.mrb[0].mxu0 %v451
        %v632 = vpop.f32.mrb[0].mxu0
        %v633 = vadd.f32 0.0, %v632
        %v634 = vpop.f32.mrb[0].mxu0
        %635 = vmatprep.mubr.f32.mxu0 0.0
        %636 = vmatmul.mubr.f32.gmra.mrb[0].mxu0 %v454
        %v637 = vpop.f32.mrb[0].mxu0
        %v638 = vadd.f32 0.0, %v637
        %v639 = vpop.f32.mrb[0].mxu0
        %640 = vmatprep.mubr.f32.mxu0 0.0
        %641 = vmatmul.mubr.f32.gmra.mrb[0].mxu0 %v457
        %v642 = vpop.f32.mrb[0].mxu0
        %v643 = vadd.f32 0.0, %v642
        %v644 = vpop.f32.mrb[0].mxu0
        %645 = vmatprep.mubr.f32.mxu0 0.0
        %646 = vmatmul.mubr.f32.gmra.mrb[0].mxu0 %v460
        %v647 = vpop.f32.mrb[0].mxu0
        %v648 = vadd.f32 0.0, %v647
        %v649 = vpop.f32.mrb[0].mxu0
        %650 = vmatprep.mubr.f32.mxu0 0.0
        %651 = vmatmul.mubr.f32.gmra.mrb[0].mxu0 %v463
        %v652 = vpop.f32.mrb[0].mxu0
        %v653 = vadd.f32 0.0, %v652
        %v654 = vpop.f32.mrb[0].mxu0
        %655 = vmatprep.mubr.f32.mxu0 0.0
        %656 = vmatmul.mubr.f32.gmra.mrb[0].mxu0 %v466
        %v657 = vpop.f32.mrb[0].mxu0
        %v658 = vadd.f32 0.0, %v657
        %v659 = vpop.f32.mrb[0].mxu0
        %660 = vmatprep.mubr.f32.mxu0 0.0
        %661 = vmatmul.mubr.f32.gmra.mrb[0].mxu0 %v469
        %v662 = vpop.f32.mrb[0].mxu0
        %v663 = vadd.f32 0.0, %v662
        %v664 = vpop.f32.mrb[0].mxu0
        %665 = vmatprep.mubr.f32.mxu0 0.0
        %666 = vmatmul.mubr.f32.gmra.mrb[0].mxu0 %v472
        %v667 = vpop.f32.mrb[0].mxu0
        %v668 = vadd.f32 0.0, %v667
        %v669 = vpop.f32.mrb[0].mxu0
        %670 = vmatprep.mubr.f32.mxu0 0.0
        %671 = vmatmul.mubr.f32.gmra.mrb[0].mxu0 %v475
        %v672 = vpop.f32.mrb[0].mxu0
        %v673 = vadd.f32 0.0, %v672
        %v674 = vpop.f32.mrb[0].mxu0
        %675 = vmatprep.mubr.f32.mxu0 0.0
        %676 = vmatmul.mubr.f32.gmra.mrb[0].mxu0 %v478
        %v677 = vpop.f32.mrb[0].mxu0
        %v678 = vadd.f32 0.0, %v677
        %v679 = vpop.f32.mrb[0].mxu0
        %680 = vmatprep.mubr.f32.mxu0 0.0
        %681 = vmatmul.mubr.f32.gmra.mrb[0].mxu0 %v481
        %v682 = vpop.f32.mrb[0].mxu0
        %v683 = vadd.f32 0.0, %v682
        %v684 = vpop.f32.mrb[0].mxu0
        %685 = vmatprep.mubr.f32.mxu0 0.0
        %686 = vmatmul.mubr.f32.gmra.mrb[0].mxu0 %v484
        %v687 = vpop.f32.mrb[0].mxu0
        %v688 = vadd.f32 0.0, %v687
        %v689 = vpop.f32.mrb[0].mxu0
        %690 = vmatprep.mubr.f32.mxu0 0.0
        %691 = vmatmul.mubr.f32.gmra.mrb[0].mxu0 %v487
        %v692 = vpop.f32.mrb[0].mxu0
        %v693 = vadd.f32 0.0, %v692
        %v694 = vpop.f32.mrb[0].mxu0
        %695 = vmatprep.mubr.f32.mxu0 0.0
        %696 = vmatmul.mubr.f32.gmra.mrb[0].mxu0 %v490
        %v697 = vpop.f32.mrb[0].mxu0
        %v698 = vadd.f32 0.0, %v697
        %v699 = vpop.f32.mrb[0].mxu0
        %700 = vmatprep.mubr.f32.mxu0 0.0
        %701 = vmatmul.mubr.f32.gmra.mrb[0].mxu0 %v493
        %v702 = vpop.f32.mrb[0].mxu0
        %v703 = vadd.f32 0.0, %v702
        %v704 = vpop.f32.mrb[0].mxu0
        %705 = vmatprep.mubr.f32.mxu0 0.0
        %706 = vmatmul.mubr.f32.gmra.mrb[0].mxu0 %v496
        %v707 = vpop.f32.mrb[0].mxu0
        %v708 = vadd.f32 0.0, %v707
        %v709 = vpop.f32.mrb[0].mxu0
        %710 = vmatprep.mubr.f32.mxu0 0.0
        %711 = vmatmul.mubr.f32.gmra.mrb[0].mxu0 %v499
        %v712 = vpop.f32.mrb[0].mxu0
        %v713 = vadd.f32 0.0, %v712
        %v714 = vpop.f32.mrb[0].mxu0
        %715 = vmatprep.mubr.f32.mxu0 0.0
        %716 = vmatmul.mubr.f32.gmra.mrb[0].mxu0 %v502
        %v717 = vpop.f32.mrb[0].mxu0
        %v718 = vadd.f32 0.0, %v717
        %v719 = vpop.f32.mrb[0].mxu0
        %720 = vmatprep.mubr.f32.mxu0 0.0
        %721 = vmatmul.mubr.f32.gmra.mrb[0].mxu0 %v505
        %v722 = vpop.f32.mrb[0].mxu0
        %v723 = vadd.f32 0.0, %v722
        %v724 = vpop.f32.mrb[0].mxu0
        %725 = vmatprep.mubr.f32.mxu0 0.0
        %726 = vmatmul.mubr.f32.gmra.mrb[0].mxu0 %v508
        %v727 = vpop.f32.mrb[0].mxu0
        %v728 = vadd.f32 0.0, %v727
        %v729 = vpop.f32.mrb[0].mxu0
        %730 = vmatprep.mubr.f32.mxu0 0.0
        %731 = vmatmul.mubr.f32.gmra.mrb[0].mxu0 %v511
        %v732 = vpop.f32.mrb[0].mxu0
        %v733 = vadd.f32 0.0, %v732
        %v734 = vpop.f32.mrb[0].mxu0
        %735 = vmatprep.mubr.f32.mxu0 0.0
        %736 = vmatmul.mubr.f32.gmra.mrb[0].mxu0 %v514
        %v737 = vpop.f32.mrb[0].mxu0
        %v738 = vadd.f32 0.0, %v737
        %v739 = vpop.f32.mrb[0].mxu0
        %740 = vdwg.mxu0
        %v741 = vld [vmem:[%s377] sm:$0xff]
        %v742 = vld [vmem:[%s377 + $0x8] sm:$0xff]
        %v743 = vld [vmem:[%s377 + $0x10] sm:$0xff]
        %v744 = vld [vmem:[%s377 + $0x18] sm:$0xff]
        %v745 = vld [vmem:[%s377 + $0x20] sm:$0xff]
        %v746 = vld [vmem:[%s377 + $0x28] sm:$0xff]
        %v747 = vld [vmem:[%s377 + $0x30] sm:$0xff]
        %v748 = vld [vmem:[%s377 + $0x38] sm:$0xff]
        %v749 = vld [vmem:[%s377 + $0x40] sm:$0xff]
        %v750 = vld [vmem:[%s377 + $0x48] sm:$0xff]
        %v751 = vld [vmem:[%s377 + $0x50] sm:$0xff]
        %v752 = vld [vmem:[%s377 + $0x58] sm:$0xff]
        %v753 = vld [vmem:[%s377 + $0x60] sm:$0xff]
        %v754 = vld [vmem:[%s377 + $0x68] sm:$0xff]
        %v755 = vld [vmem:[%s377 + $0x70] sm:$0xff]
        %v756 = vld [vmem:[%s377 + $0x78] sm:$0xff]
        %v757 = vld [vmem:[%s377 + $0x80] sm:$0xff]
        %v758 = vld [vmem:[%s377 + $0x88] sm:$0xff]
        %v759 = vld [vmem:[%s377 + $0x90] sm:$0xff]
        %v760 = vld [vmem:[%s377 + $0x98] sm:$0xff]
        %v761 = vld [vmem:[%s377 + $0xa0] sm:$0xff]
        %v762 = vld [vmem:[%s377 + $0xa8] sm:$0xff]
        %v763 = vld [vmem:[%s377 + $0xb0] sm:$0xff]
        %v764 = vld [vmem:[%s377 + $0xb8] sm:$0xff]
        %v765 = vld [vmem:[%s377 + $0xc0] sm:$0xff]
        %v766 = vld [vmem:[%s377 + $0xc8] sm:$0xff]
        %v767 = vld [vmem:[%s377 + $0xd0] sm:$0xff]
        %v768 = vld [vmem:[%s377 + $0xd8] sm:$0xff]
        %v769 = vld [vmem:[%s377 + $0xe0] sm:$0xff]
        %v770 = vld [vmem:[%s377 + $0xe8] sm:$0xff]
        %v771 = vld [vmem:[%s377 + $0xf0] sm:$0xff]
        %v772 = vld [vmem:[%s377 + $0xf8] sm:$0xff]
        %v773 = vpack.c.bf16 %v742, %v741
        %v774 = vpack.c.bf16 %v744, %v743
        %v775 = vpack.c.bf16 %v746, %v745
        %v776 = vpack.c.bf16 %v748, %v747
        %v777 = vpack.c.bf16 %v750, %v749
        %v778 = vpack.c.bf16 %v752, %v751
        %v779 = vpack.c.bf16 %v754, %v753
        %v780 = vpack.c.bf16 %v756, %v755
        %v781 = vpack.c.bf16 %v758, %v757
        %v782 = vpack.c.bf16 %v760, %v759
        %v783 = vpack.c.bf16 %v762, %v761
        %v784 = vpack.c.bf16 %v764, %v763
        %v785 = vpack.c.bf16 %v766, %v765
        %v786 = vpack.c.bf16 %v768, %v767
        %v787 = vpack.c.bf16 %v770, %v769
        %v788 = vpack.c.bf16 %v772, %v771
        %v790 = vshrl.u32 %v774, 16
        %v793 = vshrl.u32 %v773, 16
        %v796 = vshrl.u32 %v775, 16
        %v799 = vshrl.u32 %v776, 16
        %v802 = vshrl.u32 %v777, 16
        %v805 = vshrl.u32 %v778, 16
        %v808 = vshrl.u32 %v779, 16
        %v811 = vshrl.u32 %v780, 16
        %v814 = vshrl.u32 %v781, 16
        %v817 = vshrl.u32 %v782, 16
        %v820 = vshrl.u32 %v783, 16
        %v823 = vshrl.u32 %v784, 16
        %v826 = vshrl.u32 %v785, 16
        %v829 = vshrl.u32 %v786, 16
        %v832 = vshrl.u32 %v787, 16
        %v835 = vshrl.u32 %v788, 16
        %v853 = vrot.slane %v790, 7
        %v854 = vshll.u32 %v774, 16
        %v856 = vor.u32 %v853, %v854
        %v857 = vrot.slane %v793, 7
        %v858 = vshll.u32 %v773, 16
        %v860 = vor.u32 %v857, %v858
        %v861 = vrot.slane %v796, 7
        %v862 = vshll.u32 %v775, 16
        %v864 = vor.u32 %v861, %v862
        %v865 = vrot.slane %v799, 7
        %v866 = vshll.u32 %v776, 16
        %v868 = vor.u32 %v865, %v866
        %v869 = vrot.slane %v802, 7
        %v870 = vshll.u32 %v777, 16
        %v872 = vor.u32 %v869, %v870
        %v873 = vrot.slane %v805, 7
        %v874 = vshll.u32 %v778, 16
        %v876 = vor.u32 %v873, %v874
        %v877 = vrot.slane %v808, 7
        %v878 = vshll.u32 %v779, 16
        %v880 = vor.u32 %v877, %v878
        %v881 = vrot.slane %v811, 7
        %v882 = vshll.u32 %v780, 16
        %v884 = vor.u32 %v881, %v882
        %v885 = vrot.slane %v814, 7
        %v886 = vshll.u32 %v781, 16
        %v888 = vor.u32 %v885, %v886
        %v889 = vrot.slane %v817, 7
        %v890 = vshll.u32 %v782, 16
        %v892 = vor.u32 %v889, %v890
        %v893 = vrot.slane %v820, 7
        %v894 = vshll.u32 %v783, 16
        %v896 = vor.u32 %v893, %v894
        %v897 = vrot.slane %v823, 7
        %v898 = vshll.u32 %v784, 16
        %v900 = vor.u32 %v897, %v898
        %v901 = vrot.slane %v826, 7
        %v902 = vshll.u32 %v785, 16
        %v904 = vor.u32 %v901, %v902
        %v905 = vrot.slane %v829, 7
        %v906 = vshll.u32 %v786, 16
        %v908 = vor.u32 %v905, %v906
        %v909 = vrot.slane %v832, 7
        %v910 = vshll.u32 %v787, 16
        %v912 = vor.u32 %v909, %v910
        %v913 = vrot.slane %v835, 7
        %v914 = vshll.u32 %v788, 16
        %v916 = vor.u32 %v913, %v914
        %v949 = vrot.slane %v854, 7
        %v950 = vrot.slane %v858, 7
        %v951 = vrot.slane %v862, 7
        %v952 = vrot.slane %v866, 7
        %v953 = vrot.slane %v870, 7
        %v954 = vrot.slane %v874, 7
        %v955 = vrot.slane %v878, 7
        %v956 = vrot.slane %v882, 7
        %v957 = vrot.slane %v886, 7
        %v958 = vrot.slane %v890, 7
        %v959 = vrot.slane %v894, 7
        %v960 = vrot.slane %v898, 7
        %v961 = vrot.slane %v902, 7
        %v962 = vrot.slane %v906, 7
        %v963 = vrot.slane %v910, 7
        %v964 = vrot.slane %v914, 7
        %vm981 = vcmask 1040384
        %vm982 = vsmask.f32 256
        %vm983 = vmand %vm981, %vm982
        %v984 = vsel %vm983, %v790, %v856
        %v985 = vsel %vm983, %v793, %v860
        %v986 = vsel %vm983, %v796, %v864
        %v987 = vsel %vm983, %v799, %v868
        %v988 = vsel %vm983, %v802, %v872
        %v989 = vsel %vm983, %v805, %v876
        %v990 = vsel %vm983, %v808, %v880
        %v991 = vsel %vm983, %v811, %v884
        %v992 = vsel %vm983, %v814, %v888
        %v993 = vsel %vm983, %v817, %v892
        %v994 = vsel %vm983, %v820, %v896
        %v995 = vsel %vm983, %v823, %v900
        %v996 = vsel %vm983, %v826, %v904
        %v997 = vsel %vm983, %v829, %v908
        %v998 = vsel %vm983, %v832, %v912
        %v999 = vsel %vm983, %v835, %v916
        %v1000 = vsel %vm983, %v853, %v949
        %v1001 = vsel %vm983, %v857, %v950
        %v1002 = vsel %vm983, %v861, %v951
        %v1003 = vsel %vm983, %v865, %v952
        %v1004 = vsel %vm983, %v869, %v953
        %v1005 = vsel %vm983, %v873, %v954
        %v1006 = vsel %vm983, %v877, %v955
        %v1007 = vsel %vm983, %v881, %v956
        %v1008 = vsel %vm983, %v885, %v957
        %v1009 = vsel %vm983, %v889, %v958
        %v1010 = vsel %vm983, %v893, %v959
        %v1011 = vsel %vm983, %v897, %v960
        %v1012 = vsel %vm983, %v901, %v961
        %v1013 = vsel %vm983, %v905, %v962
        %v1014 = vsel %vm983, %v909, %v963
        %v1015 = vsel %vm983, %v913, %v964
        %vm1016 = vsmask.f32 7424
        %v1018 = vshrl.u32 %v984, 16
        %v1020 = vshll.u32 %v984, 16
        %v1022 = vrot.slane %v1020, 1
        %v1023 = vor.u32 %v1018, %v1022
        %v1025 = vshll.u32 %v1000, 16
        %v1027 = vrot.slane %v1025, 1
        %v1028 = vsel %vm1016, %v1023, %v1027
        %v1030 = vshrl.u32 %v985, 16
        %v1032 = vshll.u32 %v985, 16
        %v1034 = vrot.slane %v1032, 1
        %v1035 = vor.u32 %v1030, %v1034
        %v1037 = vshll.u32 %v1001, 16
        %v1039 = vrot.slane %v1037, 1
        %v1040 = vsel %vm1016, %v1035, %v1039
        %v1042 = vshrl.u32 %v986, 16
        %v1044 = vshll.u32 %v986, 16
        %v1046 = vrot.slane %v1044, 1
        %v1047 = vor.u32 %v1042, %v1046
        %v1049 = vshll.u32 %v1002, 16
        %v1051 = vrot.slane %v1049, 1
        %v1052 = vsel %vm1016, %v1047, %v1051
        %v1054 = vshrl.u32 %v987, 16
        %v1056 = vshll.u32 %v987, 16
        %v1058 = vrot.slane %v1056, 1
        %v1059 = vor.u32 %v1054, %v1058
        %v1061 = vshll.u32 %v1003, 16
        %v1063 = vrot.slane %v1061, 1
        %v1064 = vsel %vm1016, %v1059, %v1063
        %v1066 = vshrl.u32 %v988, 16
        %v1068 = vshll.u32 %v988, 16
        %v1070 = vrot.slane %v1068, 1
        %v1071 = vor.u32 %v1066, %v1070
        %v1073 = vshll.u32 %v1004, 16
        %v1075 = vrot.slane %v1073, 1
        %v1076 = vsel %vm1016, %v1071, %v1075
        %v1078 = vshrl.u32 %v989, 16
        %v1080 = vshll.u32 %v989, 16
        %v1082 = vrot.slane %v1080, 1
        %v1083 = vor.u32 %v1078, %v1082
        %v1085 = vshll.u32 %v1005, 16
        %v1087 = vrot.slane %v1085, 1
        %v1088 = vsel %vm1016, %v1083, %v1087
        %v1090 = vshrl.u32 %v990, 16
        %v1092 = vshll.u32 %v990, 16
        %v1094 = vrot.slane %v1092, 1
        %v1095 = vor.u32 %v1090, %v1094
        %v1097 = vshll.u32 %v1006, 16
        %v1099 = vrot.slane %v1097, 1
        %v1100 = vsel %vm1016, %v1095, %v1099
        %v1102 = vshrl.u32 %v991, 16
        %v1104 = vshll.u32 %v991, 16
        %v1106 = vrot.slane %v1104, 1
        %v1107 = vor.u32 %v1102, %v1106
        %v1109 = vshll.u32 %v1007, 16
        %v1111 = vrot.slane %v1109, 1
        %v1112 = vsel %vm1016, %v1107, %v1111
        %v1114 = vshrl.u32 %v992, 16
        %v1116 = vshll.u32 %v992, 16
        %v1118 = vrot.slane %v1116, 1
        %v1119 = vor.u32 %v1114, %v1118
        %v1121 = vshll.u32 %v1008, 16
        %v1123 = vrot.slane %v1121, 1
        %v1124 = vsel %vm1016, %v1119, %v1123
        %v1126 = vshrl.u32 %v993, 16
        %v1128 = vshll.u32 %v993, 16
        %v1130 = vrot.slane %v1128, 1
        %v1131 = vor.u32 %v1126, %v1130
        %v1133 = vshll.u32 %v1009, 16
        %v1135 = vrot.slane %v1133, 1
        %v1136 = vsel %vm1016, %v1131, %v1135
        %v1138 = vshrl.u32 %v994, 16
        %v1140 = vshll.u32 %v994, 16
        %v1142 = vrot.slane %v1140, 1
        %v1143 = vor.u32 %v1138, %v1142
        %v1145 = vshll.u32 %v1010, 16
        %v1147 = vrot.slane %v1145, 1
        %v1148 = vsel %vm1016, %v1143, %v1147
        %v1150 = vshrl.u32 %v995, 16
        %v1152 = vshll.u32 %v995, 16
        %v1154 = vrot.slane %v1152, 1
        %v1155 = vor.u32 %v1150, %v1154
        %v1157 = vshll.u32 %v1011, 16
        %v1159 = vrot.slane %v1157, 1
        %v1160 = vsel %vm1016, %v1155, %v1159
        %v1162 = vshrl.u32 %v996, 16
        %v1164 = vshll.u32 %v996, 16
        %v1166 = vrot.slane %v1164, 1
        %v1167 = vor.u32 %v1162, %v1166
        %v1169 = vshll.u32 %v1012, 16
        %v1171 = vrot.slane %v1169, 1
        %v1172 = vsel %vm1016, %v1167, %v1171
        %v1174 = vshrl.u32 %v997, 16
        %v1176 = vshll.u32 %v997, 16
        %v1178 = vrot.slane %v1176, 1
        %v1179 = vor.u32 %v1174, %v1178
        %v1181 = vshll.u32 %v1013, 16
        %v1183 = vrot.slane %v1181, 1
        %v1184 = vsel %vm1016, %v1179, %v1183
        %v1186 = vshrl.u32 %v998, 16
        %v1188 = vshll.u32 %v998, 16
        %v1190 = vrot.slane %v1188, 1
        %v1191 = vor.u32 %v1186, %v1190
        %v1193 = vshll.u32 %v1014, 16
        %v1195 = vrot.slane %v1193, 1
        %v1196 = vsel %vm1016, %v1191, %v1195
        %vm1227 = vcmask 1046528
        %v1228 = vrot.slane %v984, 1
        %v1229 = vrot.slane %v1000, 1
        %v1230 = vsel %vm1227, %v1228, %v1229
        %v1231 = vrot.slane %v985, 1
        %v1232 = vrot.slane %v1001, 1
        %v1233 = vsel %vm1227, %v1231, %v1232
        %v1234 = vrot.slane %v986, 1
        %v1235 = vrot.slane %v1002, 1
        %v1236 = vsel %vm1227, %v1234, %v1235
        %v1237 = vrot.slane %v987, 1
        %v1238 = vrot.slane %v1003, 1
        %v1239 = vsel %vm1227, %v1237, %v1238
        %v1240 = vrot.slane %v988, 1
        %v1241 = vrot.slane %v1004, 1
        %v1242 = vsel %vm1227, %v1240, %v1241
        %v1243 = vrot.slane %v989, 1
        %v1244 = vrot.slane %v1005, 1
        %v1245 = vsel %vm1227, %v1243, %v1244
        %v1246 = vrot.slane %v990, 1
        %v1247 = vrot.slane %v1006, 1
        %v1248 = vsel %vm1227, %v1246, %v1247
        %v1249 = vrot.slane %v991, 1
        %v1250 = vrot.slane %v1007, 1
        %v1251 = vsel %vm1227, %v1249, %v1250
        %v1252 = vrot.slane %v992, 1
        %v1253 = vrot.slane %v1008, 1
        %v1254 = vsel %vm1227, %v1252, %v1253
        %v1255 = vrot.slane %v993, 1
        %v1256 = vrot.slane %v1009, 1
        %v1257 = vsel %vm1227, %v1255, %v1256
        %v1258 = vrot.slane %v994, 1
        %v1259 = vrot.slane %v1010, 1
        %v1260 = vsel %vm1227, %v1258, %v1259
        %v1261 = vrot.slane %v995, 1
        %v1262 = vrot.slane %v1011, 1
        %v1263 = vsel %vm1227, %v1261, %v1262
        %v1264 = vrot.slane %v996, 1
        %v1265 = vrot.slane %v1012, 1
        %v1266 = vsel %vm1227, %v1264, %v1265
        %v1267 = vrot.slane %v997, 1
        %v1268 = vrot.slane %v1013, 1
        %v1269 = vsel %vm1227, %v1267, %v1268
        %v1270 = vrot.slane %v998, 1
        %v1271 = vrot.slane %v1014, 1
        %v1272 = vsel %vm1227, %v1270, %v1271
        %v1274 = vshrl.u32 %v999, 16
        %v1276 = vshll.u32 %v999, 16
        %v1278 = vrot.slane %v1276, 1
        %v1279 = vor.u32 %v1274, %v1278
        %v1281 = vshll.u32 %v1015, 16
        %v1283 = vrot.slane %v1281, 1
        %v1284 = vsel %vm1016, %v1279, %v1283
        %v1287 = vrot.slane %v999, 1
        %v1288 = vrot.slane %v1015, 1
        %v1289 = vsel %vm1227, %v1287, %v1288
        %1290 = vrot.lane.b32.xlu0 %v1028, 64
        %v1291 = vpop.permute.xlu0 %1290
        %1292 = vrot.lane.b32.xlu0 %v1040, 64
        %v1293 = vpop.permute.xlu0 %1292
        %1294 = vrot.lane.b32.xlu0 %v1052, 64
        %v1295 = vpop.permute.xlu0 %1294
        %1296 = vrot.lane.b32.xlu0 %v1064, 64
        %v1297 = vpop.permute.xlu0 %1296
        %1298 = vrot.lane.b32.xlu0 %v1076, 64
        %v1299 = vpop.permute.xlu0 %1298
        %1300 = vrot.lane.b32.xlu0 %v1088, 64
        %v1301 = vpop.permute.xlu0 %1300
        %1302 = vrot.lane.b32.xlu0 %v1100, 64
        %v1303 = vpop.permute.xlu0 %1302
        %1304 = vrot.lane.b32.xlu0 %v1112, 64
        %v1305 = vpop.permute.xlu0 %1304
        %1306 = vrot.lane.b32.xlu0 %v1124, 64
        %v1307 = vpop.permute.xlu0 %1306
        %1308 = vrot.lane.b32.xlu0 %v1136, 64
        %v1309 = vpop.permute.xlu0 %1308
        %1310 = vrot.lane.b32.xlu0 %v1148, 64
        %v1311 = vpop.permute.xlu0 %1310
        %1312 = vrot.lane.b32.xlu0 %v1160, 64
        %v1313 = vpop.permute.xlu0 %1312
        %1314 = vrot.lane.b32.xlu0 %v1172, 64
        %v1315 = vpop.permute.xlu0 %1314
        %1316 = vrot.lane.b32.xlu0 %v1184, 64
        %v1317 = vpop.permute.xlu0 %1316
        %1318 = vrot.lane.b32.xlu0 %v1196, 64
        %v1319 = vpop.permute.xlu0 %1318
        %1320 = vrot.lane.b32.xlu0 %v985, 64
        %v1321 = vpop.permute.xlu0 %1320
        %1322 = vrot.lane.b32.xlu0 %v984, 64
        %v1323 = vpop.permute.xlu0 %1322
        %1324 = vrot.lane.b32.xlu0 %v986, 64
        %v1325 = vpop.permute.xlu0 %1324
        %1326 = vrot.lane.b32.xlu0 %v987, 64
        %v1327 = vpop.permute.xlu0 %1326
        %1328 = vrot.lane.b32.xlu0 %v988, 64
        %v1329 = vpop.permute.xlu0 %1328
        %1330 = vrot.lane.b32.xlu0 %v989, 64
        %v1331 = vpop.permute.xlu0 %1330
        %1332 = vrot.lane.b32.xlu0 %v990, 64
        %v1333 = vpop.permute.xlu0 %1332
        %1334 = vrot.lane.b32.xlu0 %v991, 64
        %v1335 = vpop.permute.xlu0 %1334
        %1336 = vrot.lane.b32.xlu0 %v992, 64
        %v1337 = vpop.permute.xlu0 %1336
        %1338 = vrot.lane.b32.xlu0 %v993, 64
        %v1339 = vpop.permute.xlu0 %1338
        %1340 = vrot.lane.b32.xlu0 %v994, 64
        %v1341 = vpop.permute.xlu0 %1340
        %1342 = vrot.lane.b32.xlu0 %v995, 64
        %v1343 = vpop.permute.xlu0 %1342
        %1344 = vrot.lane.b32.xlu0 %v996, 64
        %v1345 = vpop.permute.xlu0 %1344
        %1346 = vrot.lane.b32.xlu0 %v997, 64
        %v1347 = vpop.permute.xlu0 %1346
        %1348 = vrot.lane.b32.xlu0 %v998, 64
        %v1349 = vpop.permute.xlu0 %1348
        %1350 = vrot.lane.b32.xlu0 %v999, 64
        %v1351 = vpop.permute.xlu0 %1350
        %1352 = vrot.lane.b32.xlu0 %v1233, 64
        %v1353 = vpop.permute.xlu0 %1352
        %1354 = vrot.lane.b32.xlu0 %v1230, 64
        %v1355 = vpop.permute.xlu0 %1354
        %1356 = vrot.lane.b32.xlu0 %v1236, 64
        %v1357 = vpop.permute.xlu0 %1356
        %1358 = vrot.lane.b32.xlu0 %v1239, 64
        %v1359 = vpop.permute.xlu0 %1358
        %1360 = vrot.lane.b32.xlu0 %v1242, 64
        %v1361 = vpop.permute.xlu0 %1360
        %1362 = vrot.lane.b32.xlu0 %v1245, 64
        %v1363 = vpop.permute.xlu0 %1362
        %1364 = vrot.lane.b32.xlu0 %v1248, 64
        %v1365 = vpop.permute.xlu0 %1364
        %1366 = vrot.lane.b32.xlu0 %v1251, 64
        %v1367 = vpop.permute.xlu0 %1366
        %1368 = vrot.lane.b32.xlu0 %v1254, 64
        %v1369 = vpop.permute.xlu0 %1368
        %1370 = vrot.lane.b32.xlu0 %v1257, 64
        %v1371 = vpop.permute.xlu0 %1370
        %1372 = vrot.lane.b32.xlu0 %v1260, 64
        %v1373 = vpop.permute.xlu0 %1372
        %1374 = vrot.lane.b32.xlu0 %v1263, 64
        %v1375 = vpop.permute.xlu0 %1374
        %1376 = vrot.lane.b32.xlu0 %v1266, 64
        %v1377 = vpop.permute.xlu0 %1376
        %1378 = vrot.lane.b32.xlu0 %v1269, 64
        %v1379 = vpop.permute.xlu0 %1378
        %1380 = vrot.lane.b32.xlu0 %v1272, 64
        %v1381 = vpop.permute.xlu0 %1380
        %1382 = vrot.lane.b32.xlu0 %v1289, 64
        %v1383 = vpop.permute.xlu0 %1382
        %1384 = vrot.lane.b32.xlu0 %v1284, 64
        %v1385 = vpop.permute.xlu0 %1384
        %v1387 = vsel %vm419, %v984, %v1291
        %v1390 = vsel %vm419, %v985, %v1293
        %v1393 = vsel %vm419, %v986, %v1295
        %v1396 = vsel %vm419, %v987, %v1297
        %v1399 = vsel %vm419, %v988, %v1299
        %v1402 = vsel %vm419, %v989, %v1301
        %v1405 = vsel %vm419, %v990, %v1303
        %v1408 = vsel %vm419, %v991, %v1305
        %v1411 = vsel %vm419, %v992, %v1307
        %v1414 = vsel %vm419, %v993, %v1309
        %v1417 = vsel %vm419, %v994, %v1311
        %v1420 = vsel %vm419, %v995, %v1313
        %v1423 = vsel %vm419, %v996, %v1315
        %v1426 = vsel %vm419, %v997, %v1317
        %v1429 = vsel %vm419, %v998, %v1319
        %v1433 = vsel %vm419, %v1230, %v1321
        %v1437 = vsel %vm419, %v1233, %v1323
        %v1440 = vsel %vm419, %v1230, %v1325
        %v1444 = vsel %vm419, %v1236, %v1327
        %v1448 = vsel %vm419, %v1239, %v1329
        %v1452 = vsel %vm419, %v1242, %v1331
        %v1456 = vsel %vm419, %v1245, %v1333
        %v1460 = vsel %vm419, %v1248, %v1335
        %v1464 = vsel %vm419, %v1251, %v1337
        %v1468 = vsel %vm419, %v1254, %v1339
        %v1472 = vsel %vm419, %v1257, %v1341
        %v1476 = vsel %vm419, %v1260, %v1343
        %v1480 = vsel %vm419, %v1263, %v1345
        %v1484 = vsel %vm419, %v1266, %v1347
        %v1488 = vsel %vm419, %v1269, %v1349
        %v1492 = vsel %vm419, %v1272, %v1351
        %v1496 = vsel %vm419, %v1040, %v1353
        %v1500 = vsel %vm419, %v1028, %v1355
        %v1504 = vsel %vm419, %v1052, %v1357
        %v1508 = vsel %vm419, %v1064, %v1359
        %v1512 = vsel %vm419, %v1076, %v1361
        %v1516 = vsel %vm419, %v1088, %v1363
        %v1520 = vsel %vm419, %v1100, %v1365
        %v1524 = vsel %vm419, %v1112, %v1367
        %v1528 = vsel %vm419, %v1124, %v1369
        %v1532 = vsel %vm419, %v1136, %v1371
        %v1536 = vsel %vm419, %v1148, %v1373
        %v1540 = vsel %vm419, %v1160, %v1375
        %v1544 = vsel %vm419, %v1172, %v1377
        %v1548 = vsel %vm419, %v1184, %v1379
        %v1552 = vsel %vm419, %v1196, %v1381
        %v1556 = vsel %vm419, %v1284, %v1383
        %v1559 = vsel %vm419, %v999, %v1385
        %v1561 = vpack.c.bf16 %v588, %v583
        %v1562 = vpack.c.bf16 %v598, %v593
        %v1563 = vpack.c.bf16 %v608, %v603
        %v1564 = vpack.c.bf16 %v618, %v613
        %v1565 = vpack.c.bf16 %v628, %v623
        %v1566 = vpack.c.bf16 %v638, %v633
        %v1567 = vpack.c.bf16 %v648, %v643
        %v1568 = vpack.c.bf16 %v658, %v653
        %v1569 = vpack.c.bf16 %v668, %v663
        %v1570 = vpack.c.bf16 %v678, %v673
        %v1571 = vpack.c.bf16 %v688, %v683
        %v1572 = vpack.c.bf16 %v698, %v693
        %v1573 = vpack.c.bf16 %v708, %v703
        %v1574 = vpack.c.bf16 %v718, %v713
        %v1575 = vpack.c.bf16 %v728, %v723
        %v1576 = vpack.c.bf16 %v738, %v733
        %v1578 = vshrl.u32 %v1562, 16
        %v1581 = vshrl.u32 %v1561, 16
        %v1584 = vshrl.u32 %v1563, 16
        %v1587 = vshrl.u32 %v1564, 16
        %v1590 = vshrl.u32 %v1565, 16
        %v1593 = vshrl.u32 %v1566, 16
        %v1596 = vshrl.u32 %v1567, 16
        %v1599 = vshrl.u32 %v1568, 16
        %v1602 = vshrl.u32 %v1569, 16
        %v1605 = vshrl.u32 %v1570, 16
        %v1608 = vshrl.u32 %v1571, 16
        %v1611 = vshrl.u32 %v1572, 16
        %v1614 = vshrl.u32 %v1573, 16
        %v1617 = vshrl.u32 %v1574, 16
        %v1620 = vshrl.u32 %v1575, 16
        %v1623 = vshrl.u32 %v1576, 16
        %v1641 = vrot.slane %v1578, 7
        %v1642 = vshll.u32 %v1562, 16
        %v1644 = vor.u32 %v1641, %v1642
        %v1645 = vrot.slane %v1581, 7
        %v1646 = vshll.u32 %v1561, 16
        %v1648 = vor.u32 %v1645, %v1646
        %v1649 = vrot.slane %v1584, 7
        %v1650 = vshll.u32 %v1563, 16
        %v1652 = vor.u32 %v1649, %v1650
        %v1653 = vrot.slane %v1587, 7
        %v1654 = vshll.u32 %v1564, 16
        %v1656 = vor.u32 %v1653, %v1654
        %v1657 = vrot.slane %v1590, 7
        %v1658 = vshll.u32 %v1565, 16
        %v1660 = vor.u32 %v1657, %v1658
        %v1661 = vrot.slane %v1593, 7
        %v1662 = vshll.u32 %v1566, 16
        %v1664 = vor.u32 %v1661, %v1662
        %v1665 = vrot.slane %v1596, 7
        %v1666 = vshll.u32 %v1567, 16
        %v1668 = vor.u32 %v1665, %v1666
        %v1669 = vrot.slane %v1599, 7
        %v1670 = vshll.u32 %v1568, 16
        %v1672 = vor.u32 %v1669, %v1670
        %v1673 = vrot.slane %v1602, 7
        %v1674 = vshll.u32 %v1569, 16
        %v1676 = vor.u32 %v1673, %v1674
        %v1677 = vrot.slane %v1605, 7
        %v1678 = vshll.u32 %v1570, 16
        %v1680 = vor.u32 %v1677, %v1678
        %v1681 = vrot.slane %v1608, 7
        %v1682 = vshll.u32 %v1571, 16
        %v1684 = vor.u32 %v1681, %v1682
        %v1685 = vrot.slane %v1611, 7
        %v1686 = vshll.u32 %v1572, 16
        %v1688 = vor.u32 %v1685, %v1686
        %v1689 = vrot.slane %v1614, 7
        %v1690 = vshll.u32 %v1573, 16
        %v1692 = vor.u32 %v1689, %v1690
        %v1693 = vrot.slane %v1617, 7
        %v1694 = vshll.u32 %v1574, 16
        %v1696 = vor.u32 %v1693, %v1694
        %v1697 = vrot.slane %v1620, 7
        %v1698 = vshll.u32 %v1575, 16
        %v1700 = vor.u32 %v1697, %v1698
        %v1701 = vrot.slane %v1623, 7
        %v1702 = vshll.u32 %v1576, 16
        %v1704 = vor.u32 %v1701, %v1702
        %v1737 = vrot.slane %v1642, 7
        %v1738 = vrot.slane %v1646, 7
        %v1739 = vrot.slane %v1650, 7
        %v1740 = vrot.slane %v1654, 7
        %v1741 = vrot.slane %v1658, 7
        %v1742 = vrot.slane %v1662, 7
        %v1743 = vrot.slane %v1666, 7
        %v1744 = vrot.slane %v1670, 7
        %v1745 = vrot.slane %v1674, 7
        %v1746 = vrot.slane %v1678, 7
        %v1747 = vrot.slane %v1682, 7
        %v1748 = vrot.slane %v1686, 7
        %v1749 = vrot.slane %v1690, 7
        %v1750 = vrot.slane %v1694, 7
        %v1751 = vrot.slane %v1698, 7
        %v1752 = vrot.slane %v1702, 7
        %v1769 = vsel %vm983, %v1578, %v1644
        %v1770 = vsel %vm983, %v1581, %v1648
        %v1771 = vsel %vm983, %v1584, %v1652
        %v1772 = vsel %vm983, %v1587, %v1656
        %v1773 = vsel %vm983, %v1590, %v1660
        %v1774 = vsel %vm983, %v1593, %v1664
        %v1775 = vsel %vm983, %v1596, %v1668
        %v1776 = vsel %vm983, %v1599, %v1672
        %v1777 = vsel %vm983, %v1602, %v1676
        %v1778 = vsel %vm983, %v1605, %v1680
        %v1779 = vsel %vm983, %v1608, %v1684
        %v1780 = vsel %vm983, %v1611, %v1688
        %v1781 = vsel %vm983, %v1614, %v1692
        %v1782 = vsel %vm983, %v1617, %v1696
        %v1783 = vsel %vm983, %v1620, %v1700
        %v1784 = vsel %vm983, %v1623, %v1704
        %v1785 = vsel %vm983, %v1641, %v1737
        %v1786 = vsel %vm983, %v1645, %v1738
        %v1787 = vsel %vm983, %v1649, %v1739
        %v1788 = vsel %vm983, %v1653, %v1740
        %v1789 = vsel %vm983, %v1657, %v1741
        %v1790 = vsel %vm983, %v1661, %v1742
        %v1791 = vsel %vm983, %v1665, %v1743
        %v1792 = vsel %vm983, %v1669, %v1744
        %v1793 = vsel %vm983, %v1673, %v1745
        %v1794 = vsel %vm983, %v1677, %v1746
        %v1795 = vsel %vm983, %v1681, %v1747
        %v1796 = vsel %vm983, %v1685, %v1748
        %v1797 = vsel %vm983, %v1689, %v1749
        %v1798 = vsel %vm983, %v1693, %v1750
        %v1799 = vsel %vm983, %v1697, %v1751
        %v1800 = vsel %vm983, %v1701, %v1752
        %v1802 = vshrl.u32 %v1769, 16
        %v1804 = vshll.u32 %v1769, 16
        %v1806 = vrot.slane %v1804, 1
        %v1807 = vor.u32 %v1802, %v1806
        %v1809 = vshll.u32 %v1785, 16
        %v1811 = vrot.slane %v1809, 1
        %v1812 = vsel %vm1016, %v1807, %v1811
        %v1814 = vshrl.u32 %v1770, 16
        %v1816 = vshll.u32 %v1770, 16
        %v1818 = vrot.slane %v1816, 1
        %v1819 = vor.u32 %v1814, %v1818
        %v1821 = vshll.u32 %v1786, 16
        %v1823 = vrot.slane %v1821, 1
        %v1824 = vsel %vm1016, %v1819, %v1823
        %v1826 = vshrl.u32 %v1771, 16
        %v1828 = vshll.u32 %v1771, 16
        %v1830 = vrot.slane %v1828, 1
        %v1831 = vor.u32 %v1826, %v1830
        %v1833 = vshll.u32 %v1787, 16
        %v1835 = vrot.slane %v1833, 1
        %v1836 = vsel %vm1016, %v1831, %v1835
        %v1838 = vshrl.u32 %v1772, 16
        %v1840 = vshll.u32 %v1772, 16
        %v1842 = vrot.slane %v1840, 1
        %v1843 = vor.u32 %v1838, %v1842
        %v1845 = vshll.u32 %v1788, 16
        %v1847 = vrot.slane %v1845, 1
        %v1848 = vsel %vm1016, %v1843, %v1847
        %v1850 = vshrl.u32 %v1773, 16
        %v1852 = vshll.u32 %v1773, 16
        %v1854 = vrot.slane %v1852, 1
        %v1855 = vor.u32 %v1850, %v1854
        %v1857 = vshll.u32 %v1789, 16
        %v1859 = vrot.slane %v1857, 1
        %v1860 = vsel %vm1016, %v1855, %v1859
        %v1862 = vshrl.u32 %v1774, 16
        %v1864 = vshll.u32 %v1774, 16
        %v1866 = vrot.slane %v1864, 1
        %v1867 = vor.u32 %v1862, %v1866
        %v1869 = vshll.u32 %v1790, 16
        %v1871 = vrot.slane %v1869, 1
        %v1872 = vsel %vm1016, %v1867, %v1871
        %v1874 = vshrl.u32 %v1775, 16
        %v1876 = vshll.u32 %v1775, 16
        %v1878 = vrot.slane %v1876, 1
        %v1879 = vor.u32 %v1874, %v1878
        %v1881 = vshll.u32 %v1791, 16
        %v1883 = vrot.slane %v1881, 1
        %v1884 = vsel %vm1016, %v1879, %v1883
        %v1886 = vshrl.u32 %v1776, 16
        %v1888 = vshll.u32 %v1776, 16
        %v1890 = vrot.slane %v1888, 1
        %v1891 = vor.u32 %v1886, %v1890
        %v1893 = vshll.u32 %v1792, 16
        %v1895 = vrot.slane %v1893, 1
        %v1896 = vsel %vm1016, %v1891, %v1895
        %v1898 = vshrl.u32 %v1777, 16
        %v1900 = vshll.u32 %v1777, 16
        %v1902 = vrot.slane %v1900, 1
        %v1903 = vor.u32 %v1898, %v1902
        %v1905 = vshll.u32 %v1793, 16
        %v1907 = vrot.slane %v1905, 1
        %v1908 = vsel %vm1016, %v1903, %v1907
        %v1910 = vshrl.u32 %v1778, 16
        %v1912 = vshll.u32 %v1778, 16
        %v1914 = vrot.slane %v1912, 1
        %v1915 = vor.u32 %v1910, %v1914
        %v1917 = vshll.u32 %v1794, 16
        %v1919 = vrot.slane %v1917, 1
        %v1920 = vsel %vm1016, %v1915, %v1919
        %v1922 = vshrl.u32 %v1779, 16
        %v1924 = vshll.u32 %v1779, 16
        %v1926 = vrot.slane %v1924, 1
        %v1927 = vor.u32 %v1922, %v1926
        %v1929 = vshll.u32 %v1795, 16
        %v1931 = vrot.slane %v1929, 1
        %v1932 = vsel %vm1016, %v1927, %v1931
        %v1934 = vshrl.u32 %v1780, 16
        %v1936 = vshll.u32 %v1780, 16
        %v1938 = vrot.slane %v1936, 1
        %v1939 = vor.u32 %v1934, %v1938
        %v1941 = vshll.u32 %v1796, 16
        %v1943 = vrot.slane %v1941, 1
        %v1944 = vsel %vm1016, %v1939, %v1943
        %v1946 = vshrl.u32 %v1781, 16
        %v1948 = vshll.u32 %v1781, 16
        %v1950 = vrot.slane %v1948, 1
        %v1951 = vor.u32 %v1946, %v1950
        %v1953 = vshll.u32 %v1797, 16
        %v1955 = vrot.slane %v1953, 1
        %v1956 = vsel %vm1016, %v1951, %v1955
        %v1958 = vshrl.u32 %v1782, 16
        %v1960 = vshll.u32 %v1782, 16
        %v1962 = vrot.slane %v1960, 1
        %v1963 = vor.u32 %v1958, %v1962
        %v1965 = vshll.u32 %v1798, 16
        %v1967 = vrot.slane %v1965, 1
        %v1968 = vsel %vm1016, %v1963, %v1967
        %v1970 = vshrl.u32 %v1783, 16
        %v1972 = vshll.u32 %v1783, 16
        %v1974 = vrot.slane %v1972, 1
        %v1975 = vor.u32 %v1970, %v1974
        %v1977 = vshll.u32 %v1799, 16
        %v1979 = vrot.slane %v1977, 1
        %v1980 = vsel %vm1016, %v1975, %v1979
        %v2026 = vrot.slane %v1769, 1
        %v2027 = vrot.slane %v1785, 1
        %v2028 = vsel %vm1227, %v2026, %v2027
        %v2029 = vrot.slane %v1770, 1
        %v2030 = vrot.slane %v1786, 1
        %v2031 = vsel %vm1227, %v2029, %v2030
        %v2032 = vrot.slane %v1771, 1
        %v2033 = vrot.slane %v1787, 1
        %v2034 = vsel %vm1227, %v2032, %v2033
        %v2035 = vrot.slane %v1772, 1
        %v2036 = vrot.slane %v1788, 1
        %v2037 = vsel %vm1227, %v2035, %v2036
        %v2038 = vrot.slane %v1773, 1
        %v2039 = vrot.slane %v1789, 1
        %v2040 = vsel %vm1227, %v2038, %v2039
        %v2041 = vrot.slane %v1774, 1
        %v2042 = vrot.slane %v1790, 1
        %v2043 = vsel %vm1227, %v2041, %v2042
        %v2044 = vrot.slane %v1775, 1
        %v2045 = vrot.slane %v1791, 1
        %v2046 = vsel %vm1227, %v2044, %v2045
        %v2047 = vrot.slane %v1776, 1
        %v2048 = vrot.slane %v1792, 1
        %v2049 = vsel %vm1227, %v2047, %v2048
        %v2050 = vrot.slane %v1777, 1
        %v2051 = vrot.slane %v1793, 1
        %v2052 = vsel %vm1227, %v2050, %v2051
        %v2053 = vrot.slane %v1778, 1
        %v2054 = vrot.slane %v1794, 1
        %v2055 = vsel %vm1227, %v2053, %v2054
        %v2056 = vrot.slane %v1779, 1
        %v2057 = vrot.slane %v1795, 1
        %v2058 = vsel %vm1227, %v2056, %v2057
        %v2059 = vrot.slane %v1780, 1
        %v2060 = vrot.slane %v1796, 1
        %v2061 = vsel %vm1227, %v2059, %v2060
        %v2062 = vrot.slane %v1781, 1
        %v2063 = vrot.slane %v1797, 1
        %v2064 = vsel %vm1227, %v2062, %v2063
        %v2065 = vrot.slane %v1782, 1
        %v2066 = vrot.slane %v1798, 1
        %v2067 = vsel %vm1227, %v2065, %v2066
        %v2068 = vrot.slane %v1783, 1
        %v2069 = vrot.slane %v1799, 1
        %v2070 = vsel %vm1227, %v2068, %v2069
        %v2087 = vshrl.u32 %v1784, 16
        %v2089 = vshll.u32 %v1784, 16
        %v2091 = vrot.slane %v2089, 1
        %v2092 = vor.u32 %v2087, %v2091
        %v2094 = vshll.u32 %v1800, 16
        %v2096 = vrot.slane %v2094, 1
        %v2097 = vsel %vm1016, %v2092, %v2096
        %v2101 = vrot.slane %v1784, 1
        %v2102 = vrot.slane %v1800, 1
        %v2103 = vsel %vm1227, %v2101, %v2102
        %v2105 = vld [vmem:[%s3] sm:$0xf]
        %v2106 = vld [vmem:[%s3 + $0x4] sm:$0xf]
        %v2107 = vld [vmem:[%s3 + $0x8] sm:$0xf]
        %v2108 = vld [vmem:[%s3 + $0xc] sm:$0xf]
        %v2109 = vld [vmem:[%s3 + $0x10] sm:$0xf]
        %v2110 = vld [vmem:[%s3 + $0x14] sm:$0xf]
        %v2111 = vld [vmem:[%s3 + $0x18] sm:$0xf]
        %v2112 = vld [vmem:[%s3 + $0x1c] sm:$0xf]
        %v2113 = vld [vmem:[%s3 + $0x20] sm:$0xf]
        %v2114 = vld [vmem:[%s3 + $0x24] sm:$0xf]
        %v2115 = vld [vmem:[%s3 + $0x28] sm:$0xf]
        %v2116 = vld [vmem:[%s3 + $0x2c] sm:$0xf]
        %v2117 = vld [vmem:[%s3 + $0x30] sm:$0xf]
        %v2118 = vld [vmem:[%s3 + $0x34] sm:$0xf]
        %v2119 = vld [vmem:[%s3 + $0x38] sm:$0xf]
        %v2120 = vld [vmem:[%s3 + $0x3c] sm:$0xf]
        %v2121 = vld [vmem:[%s3 + $0x40] sm:$0xf]
        %v2122 = vld [vmem:[%s3 + $0x44] sm:$0xf]
        %v2123 = vld [vmem:[%s3 + $0x48] sm:$0xf]
        %v2124 = vld [vmem:[%s3 + $0x4c] sm:$0xf]
        %v2125 = vld [vmem:[%s3 + $0x50] sm:$0xf]
        %v2126 = vld [vmem:[%s3 + $0x54] sm:$0xf]
        %v2127 = vld [vmem:[%s3 + $0x58] sm:$0xf]
        %v2128 = vld [vmem:[%s3 + $0x5c] sm:$0xf]
        %v2129 = vld [vmem:[%s3 + $0x60] sm:$0xf]
        %v2130 = vld [vmem:[%s3 + $0x64] sm:$0xf]
        %v2131 = vld [vmem:[%s3 + $0x68] sm:$0xf]
        %v2132 = vld [vmem:[%s3 + $0x6c] sm:$0xf]
        %v2133 = vld [vmem:[%s3 + $0x70] sm:$0xf]
        %v2134 = vld [vmem:[%s3 + $0x74] sm:$0xf]
        %v2135 = vld [vmem:[%s3 + $0x78] sm:$0xf]
        %v2136 = vld [vmem:[%s3 + $0x7c] sm:$0xf]
        %v2137 = vld [vmem:[%s3 + $0x80] sm:$0xf]
        %v2138 = vld [vmem:[%s3 + $0x84] sm:$0xf]
        %v2139 = vld [vmem:[%s3 + $0x88] sm:$0xf]
        %v2140 = vld [vmem:[%s3 + $0x8c] sm:$0xf]
        %v2141 = vld [vmem:[%s3 + $0x90] sm:$0xf]
        %v2142 = vld [vmem:[%s3 + $0x94] sm:$0xf]
        %v2143 = vld [vmem:[%s3 + $0x98] sm:$0xf]
        %v2144 = vld [vmem:[%s3 + $0x9c] sm:$0xf]
        %v2145 = vld [vmem:[%s3 + $0xa0] sm:$0xf]
        %v2146 = vld [vmem:[%s3 + $0xa4] sm:$0xf]
        %v2147 = vld [vmem:[%s3 + $0xa8] sm:$0xf]
        %v2148 = vld [vmem:[%s3 + $0xac] sm:$0xf]
        %v2149 = vld [vmem:[%s3 + $0xb0] sm:$0xf]
        %v2150 = vld [vmem:[%s3 + $0xb4] sm:$0xf]
        %v2151 = vld [vmem:[%s3 + $0xb8] sm:$0xf]
        %v2152 = vld [vmem:[%s3 + $0xbc] sm:$0xf]
        %v2153 = vld [vmem:[%s3 + $0xc0] sm:$0xf]
        %v2154 = vld [vmem:[%s3 + $0xc4] sm:$0xf]
        %v2155 = vld [vmem:[%s3 + $0xc8] sm:$0xf]
        %v2156 = vld [vmem:[%s3 + $0xcc] sm:$0xf]
        %v2157 = vld [vmem:[%s3 + $0xd0] sm:$0xf]
        %v2158 = vld [vmem:[%s3 + $0xd4] sm:$0xf]
        %v2159 = vld [vmem:[%s3 + $0xd8] sm:$0xf]
        %v2160 = vld [vmem:[%s3 + $0xdc] sm:$0xf]
        %v2161 = vld [vmem:[%s3 + $0xe0] sm:$0xf]
        %v2162 = vld [vmem:[%s3 + $0xe4] sm:$0xf]
        %v2163 = vld [vmem:[%s3 + $0xe8] sm:$0xf]
        %v2164 = vld [vmem:[%s3 + $0xec] sm:$0xf]
        %v2165 = vld [vmem:[%s3 + $0xf0] sm:$0xf]
        %v2166 = vld [vmem:[%s3 + $0xf4] sm:$0xf]
        %v2167 = vld [vmem:[%s3 + $0xf8] sm:$0xf]
        %v2168 = vld [vmem:[%s3 + $0xfc] sm:$0xf]
        %v2169 = vld [vmem:[%s3 + $0x100] sm:$0xf]
        %v2170 = vld [vmem:[%s3 + $0x104] sm:$0xf]
        %v2171 = vld [vmem:[%s3 + $0x108] sm:$0xf]
        %v2172 = vld [vmem:[%s3 + $0x10c] sm:$0xf]
        %v2173 = vld [vmem:[%s3 + $0x110] sm:$0xf]
        %v2174 = vld [vmem:[%s3 + $0x114] sm:$0xf]
        %v2175 = vld [vmem:[%s3 + $0x118] sm:$0xf]
        %v2176 = vld [vmem:[%s3 + $0x11c] sm:$0xf]
        %v2177 = vld [vmem:[%s4] sm:$0xf]
        %v2178 = vld [vmem:[%s4 + $0x4] sm:$0xf]
        %v2179 = vld [vmem:[%s4 + $0x8] sm:$0xf]
        %v2180 = vld [vmem:[%s4 + $0xc] sm:$0xf]
        %v2181 = vld [vmem:[%s4 + $0x10] sm:$0xf]
        %v2182 = vld [vmem:[%s4 + $0x14] sm:$0xf]
        %v2183 = vld [vmem:[%s4 + $0x18] sm:$0xf]
        %v2184 = vld [vmem:[%s4 + $0x1c] sm:$0xf]
        %v2185 = vld [vmem:[%s4 + $0x20] sm:$0xf]
        %v2186 = vld [vmem:[%s4 + $0x24] sm:$0xf]
        %v2187 = vld [vmem:[%s4 + $0x28] sm:$0xf]
        %v2188 = vld [vmem:[%s4 + $0x2c] sm:$0xf]
        %v2189 = vld [vmem:[%s4 + $0x30] sm:$0xf]
        %v2190 = vld [vmem:[%s4 + $0x34] sm:$0xf]
        %v2191 = vld [vmem:[%s4 + $0x38] sm:$0xf]
        %v2192 = vld [vmem:[%s4 + $0x3c] sm:$0xf]
        %v2193 = vld [vmem:[%s4 + $0x40] sm:$0xf]
        %v2194 = vld [vmem:[%s4 + $0x44] sm:$0xf]
        %v2195 = vld [vmem:[%s4 + $0x48] sm:$0xf]
        %v2196 = vld [vmem:[%s4 + $0x4c] sm:$0xf]
        %v2197 = vld [vmem:[%s4 + $0x50] sm:$0xf]
        %v2198 = vld [vmem:[%s4 + $0x54] sm:$0xf]
        %v2199 = vld [vmem:[%s4 + $0x58] sm:$0xf]
        %v2200 = vld [vmem:[%s4 + $0x5c] sm:$0xf]
        %v2201 = vld [vmem:[%s4 + $0x60] sm:$0xf]
        %v2202 = vld [vmem:[%s4 + $0x64] sm:$0xf]
        %v2203 = vld [vmem:[%s4 + $0x68] sm:$0xf]
        %v2204 = vld [vmem:[%s4 + $0x6c] sm:$0xf]
        %v2205 = vld [vmem:[%s4 + $0x70] sm:$0xf]
        %v2206 = vld [vmem:[%s4 + $0x74] sm:$0xf]
        %v2207 = vld [vmem:[%s4 + $0x78] sm:$0xf]
        %v2208 = vld [vmem:[%s4 + $0x7c] sm:$0xf]
        %v2209 = vld [vmem:[%s4 + $0x80] sm:$0xf]
        %v2210 = vld [vmem:[%s4 + $0x84] sm:$0xf]
        %v2211 = vld [vmem:[%s4 + $0x88] sm:$0xf]
        %v2212 = vld [vmem:[%s4 + $0x8c] sm:$0xf]
        %v2213 = vld [vmem:[%s4 + $0x90] sm:$0xf]
        %v2214 = vld [vmem:[%s4 + $0x94] sm:$0xf]
        %v2215 = vld [vmem:[%s4 + $0x98] sm:$0xf]
        %v2216 = vld [vmem:[%s4 + $0x9c] sm:$0xf]
        %v2217 = vld [vmem:[%s4 + $0xa0] sm:$0xf]
        %v2218 = vld [vmem:[%s4 + $0xa4] sm:$0xf]
        %v2219 = vld [vmem:[%s4 + $0xa8] sm:$0xf]
        %v2220 = vld [vmem:[%s4 + $0xac] sm:$0xf]
        %v2221 = vld [vmem:[%s4 + $0xb0] sm:$0xf]
        %v2222 = vld [vmem:[%s4 + $0xb4] sm:$0xf]
        %v2223 = vld [vmem:[%s4 + $0xb8] sm:$0xf]
        %v2224 = vld [vmem:[%s4 + $0xbc] sm:$0xf]
        %v2225 = vld [vmem:[%s4 + $0xc0] sm:$0xf]
        %v2226 = vld [vmem:[%s4 + $0xc4] sm:$0xf]
        %v2227 = vld [vmem:[%s4 + $0xc8] sm:$0xf]
        %v2228 = vld [vmem:[%s4 + $0xcc] sm:$0xf]
        %v2229 = vld [vmem:[%s4 + $0xd0] sm:$0xf]
        %v2230 = vld [vmem:[%s4 + $0xd4] sm:$0xf]
        %v2231 = vld [vmem:[%s4 + $0xd8] sm:$0xf]
        %v2232 = vld [vmem:[%s4 + $0xdc] sm:$0xf]
        %v2233 = vld [vmem:[%s4 + $0xe0] sm:$0xf]
        %v2234 = vld [vmem:[%s4 + $0xe4] sm:$0xf]
        %v2235 = vld [vmem:[%s4 + $0xe8] sm:$0xf]
        %v2236 = vld [vmem:[%s4 + $0xec] sm:$0xf]
        %v2237 = vld [vmem:[%s4 + $0xf0] sm:$0xf]
        %v2238 = vld [vmem:[%s4 + $0xf4] sm:$0xf]
        %v2239 = vld [vmem:[%s4 + $0xf8] sm:$0xf]
        %v2240 = vld [vmem:[%s4 + $0xfc] sm:$0xf]
        %v2241 = vld [vmem:[%s4 + $0x100] sm:$0xf]
        %v2242 = vld [vmem:[%s4 + $0x104] sm:$0xf]
        %v2243 = vld [vmem:[%s4 + $0x108] sm:$0xf]
        %v2244 = vld [vmem:[%s4 + $0x10c] sm:$0xf]
        %v2245 = vld [vmem:[%s4 + $0x110] sm:$0xf]
        %v2246 = vld [vmem:[%s4 + $0x114] sm:$0xf]
        %v2247 = vld [vmem:[%s4 + $0x118] sm:$0xf]
        %v2248 = vld [vmem:[%s4 + $0x11c] sm:$0xf]
        %v2249 = vld [vmem:[%s4 + $0x120] sm:$0xf]
        %v2250 = vld [vmem:[%s4 + $0x124] sm:$0xf]
        %v2251 = vld [vmem:[%s4 + $0x128] sm:$0xf]
        %v2252 = vld [vmem:[%s4 + $0x12c] sm:$0xf]
        %v2253 = vld [vmem:[%s4 + $0x130] sm:$0xf]
        %v2254 = vld [vmem:[%s4 + $0x134] sm:$0xf]
        %v2255 = vld [vmem:[%s4 + $0x138] sm:$0xf]
        %v2256 = vld [vmem:[%s4 + $0x13c] sm:$0xf]
        %v2257 = vld [vmem:[%s4 + $0x140] sm:$0xf]
        %v2258 = vld [vmem:[%s4 + $0x144] sm:$0xf]
        %v2259 = vld [vmem:[%s4 + $0x148] sm:$0xf]
        %v2260 = vld [vmem:[%s4 + $0x14c] sm:$0xf]
        %v2261 = vld [vmem:[%s4 + $0x150] sm:$0xf]
        %v2262 = vld [vmem:[%s4 + $0x154] sm:$0xf]
        %v2263 = vld [vmem:[%s4 + $0x158] sm:$0xf]
        %v2264 = vld [vmem:[%s4 + $0x15c] sm:$0xf]
        %v2265 = vld [vmem:[%s4 + $0x160] sm:$0xf]
        %v2266 = vld [vmem:[%s4 + $0x164] sm:$0xf]
        %v2267 = vld [vmem:[%s4 + $0x168] sm:$0xf]
        %v2268 = vld [vmem:[%s4 + $0x16c] sm:$0xf]
        %v2269 = vld [vmem:[%s4 + $0x170] sm:$0xf]
        %v2270 = vld [vmem:[%s4 + $0x174] sm:$0xf]
        %v2271 = vld [vmem:[%s4 + $0x178] sm:$0xf]
        %v2272 = vld [vmem:[%s4 + $0x17c] sm:$0xf]
        %v2273 = vld [vmem:[%s4 + $0x180] sm:$0xf]
        %v2274 = vld [vmem:[%s4 + $0x184] sm:$0xf]
        %v2275 = vld [vmem:[%s4 + $0x188] sm:$0xf]
        %v2276 = vld [vmem:[%s4 + $0x18c] sm:$0xf]
        %v2277 = vld [vmem:[%s4 + $0x190] sm:$0xf]
        %v2278 = vld [vmem:[%s4 + $0x194] sm:$0xf]
        %v2279 = vld [vmem:[%s4 + $0x198] sm:$0xf]
        %v2280 = vld [vmem:[%s4 + $0x19c] sm:$0xf]
        %v2281 = vld [vmem:[%s4 + $0x1a0] sm:$0xf]
        %v2282 = vld [vmem:[%s4 + $0x1a4] sm:$0xf]
        %v2283 = vld [vmem:[%s4 + $0x1a8] sm:$0xf]
        %v2284 = vld [vmem:[%s4 + $0x1ac] sm:$0xf]
        %v2285 = vld [vmem:[%s4 + $0x1b0] sm:$0xf]
        %v2286 = vld [vmem:[%s4 + $0x1b4] sm:$0xf]
        %v2287 = vld [vmem:[%s4 + $0x1b8] sm:$0xf]
        %v2288 = vld [vmem:[%s4 + $0x1bc] sm:$0xf]
        %v2289 = vld [vmem:[%s4 + $0x1c0] sm:$0xf]
        %v2290 = vld [vmem:[%s4 + $0x1c4] sm:$0xf]
        %v2291 = vld [vmem:[%s4 + $0x1c8] sm:$0xf]
        %v2292 = vld [vmem:[%s4 + $0x1cc] sm:$0xf]
        %v2293 = vld [vmem:[%s4 + $0x1d0] sm:$0xf]
        %v2294 = vld [vmem:[%s4 + $0x1d4] sm:$0xf]
        %v2295 = vld [vmem:[%s4 + $0x1d8] sm:$0xf]
        %v2296 = vld [vmem:[%s4 + $0x1dc] sm:$0xf]
        %v2297 = vld [vmem:[%s4 + $0x1e0] sm:$0xf]
        %v2298 = vld [vmem:[%s4 + $0x1e4] sm:$0xf]
        %v2299 = vld [vmem:[%s4 + $0x1e8] sm:$0xf]
        %v2300 = vld [vmem:[%s4 + $0x1ec] sm:$0xf]
        %v2301 = vld [vmem:[%s4 + $0x1f0] sm:$0xf]
        %v2302 = vld [vmem:[%s4 + $0x1f4] sm:$0xf]
        %v2303 = vld [vmem:[%s4 + $0x1f8] sm:$0xf]
        %v2304 = vld [vmem:[%s4 + $0x1fc] sm:$0xf]
        %v2305 = vld [vmem:[%s4 + $0x200] sm:$0xf]
        %v2306 = vld [vmem:[%s4 + $0x204] sm:$0xf]
        %v2307 = vld [vmem:[%s4 + $0x208] sm:$0xf]
        %v2308 = vld [vmem:[%s4 + $0x20c] sm:$0xf]
        %v2309 = vld [vmem:[%s4 + $0x210] sm:$0xf]
        %v2310 = vld [vmem:[%s4 + $0x214] sm:$0xf]
        %v2311 = vld [vmem:[%s4 + $0x218] sm:$0xf]
        %v2312 = vld [vmem:[%s4 + $0x21c] sm:$0xf]
        %v2313 = vld [vmem:[%s4 + $0x220] sm:$0xf]
        %v2314 = vld [vmem:[%s4 + $0x224] sm:$0xf]
        %v2315 = vld [vmem:[%s4 + $0x228] sm:$0xf]
        %v2316 = vld [vmem:[%s4 + $0x22c] sm:$0xf]
        %v2317 = vld [vmem:[%s4 + $0x230] sm:$0xf]
        %v2318 = vld [vmem:[%s4 + $0x234] sm:$0xf]
        %v2319 = vld [vmem:[%s4 + $0x238] sm:$0xf]
        %v2320 = vld [vmem:[%s4 + $0x23c] sm:$0xf]
        %v2465 = vunpack.c.l.b16 %v2177
        %v2466 = vunpack.c.l.b16 %v2178
        %v2467 = vunpack.c.l.b16 %v2179
        %v2468 = vunpack.c.l.b16 %v2180
        %v2469 = vunpack.c.l.b16 %v2181
        %v2470 = vunpack.c.l.b16 %v2182
        %v2471 = vunpack.c.l.b16 %v2183
        %v2472 = vunpack.c.l.b16 %v2184
        %v2473 = vunpack.c.l.b16 %v2185
        %v2474 = vunpack.c.l.b16 %v2186
        %v2475 = vunpack.c.l.b16 %v2187
        %v2476 = vunpack.c.l.b16 %v2188
        %v2477 = vunpack.c.l.b16 %v2189
        %v2478 = vunpack.c.l.b16 %v2190
        %v2479 = vunpack.c.l.b16 %v2191
        %v2480 = vunpack.c.l.b16 %v2192
        %v2481 = vunpack.c.l.b16 %v2193
        %v2482 = vunpack.c.l.b16 %v2194
        %v2483 = vunpack.c.l.b16 %v2195
        %v2484 = vunpack.c.l.b16 %v2196
        %v2485 = vunpack.c.l.b16 %v2197
        %v2486 = vunpack.c.l.b16 %v2198
        %v2487 = vunpack.c.l.b16 %v2199
        %v2488 = vunpack.c.l.b16 %v2200
        %v2489 = vunpack.c.l.b16 %v2201
        %v2490 = vunpack.c.l.b16 %v2202
        %v2491 = vunpack.c.l.b16 %v2203
        %v2492 = vunpack.c.l.b16 %v2204
        %v2493 = vunpack.c.l.b16 %v2205
        %v2494 = vunpack.c.l.b16 %v2206
        %v2495 = vunpack.c.l.b16 %v2207
        %v2496 = vunpack.c.l.b16 %v2208
        %v2497 = vunpack.c.l.b16 %v2209
        %v2498 = vunpack.c.l.b16 %v2210
        %v2499 = vunpack.c.l.b16 %v2211
        %v2500 = vunpack.c.l.b16 %v2212
        %v2501 = vunpack.c.l.b16 %v2213
        %v2502 = vunpack.c.l.b16 %v2214
        %v2503 = vunpack.c.l.b16 %v2215
        %v2504 = vunpack.c.l.b16 %v2216
        %v2505 = vunpack.c.l.b16 %v2217
        %v2506 = vunpack.c.l.b16 %v2218
        %v2507 = vunpack.c.l.b16 %v2219
        %v2508 = vunpack.c.l.b16 %v2220
        %v2509 = vunpack.c.l.b16 %v2221
        %v2510 = vunpack.c.l.b16 %v2222
        %v2511 = vunpack.c.l.b16 %v2223
        %v2512 = vunpack.c.l.b16 %v2224
        %v2513 = vunpack.c.l.b16 %v2225
        %v2514 = vunpack.c.l.b16 %v2226
        %v2515 = vunpack.c.l.b16 %v2227
        %v2516 = vunpack.c.l.b16 %v2228
        %v2517 = vunpack.c.l.b16 %v2229
        %v2518 = vunpack.c.l.b16 %v2230
        %v2519 = vunpack.c.l.b16 %v2231
        %v2520 = vunpack.c.l.b16 %v2232
        %v2521 = vunpack.c.l.b16 %v2233
        %v2522 = vunpack.c.l.b16 %v2234
        %v2523 = vunpack.c.l.b16 %v2235
        %v2524 = vunpack.c.l.b16 %v2236
        %v2525 = vunpack.c.l.b16 %v2237
        %v2526 = vunpack.c.l.b16 %v2238
        %v2527 = vunpack.c.l.b16 %v2239
        %v2528 = vunpack.c.l.b16 %v2240
        %v2529 = vunpack.c.l.b16 %v2241
        %v2530 = vunpack.c.l.b16 %v2242
        %v2531 = vunpack.c.l.b16 %v2243
        %v2532 = vunpack.c.l.b16 %v2244
        %v2533 = vunpack.c.l.b16 %v2245
        %v2534 = vunpack.c.l.b16 %v2246
        %v2535 = vunpack.c.l.b16 %v2247
        %v2536 = vunpack.c.l.b16 %v2248
        %v2537 = vunpack.c.l.b16 %v2249
        %v2538 = vunpack.c.l.b16 %v2250
        %v2539 = vunpack.c.l.b16 %v2251
        %v2540 = vunpack.c.l.b16 %v2252
        %v2541 = vunpack.c.l.b16 %v2253
        %v2542 = vunpack.c.l.b16 %v2254
        %v2543 = vunpack.c.l.b16 %v2255
        %v2544 = vunpack.c.l.b16 %v2256
        %v2545 = vunpack.c.l.b16 %v2257
        %v2546 = vunpack.c.l.b16 %v2258
        %v2547 = vunpack.c.l.b16 %v2259
        %v2548 = vunpack.c.l.b16 %v2260
        %v2549 = vunpack.c.l.b16 %v2261
        %v2550 = vunpack.c.l.b16 %v2262
        %v2551 = vunpack.c.l.b16 %v2263
        %v2552 = vunpack.c.l.b16 %v2264
        %v2553 = vunpack.c.l.b16 %v2265
        %v2554 = vunpack.c.l.b16 %v2266
        %v2555 = vunpack.c.l.b16 %v2267
        %v2556 = vunpack.c.l.b16 %v2268
        %v2557 = vunpack.c.l.b16 %v2269
        %v2558 = vunpack.c.l.b16 %v2270
        %v2559 = vunpack.c.l.b16 %v2271
        %v2560 = vunpack.c.l.b16 %v2272
        %v2561 = vunpack.c.l.b16 %v2273
        %v2562 = vunpack.c.l.b16 %v2274
        %v2563 = vunpack.c.l.b16 %v2275
        %v2564 = vunpack.c.l.b16 %v2276
        %v2565 = vunpack.c.l.b16 %v2277
        %v2566 = vunpack.c.l.b16 %v2278
        %v2567 = vunpack.c.l.b16 %v2279
        %v2568 = vunpack.c.l.b16 %v2280
        %v2569 = vunpack.c.l.b16 %v2281
        %v2570 = vunpack.c.l.b16 %v2282
        %v2571 = vunpack.c.l.b16 %v2283
        %v2572 = vunpack.c.l.b16 %v2284
        %v2573 = vunpack.c.l.b16 %v2285
        %v2574 = vunpack.c.l.b16 %v2286
        %v2575 = vunpack.c.l.b16 %v2287
        %v2576 = vunpack.c.l.b16 %v2288
        %v2577 = vunpack.c.l.b16 %v2289
        %v2578 = vunpack.c.l.b16 %v2290
        %v2579 = vunpack.c.l.b16 %v2291
        %v2580 = vunpack.c.l.b16 %v2292
        %v2581 = vunpack.c.l.b16 %v2293
        %v2582 = vunpack.c.l.b16 %v2294
        %v2583 = vunpack.c.l.b16 %v2295
        %v2584 = vunpack.c.l.b16 %v2296
        %v2585 = vunpack.c.l.b16 %v2297
        %v2586 = vunpack.c.l.b16 %v2298
        %v2587 = vunpack.c.l.b16 %v2299
        %v2588 = vunpack.c.l.b16 %v2300
        %v2589 = vunpack.c.l.b16 %v2301
        %v2590 = vunpack.c.l.b16 %v2302
        %v2591 = vunpack.c.l.b16 %v2303
        %v2592 = vunpack.c.l.b16 %v2304
        %v2593 = vunpack.c.l.b16 %v2305
        %v2594 = vunpack.c.l.b16 %v2306
        %v2595 = vunpack.c.l.b16 %v2307
        %v2596 = vunpack.c.l.b16 %v2308
        %v2597 = vunpack.c.l.b16 %v2309
        %v2598 = vunpack.c.l.b16 %v2310
        %v2599 = vunpack.c.l.b16 %v2311
        %v2600 = vunpack.c.l.b16 %v2312
        %v2601 = vunpack.c.l.b16 %v2313
        %v2602 = vunpack.c.l.b16 %v2314
        %v2603 = vunpack.c.l.b16 %v2315
        %v2604 = vunpack.c.l.b16 %v2316
        %v2605 = vunpack.c.l.b16 %v2317
        %v2606 = vunpack.c.l.b16 %v2318
        %v2607 = vunpack.c.l.b16 %v2319
        %v2608 = vunpack.c.l.b16 %v2320
        %v2609 = vpack.c.b16 %v2466, %v2465
        %v2610 = vpack.c.b16 %v2468, %v2467
        %v2611 = vpack.c.b16 %v2470, %v2469
        %v2612 = vpack.c.b16 %v2472, %v2471
        %v2613 = vpack.c.b16 %v2474, %v2473
        %v2614 = vpack.c.b16 %v2476, %v2475
        %v2615 = vpack.c.b16 %v2478, %v2477
        %v2616 = vpack.c.b16 %v2480, %v2479
        %v2617 = vpack.c.b16 %v2482, %v2481
        %v2618 = vpack.c.b16 %v2484, %v2483
        %v2619 = vpack.c.b16 %v2486, %v2485
        %v2620 = vpack.c.b16 %v2488, %v2487
        %v2621 = vpack.c.b16 %v2490, %v2489
        %v2622 = vpack.c.b16 %v2492, %v2491
        %v2623 = vpack.c.b16 %v2494, %v2493
        %v2624 = vpack.c.b16 %v2496, %v2495
        %v2625 = vpack.c.b16 %v2498, %v2497
        %v2626 = vpack.c.b16 %v2500, %v2499
        %v2627 = vpack.c.b16 %v2502, %v2501
        %v2628 = vpack.c.b16 %v2504, %v2503
        %v2629 = vpack.c.b16 %v2506, %v2505
        %v2630 = vpack.c.b16 %v2508, %v2507
        %v2631 = vpack.c.b16 %v2510, %v2509
        %v2632 = vpack.c.b16 %v2512, %v2511
        %v2633 = vpack.c.b16 %v2514, %v2513
        %v2634 = vpack.c.b16 %v2516, %v2515
        %v2635 = vpack.c.b16 %v2518, %v2517
        %v2636 = vpack.c.b16 %v2520, %v2519
        %v2637 = vpack.c.b16 %v2522, %v2521
        %v2638 = vpack.c.b16 %v2524, %v2523
        %v2639 = vpack.c.b16 %v2526, %v2525
        %v2640 = vpack.c.b16 %v2528, %v2527
        %v2641 = vpack.c.b16 %v2530, %v2529
        %v2642 = vpack.c.b16 %v2532, %v2531
        %v2643 = vpack.c.b16 %v2534, %v2533
        %v2644 = vpack.c.b16 %v2536, %v2535
        %v2645 = vpack.c.b16 %v2538, %v2537
        %v2646 = vpack.c.b16 %v2540, %v2539
        %v2647 = vpack.c.b16 %v2542, %v2541
        %v2648 = vpack.c.b16 %v2544, %v2543
        %v2649 = vpack.c.b16 %v2546, %v2545
        %v2650 = vpack.c.b16 %v2548, %v2547
        %v2651 = vpack.c.b16 %v2550, %v2549
        %v2652 = vpack.c.b16 %v2552, %v2551
        %v2653 = vpack.c.b16 %v2554, %v2553
        %v2654 = vpack.c.b16 %v2556, %v2555
        %v2655 = vpack.c.b16 %v2558, %v2557
        %v2656 = vpack.c.b16 %v2560, %v2559
        %v2657 = vpack.c.b16 %v2562, %v2561
        %v2658 = vpack.c.b16 %v2564, %v2563
        %v2659 = vpack.c.b16 %v2566, %v2565
        %v2660 = vpack.c.b16 %v2568, %v2567
        %v2661 = vpack.c.b16 %v2570, %v2569
        %v2662 = vpack.c.b16 %v2572, %v2571
        %v2663 = vpack.c.b16 %v2574, %v2573
        %v2664 = vpack.c.b16 %v2576, %v2575
        %v2665 = vpack.c.b16 %v2578, %v2577
        %v2666 = vpack.c.b16 %v2580, %v2579
        %v2667 = vpack.c.b16 %v2582, %v2581
        %v2668 = vpack.c.b16 %v2584, %v2583
        %v2669 = vpack.c.b16 %v2586, %v2585
        %v2670 = vpack.c.b16 %v2588, %v2587
        %v2671 = vpack.c.b16 %v2590, %v2589
        %v2672 = vpack.c.b16 %v2592, %v2591
        %v2673 = vpack.c.b16 %v2594, %v2593
        %v2674 = vpack.c.b16 %v2596, %v2595
        %v2675 = vpack.c.b16 %v2598, %v2597
        %v2676 = vpack.c.b16 %v2600, %v2599
        %v2677 = vpack.c.b16 %v2602, %v2601
        %v2678 = vpack.c.b16 %v2604, %v2603
        %v2679 = vpack.c.b16 %v2606, %v2605
        %v2680 = vpack.c.b16 %v2608, %v2607
        %2753 = vmatprep.subr.bf16.mxu0 0
        %2754 = vmatpush1.bf16.msra.mxu0 %v2609
        %2755 = vmatprep.subr.bf16.mxu0 0
        %2756 = vmatpush1.bf16.msra.mxu0 %v2610
        %2757 = vmatprep.subr.bf16.mxu0 0
        %2758 = vmatpush1.bf16.msra.mxu0 %v2611
        %2759 = vmatprep.subr.bf16.mxu0 0
        %2760 = vmatpush1.bf16.msra.mxu0 %v2612
        %2761 = vmatprep.subr.bf16.mxu0 0
        %2762 = vmatpush1.bf16.msra.mxu0 %v2613
        %2763 = vmatprep.subr.bf16.mxu0 0
        %2764 = vmatpush1.bf16.msra.mxu0 %v2614
        %2765 = vmatprep.subr.bf16.mxu0 0
        %2766 = vmatpush1.bf16.msra.mxu0 %v2615
        %2767 = vmatprep.subr.bf16.mxu0 0
        %2768 = vmatpush1.bf16.msra.mxu0 %v2616
        %2769 = vmatprep.subr.bf16.mxu0 0
        %2770 = vmatpush1.bf16.msra.mxu0 %v2617
        %2771 = vmatprep.subr.bf16.mxu0 0
        %2772 = vmatpush1.bf16.msra.mxu0 %v2618
        %2773 = vmatprep.subr.bf16.mxu0 0
        %2774 = vmatpush1.bf16.msra.mxu0 %v2619
        %2775 = vmatprep.subr.bf16.mxu0 0
        %2776 = vmatpush1.bf16.msra.mxu0 %v2620
        %2777 = vmatprep.subr.bf16.mxu0 0
        %2778 = vmatpush1.bf16.msra.mxu0 %v2621
        %2779 = vmatprep.subr.bf16.mxu0 0
        %2780 = vmatpush1.bf16.msra.mxu0 %v2622
        %2781 = vmatprep.subr.bf16.mxu0 0
        %2782 = vmatpush1.bf16.msra.mxu0 %v2623
        %2783 = vmatprep.subr.bf16.mxu0 0
        %2784 = vmatpush1.bf16.msra.mxu0 %v2624
        %2785 = vmatprep.mubr.bf16.mxu0 %v1812
        %2786 = vmatmul.mubr.bf16.gmra.mrb[0].mxu0 %v1769
        %v2787 = vpop.f32.mrb[0].mxu0
        %v2788 = vadd.f32 0.0, %v2787
        %v2789 = vpop.f32.mrb[0].mxu0
        %v2790 = vpop.f32.mrb[0].mxu0
        %v2791 = vadd.f32 0.0, %v2790
        %v2792 = vpop.f32.mrb[0].mxu0
        %2793 = vmatprep.mubr.bf16.mxu0 %v1824
        %2794 = vmatmul.mubr.bf16.gmra.mrb[0].mxu0 %v1770
        %v2795 = vpop.f32.mrb[0].mxu0
        %v2796 = vadd.f32 0.0, %v2795
        %v2797 = vpop.f32.mrb[0].mxu0
        %v2798 = vpop.f32.mrb[0].mxu0
        %v2799 = vadd.f32 0.0, %v2798
        %v2800 = vpop.f32.mrb[0].mxu0
        %2801 = vmatprep.mubr.bf16.mxu0 %v1812
        %2802 = vmatmul.mubr.bf16.gmra.mrb[0].mxu0 %v1769
        %v2803 = vpop.f32.mrb[0].mxu0
        %v2804 = vadd.f32 0.0, %v2803
        %v2805 = vpop.f32.mrb[0].mxu0
        %v2806 = vpop.f32.mrb[0].mxu0
        %v2807 = vadd.f32 0.0, %v2806
        %v2808 = vpop.f32.mrb[0].mxu0
        %2809 = vmatprep.mubr.bf16.mxu0 %v1836
        %2810 = vmatmul.mubr.bf16.gmra.mrb[0].mxu0 %v1771
        %v2811 = vpop.f32.mrb[0].mxu0
        %v2812 = vadd.f32 0.0, %v2811
        %v2813 = vpop.f32.mrb[0].mxu0
        %v2814 = vpop.f32.mrb[0].mxu0
        %v2815 = vadd.f32 0.0, %v2814
        %v2816 = vpop.f32.mrb[0].mxu0
        %2817 = vmatprep.mubr.bf16.mxu0 %v1848
        %2818 = vmatmul.mubr.bf16.gmra.mrb[0].mxu0 %v1772
        %v2819 = vpop.f32.mrb[0].mxu0
        %v2820 = vadd.f32 0.0, %v2819
        %v2821 = vpop.f32.mrb[0].mxu0
        %v2822 = vpop.f32.mrb[0].mxu0
        %v2823 = vadd.f32 0.0, %v2822
        %v2824 = vpop.f32.mrb[0].mxu0
        %2825 = vmatprep.mubr.bf16.mxu0 %v1860
        %2826 = vmatmul.mubr.bf16.gmra.mrb[0].mxu0 %v1773
        %v2827 = vpop.f32.mrb[0].mxu0
        %v2828 = vadd.f32 0.0, %v2827
        %v2829 = vpop.f32.mrb[0].mxu0
        %v2830 = vpop.f32.mrb[0].mxu0
        %v2831 = vadd.f32 0.0, %v2830
        %v2832 = vpop.f32.mrb[0].mxu0
        %2833 = vmatprep.mubr.bf16.mxu0 %v1872
        %2834 = vmatmul.mubr.bf16.gmra.mrb[0].mxu0 %v1774
        %v2835 = vpop.f32.mrb[0].mxu0
        %v2836 = vadd.f32 0.0, %v2835
        %v2837 = vpop.f32.mrb[0].mxu0
        %v2838 = vpop.f32.mrb[0].mxu0
        %v2839 = vadd.f32 0.0, %v2838
        %v2840 = vpop.f32.mrb[0].mxu0
        %2841 = vmatprep.mubr.bf16.mxu0 %v1884
        %2842 = vmatmul.mubr.bf16.gmra.mrb[0].mxu0 %v1775
        %v2843 = vpop.f32.mrb[0].mxu0
        %v2844 = vadd.f32 0.0, %v2843
        %v2845 = vpop.f32.mrb[0].mxu0
        %v2846 = vpop.f32.mrb[0].mxu0
        %v2847 = vadd.f32 0.0, %v2846
        %v2848 = vpop.f32.mrb[0].mxu0
        %2849 = vmatprep.mubr.bf16.mxu0 %v1896
        %2850 = vmatmul.mubr.bf16.gmra.mrb[0].mxu0 %v1776
        %v2851 = vpop.f32.mrb[0].mxu0
        %v2852 = vadd.f32 0.0, %v2851
        %v2853 = vpop.f32.mrb[0].mxu0
        %v2854 = vpop.f32.mrb[0].mxu0
        %v2855 = vadd.f32 0.0, %v2854
        %v2856 = vpop.f32.mrb[0].mxu0
        %2857 = vmatprep.mubr.bf16.mxu0 %v1908
        %2858 = vmatmul.mubr.bf16.gmra.mrb[0].mxu0 %v1777
        %v2859 = vpop.f32.mrb[0].mxu0
        %v2860 = vadd.f32 0.0, %v2859
        %v2861 = vpop.f32.mrb[0].mxu0
        %v2862 = vpop.f32.mrb[0].mxu0
        %v2863 = vadd.f32 0.0, %v2862
        %v2864 = vpop.f32.mrb[0].mxu0
        %2865 = vmatprep.mubr.bf16.mxu0 %v1920
        %2866 = vmatmul.mubr.bf16.gmra.mrb[0].mxu0 %v1778
        %v2867 = vpop.f32.mrb[0].mxu0
        %v2868 = vadd.f32 0.0, %v2867
        %v2869 = vpop.f32.mrb[0].mxu0
        %v2870 = vpop.f32.mrb[0].mxu0
        %v2871 = vadd.f32 0.0, %v2870
        %v2872 = vpop.f32.mrb[0].mxu0
        %2873 = vmatprep.mubr.bf16.mxu0 %v1932
        %2874 = vmatmul.mubr.bf16.gmra.mrb[0].mxu0 %v1779
        %v2875 = vpop.f32.mrb[0].mxu0
        %v2876 = vadd.f32 0.0, %v2875
        %v2877 = vpop.f32.mrb[0].mxu0
        %v2878 = vpop.f32.mrb[0].mxu0
        %v2879 = vadd.f32 0.0, %v2878
        %v2880 = vpop.f32.mrb[0].mxu0
        %2881 = vmatprep.mubr.bf16.mxu0 %v1944
        %2882 = vmatmul.mubr.bf16.gmra.mrb[0].mxu0 %v1780
        %v2883 = vpop.f32.mrb[0].mxu0
        %v2884 = vadd.f32 0.0, %v2883
        %v2885 = vpop.f32.mrb[0].mxu0
        %v2886 = vpop.f32.mrb[0].mxu0
        %v2887 = vadd.f32 0.0, %v2886
        %v2888 = vpop.f32.mrb[0].mxu0
        %2889 = vmatprep.mubr.bf16.mxu0 %v1956
        %2890 = vmatmul.mubr.bf16.gmra.mrb[0].mxu0 %v1781
        %v2891 = vpop.f32.mrb[0].mxu0
        %v2892 = vadd.f32 0.0, %v2891
        %v2893 = vpop.f32.mrb[0].mxu0
        %v2894 = vpop.f32.mrb[0].mxu0
        %v2895 = vadd.f32 0.0, %v2894
        %v2896 = vpop.f32.mrb[0].mxu0
        %2897 = vmatprep.mubr.bf16.mxu0 %v1968
        %2898 = vmatmul.mubr.bf16.gmra.mrb[0].mxu0 %v1782
        %v2899 = vpop.f32.mrb[0].mxu0
        %v2900 = vadd.f32 0.0, %v2899
        %v2901 = vpop.f32.mrb[0].mxu0
        %v2902 = vpop.f32.mrb[0].mxu0
        %v2903 = vadd.f32 0.0, %v2902
        %v2904 = vpop.f32.mrb[0].mxu0
        %2905 = vmatprep.mubr.bf16.mxu0 %v1980
        %2906 = vmatmul.mubr.bf16.gmra.mrb[0].mxu0 %v1783
        %v2907 = vpop.f32.mrb[0].mxu0
        %v2908 = vadd.f32 0.0, %v2907
        %v2909 = vpop.f32.mrb[0].mxu0
        %v2910 = vpop.f32.mrb[0].mxu0
        %v2911 = vadd.f32 0.0, %v2910
        %v2912 = vpop.f32.mrb[0].mxu0
        %2913 = vdwg.mxu0
        %2914 = vmatprep.subr.bf16.mxu0 0
        %2915 = vmatpush1.bf16.msra.mxu0 %v2625
        %2916 = vmatprep.subr.bf16.mxu0 0
        %2917 = vmatpush1.bf16.msra.mxu0 %v2626
        %2918 = vmatprep.subr.bf16.mxu0 0
        %2919 = vmatpush1.bf16.msra.mxu0 %v2627
        %2920 = vmatprep.subr.bf16.mxu0 0
        %2921 = vmatpush1.bf16.msra.mxu0 %v2628
        %2922 = vmatprep.subr.bf16.mxu0 0
        %2923 = vmatpush1.bf16.msra.mxu0 %v2629
        %2924 = vmatprep.subr.bf16.mxu0 0
        %2925 = vmatpush1.bf16.msra.mxu0 %v2630
        %2926 = vmatprep.subr.bf16.mxu0 0
        %2927 = vmatpush1.bf16.msra.mxu0 %v2631
        %2928 = vmatprep.subr.bf16.mxu0 0
        %2929 = vmatpush1.bf16.msra.mxu0 %v2632
        %2930 = vmatprep.subr.bf16.mxu0 0
        %2931 = vmatpush1.bf16.msra.mxu0 %v2633
        %2932 = vmatprep.subr.bf16.mxu0 0
        %2933 = vmatpush1.bf16.msra.mxu0 %v2634
        %2934 = vmatprep.subr.bf16.mxu0 0
        %2935 = vmatpush1.bf16.msra.mxu0 %v2635
        %2936 = vmatprep.subr.bf16.mxu0 0
        %2937 = vmatpush1.bf16.msra.mxu0 %v2636
        %2938 = vmatprep.subr.bf16.mxu0 0
        %2939 = vmatpush1.bf16.msra.mxu0 %v2637
        %2940 = vmatprep.subr.bf16.mxu0 0
        %2941 = vmatpush1.bf16.msra.mxu0 %v2638
        %2942 = vmatprep.subr.bf16.mxu0 0
        %2943 = vmatpush1.bf16.msra.mxu0 %v2639
        %2944 = vmatprep.subr.bf16.mxu0 0
        %2945 = vmatpush1.bf16.msra.mxu0 %v2640
        %2946 = vmatprep.mubr.bf16.mxu0 %v1770
        %2947 = vmatmul.mubr.bf16.gmra.mrb[0].mxu0 %v2028
        %v2948 = vpop.f32.mrb[0].mxu0
        %v2949 = vadd.f32 %v2788, %v2948
        %v2950 = vpop.f32.mrb[0].mxu0
        %v2951 = vpop.f32.mrb[0].mxu0
        %v2952 = vadd.f32 %v2791, %v2951
        %v2953 = vpop.f32.mrb[0].mxu0
        %2954 = vmatprep.mubr.bf16.mxu0 %v1769
        %2955 = vmatmul.mubr.bf16.gmra.mrb[0].mxu0 %v2031
        %v2956 = vpop.f32.mrb[0].mxu0
        %v2957 = vadd.f32 %v2796, %v2956
        %v2958 = vpop.f32.mrb[0].mxu0
        %v2959 = vpop.f32.mrb[0].mxu0
        %v2960 = vadd.f32 %v2799, %v2959
        %v2961 = vpop.f32.mrb[0].mxu0
        %2962 = vmatprep.mubr.bf16.mxu0 %v1771
        %2963 = vmatmul.mubr.bf16.gmra.mrb[0].mxu0 %v2028
        %v2964 = vpop.f32.mrb[0].mxu0
        %v2965 = vadd.f32 %v2804, %v2964
        %v2966 = vpop.f32.mrb[0].mxu0
        %v2967 = vpop.f32.mrb[0].mxu0
        %v2968 = vadd.f32 %v2807, %v2967
        %v2969 = vpop.f32.mrb[0].mxu0
        %2970 = vmatprep.mubr.bf16.mxu0 %v1772
        %2971 = vmatmul.mubr.bf16.gmra.mrb[0].mxu0 %v2034
        %v2972 = vpop.f32.mrb[0].mxu0
        %v2973 = vadd.f32 %v2812, %v2972
        %v2974 = vpop.f32.mrb[0].mxu0
        %v2975 = vpop.f32.mrb[0].mxu0
        %v2976 = vadd.f32 %v2815, %v2975
        %v2977 = vpop.f32.mrb[0].mxu0
        %2978 = vmatprep.mubr.bf16.mxu0 %v1773
        %2979 = vmatmul.mubr.bf16.gmra.mrb[0].mxu0 %v2037
        %v2980 = vpop.f32.mrb[0].mxu0
        %v2981 = vadd.f32 %v2820, %v2980
        %v2982 = vpop.f32.mrb[0].mxu0
        %v2983 = vpop.f32.mrb[0].mxu0
        %v2984 = vadd.f32 %v2823, %v2983
        %v2985 = vpop.f32.mrb[0].mxu0
        %2986 = vmatprep.mubr.bf16.mxu0 %v1774
        %2987 = vmatmul.mubr.bf16.gmra.mrb[0].mxu0 %v2040
        %v2988 = vpop.f32.mrb[0].mxu0
        %v2989 = vadd.f32 %v2828, %v2988
        %v2990 = vpop.f32.mrb[0].mxu0
        %v2991 = vpop.f32.mrb[0].mxu0
        %v2992 = vadd.f32 %v2831, %v2991
        %v2993 = vpop.f32.mrb[0].mxu0
        %2994 = vmatprep.mubr.bf16.mxu0 %v1775
        %2995 = vmatmul.mubr.bf16.gmra.mrb[0].mxu0 %v2043
        %v2996 = vpop.f32.mrb[0].mxu0
        %v2997 = vadd.f32 %v2836, %v2996
        %v2998 = vpop.f32.mrb[0].mxu0
        %v2999 = vpop.f32.mrb[0].mxu0
        %v3000 = vadd.f32 %v2839, %v2999
        %v3001 = vpop.f32.mrb[0].mxu0
        %3002 = vmatprep.mubr.bf16.mxu0 %v1776
        %3003 = vmatmul.mubr.bf16.gmra.mrb[0].mxu0 %v2046
        %v3004 = vpop.f32.mrb[0].mxu0
        %v3005 = vadd.f32 %v2844, %v3004
        %v3006 = vpop.f32.mrb[0].mxu0
        %v3007 = vpop.f32.mrb[0].mxu0
        %v3008 = vadd.f32 %v2847, %v3007
        %v3009 = vpop.f32.mrb[0].mxu0
        %3010 = vmatprep.mubr.bf16.mxu0 %v1777
        %3011 = vmatmul.mubr.bf16.gmra.mrb[0].mxu0 %v2049
        %v3012 = vpop.f32.mrb[0].mxu0
        %v3013 = vadd.f32 %v2852, %v3012
        %v3014 = vpop.f32.mrb[0].mxu0
        %v3015 = vpop.f32.mrb[0].mxu0
        %v3016 = vadd.f32 %v2855, %v3015
        %v3017 = vpop.f32.mrb[0].mxu0
        %3018 = vmatprep.mubr.bf16.mxu0 %v1778
        %3019 = vmatmul.mubr.bf16.gmra.mrb[0].mxu0 %v2052
        %v3020 = vpop.f32.mrb[0].mxu0
        %v3021 = vadd.f32 %v2860, %v3020
        %v3022 = vpop.f32.mrb[0].mxu0
        %v3023 = vpop.f32.mrb[0].mxu0
        %v3024 = vadd.f32 %v2863, %v3023
        %v3025 = vpop.f32.mrb[0].mxu0
        %3026 = vmatprep.mubr.bf16.mxu0 %v1779
        %3027 = vmatmul.mubr.bf16.gmra.mrb[0].mxu0 %v2055
        %v3028 = vpop.f32.mrb[0].mxu0
        %v3029 = vadd.f32 %v2868, %v3028
        %v3030 = vpop.f32.mrb[0].mxu0
        %v3031 = vpop.f32.mrb[0].mxu0
        %v3032 = vadd.f32 %v2871, %v3031
        %v3033 = vpop.f32.mrb[0].mxu0
        %3034 = vmatprep.mubr.bf16.mxu0 %v1780
        %3035 = vmatmul.mubr.bf16.gmra.mrb[0].mxu0 %v2058
        %v3036 = vpop.f32.mrb[0].mxu0
        %v3037 = vadd.f32 %v2876, %v3036
        %v3038 = vpop.f32.mrb[0].mxu0
        %v3039 = vpop.f32.mrb[0].mxu0
        %v3040 = vadd.f32 %v2879, %v3039
        %v3041 = vpop.f32.mrb[0].mxu0
        %3042 = vmatprep.mubr.bf16.mxu0 %v1781
        %3043 = vmatmul.mubr.bf16.gmra.mrb[0].mxu0 %v2061
        %v3044 = vpop.f32.mrb[0].mxu0
        %v3045 = vadd.f32 %v2884, %v3044
        %v3046 = vpop.f32.mrb[0].mxu0
        %v3047 = vpop.f32.mrb[0].mxu0
        %v3048 = vadd.f32 %v2887, %v3047
        %v3049 = vpop.f32.mrb[0].mxu0
        %3050 = vmatprep.mubr.bf16.mxu0 %v1782
        %3051 = vmatmul.mubr.bf16.gmra.mrb[0].mxu0 %v2064
        %v3052 = vpop.f32.mrb[0].mxu0
        %v3053 = vadd.f32 %v2892, %v3052
        %v3054 = vpop.f32.mrb[0].mxu0
        %v3055 = vpop.f32.mrb[0].mxu0
        %v3056 = vadd.f32 %v2895, %v3055
        %v3057 = vpop.f32.mrb[0].mxu0
        %3058 = vmatprep.mubr.bf16.mxu0 %v1783
        %3059 = vmatmul.mubr.bf16.gmra.mrb[0].mxu0 %v2067
        %v3060 = vpop.f32.mrb[0].mxu0
        %v3061 = vadd.f32 %v2900, %v3060
        %v3062 = vpop.f32.mrb[0].mxu0
        %v3063 = vpop.f32.mrb[0].mxu0
        %v3064 = vadd.f32 %v2903, %v3063
        %v3065 = vpop.f32.mrb[0].mxu0
        %3066 = vmatprep.mubr.bf16.mxu0 %v1784
        %3067 = vmatmul.mubr.bf16.gmra.mrb[0].mxu0 %v2070
        %v3068 = vpop.f32.mrb[0].mxu0
        %v3069 = vadd.f32 %v2908, %v3068
        %v3070 = vpop.f32.mrb[0].mxu0
        %v3071 = vpop.f32.mrb[0].mxu0
        %v3072 = vadd.f32 %v2911, %v3071
        %v3073 = vpop.f32.mrb[0].mxu0
        %3074 = vdwg.mxu0
        %3075 = vmatprep.subr.bf16.mxu0 0
        %3076 = vmatpush1.bf16.msra.mxu0 %v2641
        %3077 = vmatprep.subr.bf16.mxu0 0
        %3078 = vmatpush1.bf16.msra.mxu0 %v2642
        %3079 = vmatprep.subr.bf16.mxu0 0
        %3080 = vmatpush1.bf16.msra.mxu0 %v2643
        %3081 = vmatprep.subr.bf16.mxu0 0
        %3082 = vmatpush1.bf16.msra.mxu0 %v2644
        %3083 = vmatprep.subr.bf16.mxu0 0
        %3084 = vmatpush1.bf16.msra.mxu0 %v2645
        %3085 = vmatprep.subr.bf16.mxu0 0
        %3086 = vmatpush1.bf16.msra.mxu0 %v2646
        %3087 = vmatprep.subr.bf16.mxu0 0
        %3088 = vmatpush1.bf16.msra.mxu0 %v2647
        %3089 = vmatprep.subr.bf16.mxu0 0
        %3090 = vmatpush1.bf16.msra.mxu0 %v2648
        %3091 = vmatprep.subr.bf16.mxu0 0
        %3092 = vmatpush1.bf16.msra.mxu0 %v2649
        %3093 = vmatprep.subr.bf16.mxu0 0
        %3094 = vmatpush1.bf16.msra.mxu0 %v2650
        %3095 = vmatprep.subr.bf16.mxu0 0
        %3096 = vmatpush1.bf16.msra.mxu0 %v2651
        %3097 = vmatprep.subr.bf16.mxu0 0
        %3098 = vmatpush1.bf16.msra.mxu0 %v2652
        %3099 = vmatprep.subr.bf16.mxu0 0
        %3100 = vmatpush1.bf16.msra.mxu0 %v2653
        %3101 = vmatprep.subr.bf16.mxu0 0
        %3102 = vmatpush1.bf16.msra.mxu0 %v2654
        %3103 = vmatprep.subr.bf16.mxu0 0
        %3104 = vmatpush1.bf16.msra.mxu0 %v2655
        %3105 = vmatprep.subr.bf16.mxu0 0
        %3106 = vmatpush1.bf16.msra.mxu0 %v2656
        %3107 = vmatprep.mubr.bf16.mxu0 %v2031
        %3108 = vmatmul.mubr.bf16.gmra.mrb[0].mxu0 %v1824
        %v3109 = vpop.f32.mrb[0].mxu0
        %v3110 = vadd.f32 %v2949, %v3109
        %v3111 = vpop.f32.mrb[0].mxu0
        %v3112 = vpop.f32.mrb[0].mxu0
        %v3113 = vadd.f32 %v2952, %v3112
        %v3114 = vpop.f32.mrb[0].mxu0
        %3115 = vmatprep.mubr.bf16.mxu0 %v2028
        %3116 = vmatmul.mubr.bf16.gmra.mrb[0].mxu0 %v1812
        %v3117 = vpop.f32.mrb[0].mxu0
        %v3118 = vadd.f32 %v2957, %v3117
        %v3119 = vpop.f32.mrb[0].mxu0
        %v3120 = vpop.f32.mrb[0].mxu0
        %v3121 = vadd.f32 %v2960, %v3120
        %v3122 = vpop.f32.mrb[0].mxu0
        %3123 = vmatprep.mubr.bf16.mxu0 %v2034
        %3124 = vmatmul.mubr.bf16.gmra.mrb[0].mxu0 %v1836
        %v3125 = vpop.f32.mrb[0].mxu0
        %v3126 = vadd.f32 %v2965, %v3125
        %v3127 = vpop.f32.mrb[0].mxu0
        %v3128 = vpop.f32.mrb[0].mxu0
        %v3129 = vadd.f32 %v2968, %v3128
        %v3130 = vpop.f32.mrb[0].mxu0
        %3131 = vmatprep.mubr.bf16.mxu0 %v2037
        %3132 = vmatmul.mubr.bf16.gmra.mrb[0].mxu0 %v1848
        %v3133 = vpop.f32.mrb[0].mxu0
        %v3134 = vadd.f32 %v2973, %v3133
        %v3135 = vpop.f32.mrb[0].mxu0
        %v3136 = vpop.f32.mrb[0].mxu0
        %v3137 = vadd.f32 %v2976, %v3136
        %v3138 = vpop.f32.mrb[0].mxu0
        %3139 = vmatprep.mubr.bf16.mxu0 %v2040
        %3140 = vmatmul.mubr.bf16.gmra.mrb[0].mxu0 %v1860
        %v3141 = vpop.f32.mrb[0].mxu0
        %v3142 = vadd.f32 %v2981, %v3141
        %v3143 = vpop.f32.mrb[0].mxu0
        %v3144 = vpop.f32.mrb[0].mxu0
        %v3145 = vadd.f32 %v2984, %v3144
        %v3146 = vpop.f32.mrb[0].mxu0
        %3147 = vmatprep.mubr.bf16.mxu0 %v2043
        %3148 = vmatmul.mubr.bf16.gmra.mrb[0].mxu0 %v1872
        %v3149 = vpop.f32.mrb[0].mxu0
        %v3150 = vadd.f32 %v2989, %v3149
        %v3151 = vpop.f32.mrb[0].mxu0
        %v3152 = vpop.f32.mrb[0].mxu0
        %v3153 = vadd.f32 %v2992, %v3152
        %v3154 = vpop.f32.mrb[0].mxu0
        %3155 = vmatprep.mubr.bf16.mxu0 %v2046
        %3156 = vmatmul.mubr.bf16.gmra.mrb[0].mxu0 %v1884
        %v3157 = vpop.f32.mrb[0].mxu0
        %v3158 = vadd.f32 %v2997, %v3157
        %v3159 = vpop.f32.mrb[0].mxu0
        %v3160 = vpop.f32.mrb[0].mxu0
        %v3161 = vadd.f32 %v3000, %v3160
        %v3162 = vpop.f32.mrb[0].mxu0
        %3163 = vmatprep.mubr.bf16.mxu0 %v2049
        %3164 = vmatmul.mubr.bf16.gmra.mrb[0].mxu0 %v1896
        %v3165 = vpop.f32.mrb[0].mxu0
        %v3166 = vadd.f32 %v3005, %v3165
        %v3167 = vpop.f32.mrb[0].mxu0
        %v3168 = vpop.f32.mrb[0].mxu0
        %v3169 = vadd.f32 %v3008, %v3168
        %v3170 = vpop.f32.mrb[0].mxu0
        %3171 = vmatprep.mubr.bf16.mxu0 %v2052
        %3172 = vmatmul.mubr.bf16.gmra.mrb[0].mxu0 %v1908
        %v3173 = vpop.f32.mrb[0].mxu0
        %v3174 = vadd.f32 %v3013, %v3173
        %v3175 = vpop.f32.mrb[0].mxu0
        %v3176 = vpop.f32.mrb[0].mxu0
        %v3177 = vadd.f32 %v3016, %v3176
        %v3178 = vpop.f32.mrb[0].mxu0
        %3179 = vmatprep.mubr.bf16.mxu0 %v2055
        %3180 = vmatmul.mubr.bf16.gmra.mrb[0].mxu0 %v1920
        %v3181 = vpop.f32.mrb[0].mxu0
        %v3182 = vadd.f32 %v3021, %v3181
        %v3183 = vpop.f32.mrb[0].mxu0
        %v3184 = vpop.f32.mrb[0].mxu0
        %v3185 = vadd.f32 %v3024, %v3184
        %v3186 = vpop.f32.mrb[0].mxu0
        %3187 = vmatprep.mubr.bf16.mxu0 %v2058
        %3188 = vmatmul.mubr.bf16.gmra.mrb[0].mxu0 %v1932
        %v3189 = vpop.f32.mrb[0].mxu0
        %v3190 = vadd.f32 %v3029, %v3189
        %v3191 = vpop.f32.mrb[0].mxu0
        %v3192 = vpop.f32.mrb[0].mxu0
        %v3193 = vadd.f32 %v3032, %v3192
        %v3194 = vpop.f32.mrb[0].mxu0
        %3195 = vmatprep.mubr.bf16.mxu0 %v2061
        %3196 = vmatmul.mubr.bf16.gmra.mrb[0].mxu0 %v1944
        %v3197 = vpop.f32.mrb[0].mxu0
        %v3198 = vadd.f32 %v3037, %v3197
        %v3199 = vpop.f32.mrb[0].mxu0
        %v3200 = vpop.f32.mrb[0].mxu0
        %v3201 = vadd.f32 %v3040, %v3200
        %v3202 = vpop.f32.mrb[0].mxu0
        %3203 = vmatprep.mubr.bf16.mxu0 %v2064
        %3204 = vmatmul.mubr.bf16.gmra.mrb[0].mxu0 %v1956
        %v3205 = vpop.f32.mrb[0].mxu0
        %v3206 = vadd.f32 %v3045, %v3205
        %v3207 = vpop.f32.mrb[0].mxu0
        %v3208 = vpop.f32.mrb[0].mxu0
        %v3209 = vadd.f32 %v3048, %v3208
        %v3210 = vpop.f32.mrb[0].mxu0
        %3211 = vmatprep.mubr.bf16.mxu0 %v2067
        %3212 = vmatmul.mubr.bf16.gmra.mrb[0].mxu0 %v1968
        %v3213 = vpop.f32.mrb[0].mxu0
        %v3214 = vadd.f32 %v3053, %v3213
        %v3215 = vpop.f32.mrb[0].mxu0
        %v3216 = vpop.f32.mrb[0].mxu0
        %v3217 = vadd.f32 %v3056, %v3216
        %v3218 = vpop.f32.mrb[0].mxu0
        %3219 = vmatprep.mubr.bf16.mxu0 %v2070
        %3220 = vmatmul.mubr.bf16.gmra.mrb[0].mxu0 %v1980
        %v3221 = vpop.f32.mrb[0].mxu0
        %v3222 = vadd.f32 %v3061, %v3221
        %v3223 = vpop.f32.mrb[0].mxu0
        %v3224 = vpop.f32.mrb[0].mxu0
        %v3225 = vadd.f32 %v3064, %v3224
        %v3226 = vpop.f32.mrb[0].mxu0
        %3227 = vmatprep.mubr.bf16.mxu0 %v2103
        %3228 = vmatmul.mubr.bf16.gmra.mrb[0].mxu0 %v2097
        %v3229 = vpop.f32.mrb[0].mxu0
        %v3230 = vadd.f32 %v3069, %v3229
        %v3231 = vpop.f32.mrb[0].mxu0
        %v3232 = vpop.f32.mrb[0].mxu0
        %v3233 = vadd.f32 %v3072, %v3232
        %v3234 = vpop.f32.mrb[0].mxu0
        %3235 = vdwg.mxu0
        %3236 = vmatprep.subr.bf16.mxu0 0
        %3237 = vmatpush1.bf16.msra.mxu0 %v2657
        %3238 = vmatprep.subr.bf16.mxu0 0
        %3239 = vmatpush1.bf16.msra.mxu0 %v2658
        %3240 = vmatprep.subr.bf16.mxu0 0
        %3241 = vmatpush1.bf16.msra.mxu0 %v2659
        %3242 = vmatprep.subr.bf16.mxu0 0
        %3243 = vmatpush1.bf16.msra.mxu0 %v2660
        %3244 = vmatprep.subr.bf16.mxu0 0
        %3245 = vmatpush1.bf16.msra.mxu0 %v2661
        %3246 = vmatprep.subr.bf16.mxu0 0
        %3247 = vmatpush1.bf16.msra.mxu0 %v2662
        %3248 = vmatprep.subr.bf16.mxu0 0
        %3249 = vmatpush1.bf16.msra.mxu0 %v2663
        %3250 = vmatprep.subr.bf16.mxu0 0
        %3251 = vmatpush1.bf16.msra.mxu0 %v2664
        %3252 = vmatprep.subr.bf16.mxu0 0
        %3253 = vmatpush1.bf16.msra.mxu0 %v2665
        %3254 = vmatprep.subr.bf16.mxu0 0
        %3255 = vmatpush1.bf16.msra.mxu0 %v2666
        %3256 = vmatprep.subr.bf16.mxu0 0
        %3257 = vmatpush1.bf16.msra.mxu0 %v2667
        %3258 = vmatprep.subr.bf16.mxu0 0
        %3259 = vmatpush1.bf16.msra.mxu0 %v2668
        %3260 = vmatprep.subr.bf16.mxu0 0
        %3261 = vmatpush1.bf16.msra.mxu0 %v2669
        %3262 = vmatprep.subr.bf16.mxu0 0
        %3263 = vmatpush1.bf16.msra.mxu0 %v2670
        %3264 = vmatprep.subr.bf16.mxu0 0
        %3265 = vmatpush1.bf16.msra.mxu0 %v2671
        %3266 = vmatprep.subr.bf16.mxu0 0
        %3267 = vmatpush1.bf16.msra.mxu0 %v2672
        %3268 = vmatprep.mubr.bf16.mxu0 %v1812
        %3269 = vmatmul.mubr.bf16.gmra.mrb[0].mxu0 %v1769
        %v3270 = vpop.f32.mrb[0].mxu0
        %v3271 = vadd.f32 %v3110, %v3270
        %v3272 = vpop.f32.mrb[0].mxu0
        %v3273 = vpop.f32.mrb[0].mxu0
        %v3274 = vadd.f32 %v3113, %v3273
        %v3275 = vpop.f32.mrb[0].mxu0
        %3276 = vmatprep.mubr.bf16.mxu0 %v1836
        %3277 = vmatmul.mubr.bf16.gmra.mrb[0].mxu0 %v1771
        %v3278 = vpop.f32.mrb[0].mxu0
        %v3279 = vadd.f32 %v3118, %v3278
        %v3280 = vpop.f32.mrb[0].mxu0
        %v3281 = vpop.f32.mrb[0].mxu0
        %v3282 = vadd.f32 %v3121, %v3281
        %v3283 = vpop.f32.mrb[0].mxu0
        %3284 = vmatprep.mubr.bf16.mxu0 %v1848
        %3285 = vmatmul.mubr.bf16.gmra.mrb[0].mxu0 %v1772
        %v3286 = vpop.f32.mrb[0].mxu0
        %v3287 = vadd.f32 %v3126, %v3286
        %v3288 = vpop.f32.mrb[0].mxu0
        %v3289 = vpop.f32.mrb[0].mxu0
        %v3290 = vadd.f32 %v3129, %v3289
        %v3291 = vpop.f32.mrb[0].mxu0
        %3292 = vmatprep.mubr.bf16.mxu0 %v1860
        %3293 = vmatmul.mubr.bf16.gmra.mrb[0].mxu0 %v1773
        %v3294 = vpop.f32.mrb[0].mxu0
        %v3295 = vadd.f32 %v3134, %v3294
        %v3296 = vpop.f32.mrb[0].mxu0
        %v3297 = vpop.f32.mrb[0].mxu0
        %v3298 = vadd.f32 %v3137, %v3297
        %v3299 = vpop.f32.mrb[0].mxu0
        %3300 = vmatprep.mubr.bf16.mxu0 %v1872
        %3301 = vmatmul.mubr.bf16.gmra.mrb[0].mxu0 %v1774
        %v3302 = vpop.f32.mrb[0].mxu0
        %v3303 = vadd.f32 %v3142, %v3302
        %v3304 = vpop.f32.mrb[0].mxu0
        %v3305 = vpop.f32.mrb[0].mxu0
        %v3306 = vadd.f32 %v3145, %v3305
        %v3307 = vpop.f32.mrb[0].mxu0
        %3308 = vmatprep.mubr.bf16.mxu0 %v1884
        %3309 = vmatmul.mubr.bf16.gmra.mrb[0].mxu0 %v1775
        %v3310 = vpop.f32.mrb[0].mxu0
        %v3311 = vadd.f32 %v3150, %v3310
        %v3312 = vpop.f32.mrb[0].mxu0
        %v3313 = vpop.f32.mrb[0].mxu0
        %v3314 = vadd.f32 %v3153, %v3313
        %v3315 = vpop.f32.mrb[0].mxu0
        %3316 = vmatprep.mubr.bf16.mxu0 %v1896
        %3317 = vmatmul.mubr.bf16.gmra.mrb[0].mxu0 %v1776
        %v3318 = vpop.f32.mrb[0].mxu0
        %v3319 = vadd.f32 %v3158, %v3318
        %v3320 = vpop.f32.mrb[0].mxu0
        %v3321 = vpop.f32.mrb[0].mxu0
        %v3322 = vadd.f32 %v3161, %v3321
        %v3323 = vpop.f32.mrb[0].mxu0
        %3324 = vmatprep.mubr.bf16.mxu0 %v1908
        %3325 = vmatmul.mubr.bf16.gmra.mrb[0].mxu0 %v1777
        %v3326 = vpop.f32.mrb[0].mxu0
        %v3327 = vadd.f32 %v3166, %v3326
        %v3328 = vpop.f32.mrb[0].mxu0
        %v3329 = vpop.f32.mrb[0].mxu0
        %v3330 = vadd.f32 %v3169, %v3329
        %v3331 = vpop.f32.mrb[0].mxu0
        %3332 = vmatprep.mubr.bf16.mxu0 %v1920
        %3333 = vmatmul.mubr.bf16.gmra.mrb[0].mxu0 %v1778
        %v3334 = vpop.f32.mrb[0].mxu0
        %v3335 = vadd.f32 %v3174, %v3334
        %v3336 = vpop.f32.mrb[0].mxu0
        %v3337 = vpop.f32.mrb[0].mxu0
        %v3338 = vadd.f32 %v3177, %v3337
        %v3339 = vpop.f32.mrb[0].mxu0
        %3340 = vmatprep.mubr.bf16.mxu0 %v1932
        %3341 = vmatmul.mubr.bf16.gmra.mrb[0].mxu0 %v1779
        %v3342 = vpop.f32.mrb[0].mxu0
        %v3343 = vadd.f32 %v3182, %v3342
        %v3344 = vpop.f32.mrb[0].mxu0
        %v3345 = vpop.f32.mrb[0].mxu0
        %v3346 = vadd.f32 %v3185, %v3345
        %v3347 = vpop.f32.mrb[0].mxu0
        %3348 = vmatprep.mubr.bf16.mxu0 %v1944
        %3349 = vmatmul.mubr.bf16.gmra.mrb[0].mxu0 %v1780
        %v3350 = vpop.f32.mrb[0].mxu0
        %v3351 = vadd.f32 %v3190, %v3350
        %v3352 = vpop.f32.mrb[0].mxu0
        %v3353 = vpop.f32.mrb[0].mxu0
        %v3354 = vadd.f32 %v3193, %v3353
        %v3355 = vpop.f32.mrb[0].mxu0
        %3356 = vmatprep.mubr.bf16.mxu0 %v1956
        %3357 = vmatmul.mubr.bf16.gmra.mrb[0].mxu0 %v1781
        %v3358 = vpop.f32.mrb[0].mxu0
        %v3359 = vadd.f32 %v3198, %v3358
        %v3360 = vpop.f32.mrb[0].mxu0
        %v3361 = vpop.f32.mrb[0].mxu0
        %v3362 = vadd.f32 %v3201, %v3361
        %v3363 = vpop.f32.mrb[0].mxu0
        %3364 = vmatprep.mubr.bf16.mxu0 %v1968
        %3365 = vmatmul.mubr.bf16.gmra.mrb[0].mxu0 %v1782
        %v3366 = vpop.f32.mrb[0].mxu0
        %v3367 = vadd.f32 %v3206, %v3366
        %v3368 = vpop.f32.mrb[0].mxu0
        %v3369 = vpop.f32.mrb[0].mxu0
        %v3370 = vadd.f32 %v3209, %v3369
        %v3371 = vpop.f32.mrb[0].mxu0
        %3372 = vmatprep.mubr.bf16.mxu0 %v1980
        %3373 = vmatmul.mubr.bf16.gmra.mrb[0].mxu0 %v1783
        %v3374 = vpop.f32.mrb[0].mxu0
        %v3375 = vadd.f32 %v3214, %v3374
        %v3376 = vpop.f32.mrb[0].mxu0
        %v3377 = vpop.f32.mrb[0].mxu0
        %v3378 = vadd.f32 %v3217, %v3377
        %v3379 = vpop.f32.mrb[0].mxu0
        %3380 = vmatprep.mubr.bf16.mxu0 %v2097
        %3381 = vmatmul.mubr.bf16.gmra.mrb[0].mxu0 %v1784
        %v3382 = vpop.f32.mrb[0].mxu0
        %v3383 = vadd.f32 %v3222, %v3382
        %v3384 = vpop.f32.mrb[0].mxu0
        %v3385 = vpop.f32.mrb[0].mxu0
        %v3386 = vadd.f32 %v3225, %v3385
        %v3387 = vpop.f32.mrb[0].mxu0
        %3388 = vmatprep.mubr.bf16.mxu0 %v1980
        %3389 = vmatmul.mubr.bf16.gmra.mrb[0].mxu0 %v1783
        %v3390 = vpop.f32.mrb[0].mxu0
        %v3391 = vadd.f32 %v3230, %v3390
        %v3392 = vpop.f32.mrb[0].mxu0
        %v3393 = vpop.f32.mrb[0].mxu0
        %v3394 = vadd.f32 %v3233, %v3393
        %v3395 = vpop.f32.mrb[0].mxu0
        %3396 = vdwg.mxu0
        %3397 = vmatprep.subr.bf16.mxu0 0
        %3398 = vmatpush1.bf16.msra.mxu0 %v2673
        %3399 = vmatprep.subr.bf16.mxu0 0
        %3400 = vmatpush1.bf16.msra.mxu0 %v2674
        %3401 = vmatprep.subr.bf16.mxu0 0
        %3402 = vmatpush1.bf16.msra.mxu0 %v2675
        %3403 = vmatprep.subr.bf16.mxu0 0
        %3404 = vmatpush1.bf16.msra.mxu0 %v2676
        %3405 = vmatprep.subr.bf16.mxu0 0
        %3406 = vmatpush1.bf16.msra.mxu0 %v2677
        %3407 = vmatprep.subr.bf16.mxu0 0
        %3408 = vmatpush1.bf16.msra.mxu0 %v2678
        %3409 = vmatprep.subr.bf16.mxu0 0
        %3410 = vmatpush1.bf16.msra.mxu0 %v2679
        %3411 = vmatprep.subr.bf16.mxu0 0
        %3412 = vmatpush1.bf16.msra.mxu0 %v2680
        %3413 = vmatprep.subr.bf16.mxu0 0
        %3414 = vmatpush1.bf16.msra.mxu0 0
        %3415 = vmatprep.subr.bf16.mxu0 0
        %3416 = vmatpush1.bf16.msra.mxu0 0
        %3417 = vmatprep.subr.bf16.mxu0 0
        %3418 = vmatpush1.bf16.msra.mxu0 0
        %3419 = vmatprep.subr.bf16.mxu0 0
        %3420 = vmatpush1.bf16.msra.mxu0 0
        %3421 = vmatprep.subr.bf16.mxu0 0
        %3422 = vmatpush1.bf16.msra.mxu0 0
        %3423 = vmatprep.subr.bf16.mxu0 0
        %3424 = vmatpush1.bf16.msra.mxu0 0
        %3425 = vmatprep.subr.bf16.mxu0 0
        %3426 = vmatpush1.bf16.msra.mxu0 0
        %3427 = vmatprep.subr.bf16.mxu0 0
        %3428 = vmatpush1.bf16.msra.mxu0 0
        %3429 = vmatprep.mubr.bf16.mxu0 0
        %3430 = vmatmul.mubr.bf16.gmra.mrb[0].mxu0 %v2028
        %v3431 = vpop.f32.mrb[0].mxu0
        %v3432 = vadd.f32 %v3271, %v3431
        %v3433 = vpop.f32.mrb[0].mxu0
        %v3434 = vpop.f32.mrb[0].mxu0
        %v3435 = vadd.f32 %v3274, %v3434
        %v3436 = vpop.f32.mrb[0].mxu0
        %3437 = vmatprep.mubr.bf16.mxu0 0
        %3438 = vmatmul.mubr.bf16.gmra.mrb[0].mxu0 %v2034
        %v3439 = vpop.f32.mrb[0].mxu0
        %v3440 = vadd.f32 %v3279, %v3439
        %v3441 = vpop.f32.mrb[0].mxu0
        %v3442 = vpop.f32.mrb[0].mxu0
        %v3443 = vadd.f32 %v3282, %v3442
        %v3444 = vpop.f32.mrb[0].mxu0
        %3445 = vmatprep.mubr.bf16.mxu0 0
        %3446 = vmatmul.mubr.bf16.gmra.mrb[0].mxu0 %v2037
        %v3447 = vpop.f32.mrb[0].mxu0
        %v3448 = vadd.f32 %v3287, %v3447
        %v3449 = vpop.f32.mrb[0].mxu0
        %v3450 = vpop.f32.mrb[0].mxu0
        %v3451 = vadd.f32 %v3290, %v3450
        %v3452 = vpop.f32.mrb[0].mxu0
        %3453 = vmatprep.mubr.bf16.mxu0 0
        %3454 = vmatmul.mubr.bf16.gmra.mrb[0].mxu0 %v2040
        %v3455 = vpop.f32.mrb[0].mxu0
        %v3456 = vadd.f32 %v3295, %v3455
        %v3457 = vpop.f32.mrb[0].mxu0
        %v3458 = vpop.f32.mrb[0].mxu0
        %v3459 = vadd.f32 %v3298, %v3458
        %v3460 = vpop.f32.mrb[0].mxu0
        %3461 = vmatprep.mubr.bf16.mxu0 0
        %3462 = vmatmul.mubr.bf16.gmra.mrb[0].mxu0 %v2043
        %v3463 = vpop.f32.mrb[0].mxu0
        %v3464 = vadd.f32 %v3303, %v3463
        %v3465 = vpop.f32.mrb[0].mxu0
        %v3466 = vpop.f32.mrb[0].mxu0
        %v3467 = vadd.f32 %v3306, %v3466
        %v3468 = vpop.f32.mrb[0].mxu0
        %3469 = vmatprep.mubr.bf16.mxu0 0
        %3470 = vmatmul.mubr.bf16.gmra.mrb[0].mxu0 %v2046
        %v3471 = vpop.f32.mrb[0].mxu0
        %v3472 = vadd.f32 %v3311, %v3471
        %v3473 = vpop.f32.mrb[0].mxu0
        %v3474 = vpop.f32.mrb[0].mxu0
        %v3475 = vadd.f32 %v3314, %v3474
        %v3476 = vpop.f32.mrb[0].mxu0
        %3477 = vmatprep.mubr.bf16.mxu0 0
        %3478 = vmatmul.mubr.bf16.gmra.mrb[0].mxu0 %v2049
        %v3479 = vpop.f32.mrb[0].mxu0
        %v3480 = vadd.f32 %v3319, %v3479
        %v3481 = vpop.f32.mrb[0].mxu0
        %v3482 = vpop.f32.mrb[0].mxu0
        %v3483 = vadd.f32 %v3322, %v3482
        %v3484 = vpop.f32.mrb[0].mxu0
        %3485 = vmatprep.mubr.bf16.mxu0 0
        %3486 = vmatmul.mubr.bf16.gmra.mrb[0].mxu0 %v2052
        %v3487 = vpop.f32.mrb[0].mxu0
        %v3488 = vadd.f32 %v3327, %v3487
        %v3489 = vpop.f32.mrb[0].mxu0
        %v3490 = vpop.f32.mrb[0].mxu0
        %v3491 = vadd.f32 %v3330, %v3490
        %v3492 = vpop.f32.mrb[0].mxu0
        %3493 = vmatprep.mubr.bf16.mxu0 0
        %3494 = vmatmul.mubr.bf16.gmra.mrb[0].mxu0 %v2055
        %v3495 = vpop.f32.mrb[0].mxu0
        %v3496 = vadd.f32 %v3335, %v3495
        %v3497 = vpop.f32.mrb[0].mxu0
        %v3498 = vpop.f32.mrb[0].mxu0
        %v3499 = vadd.f32 %v3338, %v3498
        %v3500 = vpop.f32.mrb[0].mxu0
        %3501 = vmatprep.mubr.bf16.mxu0 0
        %3502 = vmatmul.mubr.bf16.gmra.mrb[0].mxu0 %v2058
        %v3503 = vpop.f32.mrb[0].mxu0
        %v3504 = vadd.f32 %v3343, %v3503
        %v3505 = vpop.f32.mrb[0].mxu0
        %v3506 = vpop.f32.mrb[0].mxu0
        %v3507 = vadd.f32 %v3346, %v3506
        %v3508 = vpop.f32.mrb[0].mxu0
        %3509 = vmatprep.mubr.bf16.mxu0 0
        %3510 = vmatmul.mubr.bf16.gmra.mrb[0].mxu0 %v2061
        %v3511 = vpop.f32.mrb[0].mxu0
        %v3512 = vadd.f32 %v3351, %v3511
        %v3513 = vpop.f32.mrb[0].mxu0
        %v3514 = vpop.f32.mrb[0].mxu0
        %v3515 = vadd.f32 %v3354, %v3514
        %v3516 = vpop.f32.mrb[0].mxu0
        %3517 = vmatprep.mubr.bf16.mxu0 0
        %3518 = vmatmul.mubr.bf16.gmra.mrb[0].mxu0 %v2064
        %v3519 = vpop.f32.mrb[0].mxu0
        %v3520 = vadd.f32 %v3359, %v3519
        %v3521 = vpop.f32.mrb[0].mxu0
        %v3522 = vpop.f32.mrb[0].mxu0
        %v3523 = vadd.f32 %v3362, %v3522
        %v3524 = vpop.f32.mrb[0].mxu0
        %3525 = vmatprep.mubr.bf16.mxu0 0
        %3526 = vmatmul.mubr.bf16.gmra.mrb[0].mxu0 %v2067
        %v3527 = vpop.f32.mrb[0].mxu0
        %v3528 = vadd.f32 %v3367, %v3527
        %v3529 = vpop.f32.mrb[0].mxu0
        %v3530 = vpop.f32.mrb[0].mxu0
        %v3531 = vadd.f32 %v3370, %v3530
        %v3532 = vpop.f32.mrb[0].mxu0
        %3533 = vmatprep.mubr.bf16.mxu0 0
        %3534 = vmatmul.mubr.bf16.gmra.mrb[0].mxu0 %v2070
        %v3535 = vpop.f32.mrb[0].mxu0
        %v3536 = vadd.f32 %v3375, %v3535
        %v3537 = vpop.f32.mrb[0].mxu0
        %v3538 = vpop.f32.mrb[0].mxu0
        %v3539 = vadd.f32 %v3378, %v3538
        %v3540 = vpop.f32.mrb[0].mxu0
        %3541 = vmatprep.mubr.bf16.mxu0 0
        %3542 = vmatmul.mubr.bf16.gmra.mrb[0].mxu0 %v2103
        %v3543 = vpop.f32.mrb[0].mxu0
        %v3544 = vadd.f32 %v3383, %v3543
        %v3545 = vpop.f32.mrb[0].mxu0
        %v3546 = vpop.f32.mrb[0].mxu0
        %v3547 = vadd.f32 %v3386, %v3546
        %v3548 = vpop.f32.mrb[0].mxu0
        %3549 = vmatprep.mubr.bf16.mxu0 0
        %3550 = vmatmul.mubr.bf16.gmra.mrb[0].mxu0 %v2070
        %v3551 = vpop.f32.mrb[0].mxu0
        %v3552 = vadd.f32 %v3391, %v3551
        %v3553 = vpop.f32.mrb[0].mxu0
        %v3554 = vpop.f32.mrb[0].mxu0
        %v3555 = vadd.f32 %v3394, %v3554
        %v3556 = vpop.f32.mrb[0].mxu0
        %3557 = vdwg.mxu0
        %v3630 = vunpack.c.l.b16 %v2105
        %v3631 = vunpack.c.l.b16 %v2106
        %v3632 = vunpack.c.l.b16 %v2107
        %v3633 = vunpack.c.l.b16 %v2108
        %v3634 = vunpack.c.l.b16 %v2109
        %v3635 = vunpack.c.l.b16 %v2110
        %v3636 = vunpack.c.l.b16 %v2111
        %v3637 = vunpack.c.l.b16 %v2112
        %v3638 = vunpack.c.l.b16 %v2113
        %v3639 = vunpack.c.l.b16 %v2114
        %v3640 = vunpack.c.l.b16 %v2115
        %v3641 = vunpack.c.l.b16 %v2116
        %v3642 = vunpack.c.l.b16 %v2117
        %v3643 = vunpack.c.l.b16 %v2118
        %v3644 = vunpack.c.l.b16 %v2119
        %v3645 = vunpack.c.l.b16 %v2120
        %v3646 = vunpack.c.l.b16 %v2121
        %v3647 = vunpack.c.l.b16 %v2122
        %v3648 = vunpack.c.l.b16 %v2123
        %v3649 = vunpack.c.l.b16 %v2124
        %v3650 = vunpack.c.l.b16 %v2125
        %v3651 = vunpack.c.l.b16 %v2126
        %v3652 = vunpack.c.l.b16 %v2127
        %v3653 = vunpack.c.l.b16 %v2128
        %v3654 = vunpack.c.l.b16 %v2129
        %v3655 = vunpack.c.l.b16 %v2130
        %v3656 = vunpack.c.l.b16 %v2131
        %v3657 = vunpack.c.l.b16 %v2132
        %v3658 = vunpack.c.l.b16 %v2133
        %v3659 = vunpack.c.l.b16 %v2134
        %v3660 = vunpack.c.l.b16 %v2135
        %v3661 = vunpack.c.l.b16 %v2136
        %v3662 = vunpack.c.l.b16 %v2137
        %v3663 = vunpack.c.l.b16 %v2138
        %v3664 = vunpack.c.l.b16 %v2139
        %v3665 = vunpack.c.l.b16 %v2140
        %v3666 = vunpack.c.l.b16 %v2141
        %v3667 = vunpack.c.l.b16 %v2142
        %v3668 = vunpack.c.l.b16 %v2143
        %v3669 = vunpack.c.l.b16 %v2144
        %v3670 = vunpack.c.l.b16 %v2145
        %v3671 = vunpack.c.l.b16 %v2146
        %v3672 = vunpack.c.l.b16 %v2147
        %v3673 = vunpack.c.l.b16 %v2148
        %v3674 = vunpack.c.l.b16 %v2149
        %v3675 = vunpack.c.l.b16 %v2150
        %v3676 = vunpack.c.l.b16 %v2151
        %v3677 = vunpack.c.l.b16 %v2152
        %v3678 = vunpack.c.l.b16 %v2153
        %v3679 = vunpack.c.l.b16 %v2154
        %v3680 = vunpack.c.l.b16 %v2155
        %v3681 = vunpack.c.l.b16 %v2156
        %v3682 = vunpack.c.l.b16 %v2157
        %v3683 = vunpack.c.l.b16 %v2158
        %v3684 = vunpack.c.l.b16 %v2159
        %v3685 = vunpack.c.l.b16 %v2160
        %v3686 = vunpack.c.l.b16 %v2161
        %v3687 = vunpack.c.l.b16 %v2162
        %v3688 = vunpack.c.l.b16 %v2163
        %v3689 = vunpack.c.l.b16 %v2164
        %v3690 = vunpack.c.l.b16 %v2165
        %v3691 = vunpack.c.l.b16 %v2166
        %v3692 = vunpack.c.l.b16 %v2167
        %v3693 = vunpack.c.l.b16 %v2168
        %v3694 = vunpack.c.l.b16 %v2169
        %v3695 = vunpack.c.l.b16 %v2170
        %v3696 = vunpack.c.l.b16 %v2171
        %v3697 = vunpack.c.l.b16 %v2172
        %v3698 = vunpack.c.l.b16 %v2173
        %v3699 = vunpack.c.l.b16 %v2174
        %v3700 = vunpack.c.l.b16 %v2175
        %v3701 = vunpack.c.l.b16 %v2176
        %v3702 = vpack.c.b16 %v3631, %v3630
        %v3703 = vpack.c.b16 %v3633, %v3632
        %v3704 = vpack.c.b16 %v3635, %v3634
        %v3705 = vpack.c.b16 %v3637, %v3636
        %v3706 = vpack.c.b16 %v3639, %v3638
        %v3707 = vpack.c.b16 %v3641, %v3640
        %v3708 = vpack.c.b16 %v3643, %v3642
        %v3709 = vpack.c.b16 %v3645, %v3644
        %v3710 = vpack.c.b16 %v3647, %v3646
        %v3711 = vpack.c.b16 %v3649, %v3648
        %v3712 = vpack.c.b16 %v3651, %v3650
        %v3713 = vpack.c.b16 %v3653, %v3652
        %v3714 = vpack.c.b16 %v3655, %v3654
        %v3715 = vpack.c.b16 %v3657, %v3656
        %v3716 = vpack.c.b16 %v3659, %v3658
        %v3717 = vpack.c.b16 %v3661, %v3660
        %v3718 = vpack.c.b16 %v3663, %v3662
        %v3719 = vpack.c.b16 %v3665, %v3664
        %v3720 = vpack.c.b16 %v3667, %v3666
        %v3721 = vpack.c.b16 %v3669, %v3668
        %v3722 = vpack.c.b16 %v3671, %v3670
        %v3723 = vpack.c.b16 %v3673, %v3672
        %v3724 = vpack.c.b16 %v3675, %v3674
        %v3725 = vpack.c.b16 %v3677, %v3676
        %v3726 = vpack.c.b16 %v3679, %v3678
        %v3727 = vpack.c.b16 %v3681, %v3680
        %v3728 = vpack.c.b16 %v3683, %v3682
        %v3729 = vpack.c.b16 %v3685, %v3684
        %v3730 = vpack.c.b16 %v3687, %v3686
        %v3731 = vpack.c.b16 %v3689, %v3688
        %v3732 = vpack.c.b16 %v3691, %v3690
        %v3733 = vpack.c.b16 %v3693, %v3692
        %v3734 = vpack.c.b16 %v3695, %v3694
        %v3735 = vpack.c.b16 %v3697, %v3696
        %v3736 = vpack.c.b16 %v3699, %v3698
        %v3737 = vpack.c.b16 %v3701, %v3700
        %v3774 = vsel %vm419, %v1230, 0
        %v3776 = vsel %vm419, %v1236, 0
        %v3778 = vsel %vm419, %v1239, 0
        %v3780 = vsel %vm419, %v1242, 0
        %v3782 = vsel %vm419, %v1245, 0
        %v3784 = vsel %vm419, %v1248, 0
        %v3786 = vsel %vm419, %v1251, 0
        %v3788 = vsel %vm419, %v1254, 0
        %v3790 = vsel %vm419, %v1257, 0
        %v3792 = vsel %vm419, %v1260, 0
        %v3794 = vsel %vm419, %v1263, 0
        %v3796 = vsel %vm419, %v1266, 0
        %v3798 = vsel %vm419, %v1269, 0
        %v3800 = vsel %vm419, %v1272, 0
        %v3803 = vsel %vm419, %v1289, 0
        %3805 = vmatprep.subr.bf16.mxu0 0
        %3806 = vmatpush1.bf16.msra.mxu0 %v3702
        %3807 = vmatprep.subr.bf16.mxu0 0
        %3808 = vmatpush1.bf16.msra.mxu0 %v3703
        %3809 = vmatprep.subr.bf16.mxu0 0
        %3810 = vmatpush1.bf16.msra.mxu0 %v3704
        %3811 = vmatprep.subr.bf16.mxu0 0
        %3812 = vmatpush1.bf16.msra.mxu0 %v3705
        %3813 = vmatprep.subr.bf16.mxu0 0
        %3814 = vmatpush1.bf16.msra.mxu0 %v3706
        %3815 = vmatprep.subr.bf16.mxu0 0
        %3816 = vmatpush1.bf16.msra.mxu0 %v3707
        %3817 = vmatprep.subr.bf16.mxu0 0
        %3818 = vmatpush1.bf16.msra.mxu0 %v3708
        %3819 = vmatprep.subr.bf16.mxu0 0
        %3820 = vmatpush1.bf16.msra.mxu0 %v3709
        %3821 = vmatprep.subr.bf16.mxu0 0
        %3822 = vmatpush1.bf16.msra.mxu0 %v3710
        %3823 = vmatprep.subr.bf16.mxu0 0
        %3824 = vmatpush1.bf16.msra.mxu0 %v3711
        %3825 = vmatprep.subr.bf16.mxu0 0
        %3826 = vmatpush1.bf16.msra.mxu0 %v3712
        %3827 = vmatprep.subr.bf16.mxu0 0
        %3828 = vmatpush1.bf16.msra.mxu0 %v3713
        %3829 = vmatprep.subr.bf16.mxu0 0
        %3830 = vmatpush1.bf16.msra.mxu0 %v3714
        %3831 = vmatprep.subr.bf16.mxu0 0
        %3832 = vmatpush1.bf16.msra.mxu0 %v3715
        %3833 = vmatprep.subr.bf16.mxu0 0
        %3834 = vmatpush1.bf16.msra.mxu0 %v3716
        %3835 = vmatprep.subr.bf16.mxu0 0
        %3836 = vmatpush1.bf16.msra.mxu0 %v3717
        %3837 = vmatprep.mubr.bf16.mxu0 %v1433
        %3838 = vmatmul.mubr.bf16.gmra.mrb[0].mxu0 %v1387
        %v3839 = vpop.f32.mrb[0].mxu0
        %v3840 = vadd.f32 %v3432, %v3839
        %v3841 = vpop.f32.mrb[0].mxu0
        %v3842 = vpop.f32.mrb[0].mxu0
        %v3843 = vadd.f32 %v3435, %v3842
        %v3844 = vpop.f32.mrb[0].mxu0
        %3845 = vmatprep.mubr.bf16.mxu0 %v1437
        %3846 = vmatmul.mubr.bf16.gmra.mrb[0].mxu0 %v1390
        %v3847 = vpop.f32.mrb[0].mxu0
        %v3848 = vadd.f32 %v3440, %v3847
        %v3849 = vpop.f32.mrb[0].mxu0
        %v3850 = vpop.f32.mrb[0].mxu0
        %v3851 = vadd.f32 %v3443, %v3850
        %v3852 = vpop.f32.mrb[0].mxu0
        %3853 = vmatprep.mubr.bf16.mxu0 %v1440
        %3854 = vmatmul.mubr.bf16.gmra.mrb[0].mxu0 %v1387
        %v3855 = vpop.f32.mrb[0].mxu0
        %v3856 = vadd.f32 %v3448, %v3855
        %v3857 = vpop.f32.mrb[0].mxu0
        %v3858 = vpop.f32.mrb[0].mxu0
        %v3859 = vadd.f32 %v3451, %v3858
        %v3860 = vpop.f32.mrb[0].mxu0
        %3861 = vmatprep.mubr.bf16.mxu0 %v1444
        %3862 = vmatmul.mubr.bf16.gmra.mrb[0].mxu0 %v1393
        %v3863 = vpop.f32.mrb[0].mxu0
        %v3864 = vadd.f32 %v3456, %v3863
        %v3865 = vpop.f32.mrb[0].mxu0
        %v3866 = vpop.f32.mrb[0].mxu0
        %v3867 = vadd.f32 %v3459, %v3866
        %v3868 = vpop.f32.mrb[0].mxu0
        %3869 = vmatprep.mubr.bf16.mxu0 %v1448
        %3870 = vmatmul.mubr.bf16.gmra.mrb[0].mxu0 %v1396
        %v3871 = vpop.f32.mrb[0].mxu0
        %v3872 = vadd.f32 %v3464, %v3871
        %v3873 = vpop.f32.mrb[0].mxu0
        %v3874 = vpop.f32.mrb[0].mxu0
        %v3875 = vadd.f32 %v3467, %v3874
        %v3876 = vpop.f32.mrb[0].mxu0
        %3877 = vmatprep.mubr.bf16.mxu0 %v1452
        %3878 = vmatmul.mubr.bf16.gmra.mrb[0].mxu0 %v1399
        %v3879 = vpop.f32.mrb[0].mxu0
        %v3880 = vadd.f32 %v3472, %v3879
        %v3881 = vpop.f32.mrb[0].mxu0
        %v3882 = vpop.f32.mrb[0].mxu0
        %v3883 = vadd.f32 %v3475, %v3882
        %v3884 = vpop.f32.mrb[0].mxu0
        %3885 = vmatprep.mubr.bf16.mxu0 %v1456
        %3886 = vmatmul.mubr.bf16.gmra.mrb[0].mxu0 %v1402
        %v3887 = vpop.f32.mrb[0].mxu0
        %v3888 = vadd.f32 %v3480, %v3887
        %v3889 = vpop.f32.mrb[0].mxu0
        %v3890 = vpop.f32.mrb[0].mxu0
        %v3891 = vadd.f32 %v3483, %v3890
        %v3892 = vpop.f32.mrb[0].mxu0
        %3893 = vmatprep.mubr.bf16.mxu0 %v1460
        %3894 = vmatmul.mubr.bf16.gmra.mrb[0].mxu0 %v1405
        %v3895 = vpop.f32.mrb[0].mxu0
        %v3896 = vadd.f32 %v3488, %v3895
        %v3897 = vpop.f32.mrb[0].mxu0
        %v3898 = vpop.f32.mrb[0].mxu0
        %v3899 = vadd.f32 %v3491, %v3898
        %v3900 = vpop.f32.mrb[0].mxu0
        %3901 = vmatprep.mubr.bf16.mxu0 %v1464
        %3902 = vmatmul.mubr.bf16.gmra.mrb[0].mxu0 %v1408
        %v3903 = vpop.f32.mrb[0].mxu0
        %v3904 = vadd.f32 %v3496, %v3903
        %v3905 = vpop.f32.mrb[0].mxu0
        %v3906 = vpop.f32.mrb[0].mxu0
        %v3907 = vadd.f32 %v3499, %v3906
        %v3908 = vpop.f32.mrb[0].mxu0
        %3909 = vmatprep.mubr.bf16.mxu0 %v1468
        %3910 = vmatmul.mubr.bf16.gmra.mrb[0].mxu0 %v1411
        %v3911 = vpop.f32.mrb[0].mxu0
        %v3912 = vadd.f32 %v3504, %v3911
        %v3913 = vpop.f32.mrb[0].mxu0
        %v3914 = vpop.f32.mrb[0].mxu0
        %v3915 = vadd.f32 %v3507, %v3914
        %v3916 = vpop.f32.mrb[0].mxu0
        %3917 = vmatprep.mubr.bf16.mxu0 %v1472
        %3918 = vmatmul.mubr.bf16.gmra.mrb[0].mxu0 %v1414
        %v3919 = vpop.f32.mrb[0].mxu0
        %v3920 = vadd.f32 %v3512, %v3919
        %v3921 = vpop.f32.mrb[0].mxu0
        %v3922 = vpop.f32.mrb[0].mxu0
        %v3923 = vadd.f32 %v3515, %v3922
        %v3924 = vpop.f32.mrb[0].mxu0
        %3925 = vmatprep.mubr.bf16.mxu0 %v1476
        %3926 = vmatmul.mubr.bf16.gmra.mrb[0].mxu0 %v1417
        %v3927 = vpop.f32.mrb[0].mxu0
        %v3928 = vadd.f32 %v3520, %v3927
        %v3929 = vpop.f32.mrb[0].mxu0
        %v3930 = vpop.f32.mrb[0].mxu0
        %v3931 = vadd.f32 %v3523, %v3930
        %v3932 = vpop.f32.mrb[0].mxu0
        %3933 = vmatprep.mubr.bf16.mxu0 %v1480
        %3934 = vmatmul.mubr.bf16.gmra.mrb[0].mxu0 %v1420
        %v3935 = vpop.f32.mrb[0].mxu0
        %v3936 = vadd.f32 %v3528, %v3935
        %v3937 = vpop.f32.mrb[0].mxu0
        %v3938 = vpop.f32.mrb[0].mxu0
        %v3939 = vadd.f32 %v3531, %v3938
        %v3940 = vpop.f32.mrb[0].mxu0
        %3941 = vmatprep.mubr.bf16.mxu0 %v1484
        %3942 = vmatmul.mubr.bf16.gmra.mrb[0].mxu0 %v1423
        %v3943 = vpop.f32.mrb[0].mxu0
        %v3944 = vadd.f32 %v3536, %v3943
        %v3945 = vpop.f32.mrb[0].mxu0
        %v3946 = vpop.f32.mrb[0].mxu0
        %v3947 = vadd.f32 %v3539, %v3946
        %v3948 = vpop.f32.mrb[0].mxu0
        %3949 = vmatprep.mubr.bf16.mxu0 %v1488
        %3950 = vmatmul.mubr.bf16.gmra.mrb[0].mxu0 %v1426
        %v3951 = vpop.f32.mrb[0].mxu0
        %v3952 = vadd.f32 %v3544, %v3951
        %v3953 = vpop.f32.mrb[0].mxu0
        %v3954 = vpop.f32.mrb[0].mxu0
        %v3955 = vadd.f32 %v3547, %v3954
        %v3956 = vpop.f32.mrb[0].mxu0
        %3957 = vmatprep.mubr.bf16.mxu0 %v1492
        %3958 = vmatmul.mubr.bf16.gmra.mrb[0].mxu0 %v1429
        %v3959 = vpop.f32.mrb[0].mxu0
        %v3960 = vadd.f32 %v3552, %v3959
        %v3961 = vpop.f32.mrb[0].mxu0
        %v3962 = vpop.f32.mrb[0].mxu0
        %v3963 = vadd.f32 %v3555, %v3962
        %v3964 = vpop.f32.mrb[0].mxu0
        %3965 = vdwg.mxu0
        %3966 = vmatprep.subr.bf16.mxu0 0
        %3967 = vmatpush1.bf16.msra.mxu0 %v3718
        %3968 = vmatprep.subr.bf16.mxu0 0
        %3969 = vmatpush1.bf16.msra.mxu0 %v3719
        %3970 = vmatprep.subr.bf16.mxu0 0
        %3971 = vmatpush1.bf16.msra.mxu0 %v3720
        %3972 = vmatprep.subr.bf16.mxu0 0
        %3973 = vmatpush1.bf16.msra.mxu0 %v3721
        %3974 = vmatprep.subr.bf16.mxu0 0
        %3975 = vmatpush1.bf16.msra.mxu0 %v3722
        %3976 = vmatprep.subr.bf16.mxu0 0
        %3977 = vmatpush1.bf16.msra.mxu0 %v3723
        %3978 = vmatprep.subr.bf16.mxu0 0
        %3979 = vmatpush1.bf16.msra.mxu0 %v3724
        %3980 = vmatprep.subr.bf16.mxu0 0
        %3981 = vmatpush1.bf16.msra.mxu0 %v3725
        %3982 = vmatprep.subr.bf16.mxu0 0
        %3983 = vmatpush1.bf16.msra.mxu0 %v3726
        %3984 = vmatprep.subr.bf16.mxu0 0
        %3985 = vmatpush1.bf16.msra.mxu0 %v3727
        %3986 = vmatprep.subr.bf16.mxu0 0
        %3987 = vmatpush1.bf16.msra.mxu0 %v3728
        %3988 = vmatprep.subr.bf16.mxu0 0
        %3989 = vmatpush1.bf16.msra.mxu0 %v3729
        %3990 = vmatprep.subr.bf16.mxu0 0
        %3991 = vmatpush1.bf16.msra.mxu0 %v3730
        %3992 = vmatprep.subr.bf16.mxu0 0
        %3993 = vmatpush1.bf16.msra.mxu0 %v3731
        %3994 = vmatprep.subr.bf16.mxu0 0
        %3995 = vmatpush1.bf16.msra.mxu0 %v3732
        %3996 = vmatprep.subr.bf16.mxu0 0
        %3997 = vmatpush1.bf16.msra.mxu0 %v3733
        %3998 = vmatprep.mubr.bf16.mxu0 %v1387
        %3999 = vmatmul.mubr.bf16.gmra.mrb[0].mxu0 %v1496
        %v4000 = vpop.f32.mrb[0].mxu0
        %v4001 = vadd.f32 %v3840, %v4000
        %v4002 = vpop.f32.mrb[0].mxu0
        %v4003 = vpop.f32.mrb[0].mxu0
        %v4004 = vadd.f32 %v3843, %v4003
        %v4005 = vpop.f32.mrb[0].mxu0
        %4006 = vmatprep.mubr.bf16.mxu0 %v1393
        %4007 = vmatmul.mubr.bf16.gmra.mrb[0].mxu0 %v1500
        %v4008 = vpop.f32.mrb[0].mxu0
        %v4009 = vadd.f32 %v3848, %v4008
        %v4010 = vpop.f32.mrb[0].mxu0
        %v4011 = vpop.f32.mrb[0].mxu0
        %v4012 = vadd.f32 %v3851, %v4011
        %v4013 = vpop.f32.mrb[0].mxu0
        %4014 = vmatprep.mubr.bf16.mxu0 %v1396
        %4015 = vmatmul.mubr.bf16.gmra.mrb[0].mxu0 %v1504
        %v4016 = vpop.f32.mrb[0].mxu0
        %v4017 = vadd.f32 %v3856, %v4016
        %v4018 = vpop.f32.mrb[0].mxu0
        %v4019 = vpop.f32.mrb[0].mxu0
        %v4020 = vadd.f32 %v3859, %v4019
        %v4021 = vpop.f32.mrb[0].mxu0
        %4022 = vmatprep.mubr.bf16.mxu0 %v1399
        %4023 = vmatmul.mubr.bf16.gmra.mrb[0].mxu0 %v1508
        %v4024 = vpop.f32.mrb[0].mxu0
        %v4025 = vadd.f32 %v3864, %v4024
        %v4026 = vpop.f32.mrb[0].mxu0
        %v4027 = vpop.f32.mrb[0].mxu0
        %v4028 = vadd.f32 %v3867, %v4027
        %v4029 = vpop.f32.mrb[0].mxu0
        %4030 = vmatprep.mubr.bf16.mxu0 %v1402
        %4031 = vmatmul.mubr.bf16.gmra.mrb[0].mxu0 %v1512
        %v4032 = vpop.f32.mrb[0].mxu0
        %v4033 = vadd.f32 %v3872, %v4032
        %v4034 = vpop.f32.mrb[0].mxu0
        %v4035 = vpop.f32.mrb[0].mxu0
        %v4036 = vadd.f32 %v3875, %v4035
        %v4037 = vpop.f32.mrb[0].mxu0
        %4038 = vmatprep.mubr.bf16.mxu0 %v1405
        %4039 = vmatmul.mubr.bf16.gmra.mrb[0].mxu0 %v1516
        %v4040 = vpop.f32.mrb[0].mxu0
        %v4041 = vadd.f32 %v3880, %v4040
        %v4042 = vpop.f32.mrb[0].mxu0
        %v4043 = vpop.f32.mrb[0].mxu0
        %v4044 = vadd.f32 %v3883, %v4043
        %v4045 = vpop.f32.mrb[0].mxu0
        %4046 = vmatprep.mubr.bf16.mxu0 %v1408
        %4047 = vmatmul.mubr.bf16.gmra.mrb[0].mxu0 %v1520
        %v4048 = vpop.f32.mrb[0].mxu0
        %v4049 = vadd.f32 %v3888, %v4048
        %v4050 = vpop.f32.mrb[0].mxu0
        %v4051 = vpop.f32.mrb[0].mxu0
        %v4052 = vadd.f32 %v3891, %v4051
        %v4053 = vpop.f32.mrb[0].mxu0
        %4054 = vmatprep.mubr.bf16.mxu0 %v1411
        %4055 = vmatmul.mubr.bf16.gmra.mrb[0].mxu0 %v1524
        %v4056 = vpop.f32.mrb[0].mxu0
        %v4057 = vadd.f32 %v3896, %v4056
        %v4058 = vpop.f32.mrb[0].mxu0
        %v4059 = vpop.f32.mrb[0].mxu0
        %v4060 = vadd.f32 %v3899, %v4059
        %v4061 = vpop.f32.mrb[0].mxu0
        %4062 = vmatprep.mubr.bf16.mxu0 %v1414
        %4063 = vmatmul.mubr.bf16.gmra.mrb[0].mxu0 %v1528
        %v4064 = vpop.f32.mrb[0].mxu0
        %v4065 = vadd.f32 %v3904, %v4064
        %v4066 = vpop.f32.mrb[0].mxu0
        %v4067 = vpop.f32.mrb[0].mxu0
        %v4068 = vadd.f32 %v3907, %v4067
        %v4069 = vpop.f32.mrb[0].mxu0
        %4070 = vmatprep.mubr.bf16.mxu0 %v1417
        %4071 = vmatmul.mubr.bf16.gmra.mrb[0].mxu0 %v1532
        %v4072 = vpop.f32.mrb[0].mxu0
        %v4073 = vadd.f32 %v3912, %v4072
        %v4074 = vpop.f32.mrb[0].mxu0
        %v4075 = vpop.f32.mrb[0].mxu0
        %v4076 = vadd.f32 %v3915, %v4075
        %v4077 = vpop.f32.mrb[0].mxu0
        %4078 = vmatprep.mubr.bf16.mxu0 %v1420
        %4079 = vmatmul.mubr.bf16.gmra.mrb[0].mxu0 %v1536
        %v4080 = vpop.f32.mrb[0].mxu0
        %v4081 = vadd.f32 %v3920, %v4080
        %v4082 = vpop.f32.mrb[0].mxu0
        %v4083 = vpop.f32.mrb[0].mxu0
        %v4084 = vadd.f32 %v3923, %v4083
        %v4085 = vpop.f32.mrb[0].mxu0
        %4086 = vmatprep.mubr.bf16.mxu0 %v1423
        %4087 = vmatmul.mubr.bf16.gmra.mrb[0].mxu0 %v1540
        %v4088 = vpop.f32.mrb[0].mxu0
        %v4089 = vadd.f32 %v3928, %v4088
        %v4090 = vpop.f32.mrb[0].mxu0
        %v4091 = vpop.f32.mrb[0].mxu0
        %v4092 = vadd.f32 %v3931, %v4091
        %v4093 = vpop.f32.mrb[0].mxu0
        %4094 = vmatprep.mubr.bf16.mxu0 %v1426
        %4095 = vmatmul.mubr.bf16.gmra.mrb[0].mxu0 %v1544
        %v4096 = vpop.f32.mrb[0].mxu0
        %v4097 = vadd.f32 %v3936, %v4096
        %v4098 = vpop.f32.mrb[0].mxu0
        %v4099 = vpop.f32.mrb[0].mxu0
        %v4100 = vadd.f32 %v3939, %v4099
        %v4101 = vpop.f32.mrb[0].mxu0
        %4102 = vmatprep.mubr.bf16.mxu0 %v1429
        %4103 = vmatmul.mubr.bf16.gmra.mrb[0].mxu0 %v1548
        %v4104 = vpop.f32.mrb[0].mxu0
        %v4105 = vadd.f32 %v3944, %v4104
        %v4106 = vpop.f32.mrb[0].mxu0
        %v4107 = vpop.f32.mrb[0].mxu0
        %v4108 = vadd.f32 %v3947, %v4107
        %v4109 = vpop.f32.mrb[0].mxu0
        %4110 = vmatprep.mubr.bf16.mxu0 %v1559
        %4111 = vmatmul.mubr.bf16.gmra.mrb[0].mxu0 %v1552
        %v4112 = vpop.f32.mrb[0].mxu0
        %v4113 = vadd.f32 %v3952, %v4112
        %v4114 = vpop.f32.mrb[0].mxu0
        %v4115 = vpop.f32.mrb[0].mxu0
        %v4116 = vadd.f32 %v3955, %v4115
        %v4117 = vpop.f32.mrb[0].mxu0
        %4118 = vmatprep.mubr.bf16.mxu0 %v1429
        %4119 = vmatmul.mubr.bf16.gmra.mrb[0].mxu0 %v1556
        %v4120 = vpop.f32.mrb[0].mxu0
        %v4121 = vadd.f32 %v3960, %v4120
        %v4122 = vpop.f32.mrb[0].mxu0
        %v4123 = vpop.f32.mrb[0].mxu0
        %v4124 = vadd.f32 %v3963, %v4123
        %v4125 = vpop.f32.mrb[0].mxu0
        %4126 = vdwg.mxu0
        %4127 = vmatprep.subr.bf16.mxu0 0
        %4128 = vmatpush1.bf16.msra.mxu0 %v3734
        %4129 = vmatprep.subr.bf16.mxu0 0
        %4130 = vmatpush1.bf16.msra.mxu0 %v3735
        %4131 = vmatprep.subr.bf16.mxu0 0
        %4132 = vmatpush1.bf16.msra.mxu0 %v3736
        %4133 = vmatprep.subr.bf16.mxu0 0
        %4134 = vmatpush1.bf16.msra.mxu0 %v3737
        %4135 = vmatprep.subr.bf16.mxu0 0
        %4136 = vmatpush1.bf16.msra.mxu0 0
        %4137 = vmatprep.subr.bf16.mxu0 0
        %4138 = vmatpush1.bf16.msra.mxu0 0
        %4139 = vmatprep.subr.bf16.mxu0 0
        %4140 = vmatpush1.bf16.msra.mxu0 0
        %4141 = vmatprep.subr.bf16.mxu0 0
        %4142 = vmatpush1.bf16.msra.mxu0 0
        %4143 = vmatprep.subr.bf16.mxu0 0
        %4144 = vmatpush1.bf16.msra.mxu0 0
        %4145 = vmatprep.subr.bf16.mxu0 0
        %4146 = vmatpush1.bf16.msra.mxu0 0
        %4147 = vmatprep.subr.bf16.mxu0 0
        %4148 = vmatpush1.bf16.msra.mxu0 0
        %4149 = vmatprep.subr.bf16.mxu0 0
        %4150 = vmatpush1.bf16.msra.mxu0 0
        %4151 = vmatprep.subr.bf16.mxu0 0
        %4152 = vmatpush1.bf16.msra.mxu0 0
        %4153 = vmatprep.subr.bf16.mxu0 0
        %4154 = vmatpush1.bf16.msra.mxu0 0
        %4155 = vmatprep.subr.bf16.mxu0 0
        %4156 = vmatpush1.bf16.msra.mxu0 0
        %4157 = vmatprep.subr.bf16.mxu0 0
        %4158 = vmatpush1.bf16.msra.mxu0 0
        %4159 = vmatprep.mubr.bf16.mxu0 0
        %4160 = vmatmul.mubr.bf16.gmra.mrb[0].mxu0 %v3774
        %v4161 = vpop.f32.mrb[0].mxu0
        %v4162 = vadd.f32 %v4001, %v4161
        %v4163 = vpop.f32.mrb[0].mxu0
        %v4164 = vpop.f32.mrb[0].mxu0
        %v4165 = vadd.f32 %v4004, %v4164
        %v4166 = vpop.f32.mrb[0].mxu0
        %4167 = vmatprep.mubr.bf16.mxu0 0
        %4168 = vmatmul.mubr.bf16.gmra.mrb[0].mxu0 %v3776
        %v4169 = vpop.f32.mrb[0].mxu0
        %v4170 = vadd.f32 %v4009, %v4169
        %v4171 = vpop.f32.mrb[0].mxu0
        %v4172 = vpop.f32.mrb[0].mxu0
        %v4173 = vadd.f32 %v4012, %v4172
        %v4174 = vpop.f32.mrb[0].mxu0
        %4175 = vmatprep.mubr.bf16.mxu0 0
        %4176 = vmatmul.mubr.bf16.gmra.mrb[0].mxu0 %v3778
        %v4177 = vpop.f32.mrb[0].mxu0
        %v4178 = vadd.f32 %v4017, %v4177
        %v4179 = vpop.f32.mrb[0].mxu0
        %v4180 = vpop.f32.mrb[0].mxu0
        %v4181 = vadd.f32 %v4020, %v4180
        %v4182 = vpop.f32.mrb[0].mxu0
        %4183 = vmatprep.mubr.bf16.mxu0 0
        %4184 = vmatmul.mubr.bf16.gmra.mrb[0].mxu0 %v3780
        %v4185 = vpop.f32.mrb[0].mxu0
        %v4186 = vadd.f32 %v4025, %v4185
        %v4187 = vpop.f32.mrb[0].mxu0
        %v4188 = vpop.f32.mrb[0].mxu0
        %v4189 = vadd.f32 %v4028, %v4188
        %v4190 = vpop.f32.mrb[0].mxu0
        %4191 = vmatprep.mubr.bf16.mxu0 0
        %4192 = vmatmul.mubr.bf16.gmra.mrb[0].mxu0 %v3782
        %v4193 = vpop.f32.mrb[0].mxu0
        %v4194 = vadd.f32 %v4033, %v4193
        %v4195 = vpop.f32.mrb[0].mxu0
        %v4196 = vpop.f32.mrb[0].mxu0
        %v4197 = vadd.f32 %v4036, %v4196
        %v4198 = vpop.f32.mrb[0].mxu0
        %4199 = vmatprep.mubr.bf16.mxu0 0
        %4200 = vmatmul.mubr.bf16.gmra.mrb[0].mxu0 %v3784
        %v4201 = vpop.f32.mrb[0].mxu0
        %v4202 = vadd.f32 %v4041, %v4201
        %v4203 = vpop.f32.mrb[0].mxu0
        %v4204 = vpop.f32.mrb[0].mxu0
        %v4205 = vadd.f32 %v4044, %v4204
        %v4206 = vpop.f32.mrb[0].mxu0
        %4207 = vmatprep.mubr.bf16.mxu0 0
        %4208 = vmatmul.mubr.bf16.gmra.mrb[0].mxu0 %v3786
        %v4209 = vpop.f32.mrb[0].mxu0
        %v4210 = vadd.f32 %v4049, %v4209
        %v4211 = vpop.f32.mrb[0].mxu0
        %v4212 = vpop.f32.mrb[0].mxu0
        %v4213 = vadd.f32 %v4052, %v4212
        %v4214 = vpop.f32.mrb[0].mxu0
        %4215 = vmatprep.mubr.bf16.mxu0 0
        %4216 = vmatmul.mubr.bf16.gmra.mrb[0].mxu0 %v3788
        %v4217 = vpop.f32.mrb[0].mxu0
        %v4218 = vadd.f32 %v4057, %v4217
        %v4219 = vpop.f32.mrb[0].mxu0
        %v4220 = vpop.f32.mrb[0].mxu0
        %v4221 = vadd.f32 %v4060, %v4220
        %v4222 = vpop.f32.mrb[0].mxu0
        %4223 = vmatprep.mubr.bf16.mxu0 0
        %4224 = vmatmul.mubr.bf16.gmra.mrb[0].mxu0 %v3790
        %v4225 = vpop.f32.mrb[0].mxu0
        %v4226 = vadd.f32 %v4065, %v4225
        %v4227 = vpop.f32.mrb[0].mxu0
        %v4228 = vpop.f32.mrb[0].mxu0
        %v4229 = vadd.f32 %v4068, %v4228
        %v4230 = vpop.f32.mrb[0].mxu0
        %4231 = vmatprep.mubr.bf16.mxu0 0
        %4232 = vmatmul.mubr.bf16.gmra.mrb[0].mxu0 %v3792
        %v4233 = vpop.f32.mrb[0].mxu0
        %v4234 = vadd.f32 %v4073, %v4233
        %v4235 = vpop.f32.mrb[0].mxu0
        %v4236 = vpop.f32.mrb[0].mxu0
        %v4237 = vadd.f32 %v4076, %v4236
        %v4238 = vpop.f32.mrb[0].mxu0
        %4239 = vmatprep.mubr.bf16.mxu0 0
        %4240 = vmatmul.mubr.bf16.gmra.mrb[0].mxu0 %v3794
        %v4241 = vpop.f32.mrb[0].mxu0
        %v4242 = vadd.f32 %v4081, %v4241
        %v4243 = vpop.f32.mrb[0].mxu0
        %v4244 = vpop.f32.mrb[0].mxu0
        %v4245 = vadd.f32 %v4084, %v4244
        %v4246 = vpop.f32.mrb[0].mxu0
        %4247 = vmatprep.mubr.bf16.mxu0 0
        %4248 = vmatmul.mubr.bf16.gmra.mrb[0].mxu0 %v3796
        %v4249 = vpop.f32.mrb[0].mxu0
        %v4250 = vadd.f32 %v4089, %v4249
        %v4251 = vpop.f32.mrb[0].mxu0
        %v4252 = vpop.f32.mrb[0].mxu0
        %v4253 = vadd.f32 %v4092, %v4252
        %v4254 = vpop.f32.mrb[0].mxu0
        %4255 = vmatprep.mubr.bf16.mxu0 0
        %4256 = vmatmul.mubr.bf16.gmra.mrb[0].mxu0 %v3798
        %v4257 = vpop.f32.mrb[0].mxu0
        %v4258 = vadd.f32 %v4097, %v4257
        %v4259 = vpop.f32.mrb[0].mxu0
        %v4260 = vpop.f32.mrb[0].mxu0
        %v4261 = vadd.f32 %v4100, %v4260
        %v4262 = vpop.f32.mrb[0].mxu0
        %4263 = vmatprep.mubr.bf16.mxu0 0
        %4264 = vmatmul.mubr.bf16.gmra.mrb[0].mxu0 %v3800
        %v4265 = vpop.f32.mrb[0].mxu0
        %v4266 = vadd.f32 %v4105, %v4265
        %v4267 = vpop.f32.mrb[0].mxu0
        %v4268 = vpop.f32.mrb[0].mxu0
        %v4269 = vadd.f32 %v4108, %v4268
        %v4270 = vpop.f32.mrb[0].mxu0
        %4271 = vmatprep.mubr.bf16.mxu0 0
        %4272 = vmatmul.mubr.bf16.gmra.mrb[0].mxu0 %v3803
        %v4273 = vpop.f32.mrb[0].mxu0
        %v4274 = vadd.f32 %v4113, %v4273
        %v4275 = vpop.f32.mrb[0].mxu0
        %v4276 = vpop.f32.mrb[0].mxu0
        %v4277 = vadd.f32 %v4116, %v4276
        %v4278 = vpop.f32.mrb[0].mxu0
        %4279 = vmatprep.mubr.bf16.mxu0 0
        %4280 = vmatmul.mubr.bf16.gmra.mrb[0].mxu0 %v3800
        %v4281 = vpop.f32.mrb[0].mxu0
        %v4282 = vadd.f32 %v4121, %v4281
        %v4283 = vpop.f32.mrb[0].mxu0
        %v4284 = vpop.f32.mrb[0].mxu0
        %v4285 = vadd.f32 %v4124, %v4284
        %v4286 = vpop.f32.mrb[0].mxu0
        %4287 = vdwg.mxu0
        %v4288 = vld [vmem:[%s5] sm:$0x1]
        %v4290 = vlaneseq
        %v4291 = vshrl.u32 %v4290, 7
        %v4292 = vsub.s32 0, %v4291
        %v4293 = vrot.slane %v4288, %v4292
        %v4295 = vmul.f32 %v4162, %v4293
        %v4296 = vmul.f32 %v4165, %v4293
        %v4297 = vmul.f32 %v4170, %v4293
        %v4298 = vmul.f32 %v4173, %v4293
        %v4299 = vmul.f32 %v4178, %v4293
        %v4300 = vmul.f32 %v4181, %v4293
        %v4301 = vmul.f32 %v4186, %v4293
        %v4302 = vmul.f32 %v4189, %v4293
        %v4303 = vmul.f32 %v4194, %v4293
        %v4304 = vmul.f32 %v4197, %v4293
        %v4305 = vmul.f32 %v4202, %v4293
        %v4306 = vmul.f32 %v4205, %v4293
        %v4307 = vmul.f32 %v4210, %v4293
        %v4308 = vmul.f32 %v4213, %v4293
        %v4309 = vmul.f32 %v4218, %v4293
        %v4310 = vmul.f32 %v4221, %v4293
        %v4311 = vmul.f32 %v4226, %v4293
        %v4312 = vmul.f32 %v4229, %v4293
        %v4313 = vmul.f32 %v4234, %v4293
        %v4314 = vmul.f32 %v4237, %v4293
        %v4315 = vmul.f32 %v4242, %v4293
        %v4316 = vmul.f32 %v4245, %v4293
        %v4317 = vmul.f32 %v4250, %v4293
        %v4318 = vmul.f32 %v4253, %v4293
        %v4319 = vmul.f32 %v4258, %v4293
        %v4320 = vmul.f32 %v4261, %v4293
        %v4321 = vmul.f32 %v4266, %v4293
        %v4322 = vmul.f32 %v4269, %v4293
        %v4323 = vmul.f32 %v4274, %v4293
        %v4324 = vmul.f32 %v4277, %v4293
        %v4325 = vmul.f32 %v4282, %v4293
        %v4326 = vmul.f32 %v4285, %v4293
        %v4327 = vld [vmem:[%s6] sm:$0x1]
        %v4329 = vlaneseq
        %v4330 = vshrl.u32 %v4329, 7
        %v4331 = vsub.s32 0, %v4330
        %v4332 = vrot.slane %v4327, %v4331
        %v4334 = vadd.f32 %v4295, %v4332
        %v4335 = vadd.f32 %v4296, %v4332
        %v4336 = vadd.f32 %v4297, %v4332
        %v4337 = vadd.f32 %v4298, %v4332
        %v4338 = vadd.f32 %v4299, %v4332
        %v4339 = vadd.f32 %v4300, %v4332
        %v4340 = vadd.f32 %v4301, %v4332
        %v4341 = vadd.f32 %v4302, %v4332
        %v4342 = vadd.f32 %v4303, %v4332
        %v4343 = vadd.f32 %v4304, %v4332
        %v4344 = vadd.f32 %v4305, %v4332
        %v4345 = vadd.f32 %v4306, %v4332
        %v4346 = vadd.f32 %v4307, %v4332
        %v4347 = vadd.f32 %v4308, %v4332
        %v4348 = vadd.f32 %v4309, %v4332
        %v4349 = vadd.f32 %v4310, %v4332
        %v4350 = vadd.f32 %v4311, %v4332
        %v4351 = vadd.f32 %v4312, %v4332
        %v4352 = vadd.f32 %v4313, %v4332
        %v4353 = vadd.f32 %v4314, %v4332
        %v4354 = vadd.f32 %v4315, %v4332
        %v4355 = vadd.f32 %v4316, %v4332
        %v4356 = vadd.f32 %v4317, %v4332
        %v4357 = vadd.f32 %v4318, %v4332
        %v4358 = vadd.f32 %v4319, %v4332
        %v4359 = vadd.f32 %v4320, %v4332
        %v4360 = vadd.f32 %v4321, %v4332
        %v4361 = vadd.f32 %v4322, %v4332
        %v4362 = vadd.f32 %v4323, %v4332
        %v4363 = vadd.f32 %v4324, %v4332
        %v4364 = vadd.f32 %v4325, %v4332
        %v4365 = vadd.f32 %v4326, %v4332
        %v4366 = vmax.f32 %v4334, 0.0
        %v4367 = vmax.f32 %v4335, 0.0
        %v4368 = vmax.f32 %v4336, 0.0
        %v4369 = vmax.f32 %v4337, 0.0
        %v4370 = vmax.f32 %v4338, 0.0
        %v4371 = vmax.f32 %v4339, 0.0
        %v4372 = vmax.f32 %v4340, 0.0
        %v4373 = vmax.f32 %v4341, 0.0
        %v4374 = vmax.f32 %v4342, 0.0
        %v4375 = vmax.f32 %v4343, 0.0
        %v4376 = vmax.f32 %v4344, 0.0
        %v4377 = vmax.f32 %v4345, 0.0
        %v4378 = vmax.f32 %v4346, 0.0
        %v4379 = vmax.f32 %v4347, 0.0
        %v4380 = vmax.f32 %v4348, 0.0
        %v4381 = vmax.f32 %v4349, 0.0
        %v4382 = vmax.f32 %v4350, 0.0
        %v4383 = vmax.f32 %v4351, 0.0
        %v4384 = vmax.f32 %v4352, 0.0
        %v4385 = vmax.f32 %v4353, 0.0
        %v4386 = vmax.f32 %v4354, 0.0
        %v4387 = vmax.f32 %v4355, 0.0
        %v4388 = vmax.f32 %v4356, 0.0
        %v4389 = vmax.f32 %v4357, 0.0
        %v4390 = vmax.f32 %v4358, 0.0
        %v4391 = vmax.f32 %v4359, 0.0
        %v4392 = vmax.f32 %v4360, 0.0
        %v4393 = vmax.f32 %v4361, 0.0
        %v4394 = vmax.f32 %v4362, 0.0
        %v4395 = vmax.f32 %v4363, 0.0
        %v4396 = vmax.f32 %v4364, 0.0
        %v4397 = vmax.f32 %v4365, 0.0
        %v4398 = vpack.c.bf16 %v4367, %v4366
        %v4399 = vpack.c.bf16 %v4369, %v4368
        %v4400 = vpack.c.bf16 %v4371, %v4370
        %v4401 = vpack.c.bf16 %v4373, %v4372
        %v4402 = vpack.c.bf16 %v4375, %v4374
        %v4403 = vpack.c.bf16 %v4377, %v4376
        %v4404 = vpack.c.bf16 %v4379, %v4378
        %v4405 = vpack.c.bf16 %v4381, %v4380
        %v4406 = vpack.c.bf16 %v4383, %v4382
        %v4407 = vpack.c.bf16 %v4385, %v4384
        %v4408 = vpack.c.bf16 %v4387, %v4386
        %v4409 = vpack.c.bf16 %v4389, %v4388
        %v4410 = vpack.c.bf16 %v4391, %v4390
        %v4411 = vpack.c.bf16 %v4393, %v4392
        %v4412 = vpack.c.bf16 %v4395, %v4394
        %v4413 = vpack.c.bf16 %v4397, %v4396
        %v4415 = vshrl.u32 %v4399, 16
        %v4418 = vshrl.u32 %v4398, 16
        %v4421 = vshrl.u32 %v4400, 16
        %v4424 = vshrl.u32 %v4401, 16
        %v4427 = vshrl.u32 %v4402, 16
        %v4430 = vshrl.u32 %v4403, 16
        %v4433 = vshrl.u32 %v4404, 16
        %v4436 = vshrl.u32 %v4405, 16
        %v4439 = vshrl.u32 %v4406, 16
        %v4442 = vshrl.u32 %v4407, 16
        %v4445 = vshrl.u32 %v4408, 16
        %v4448 = vshrl.u32 %v4409, 16
        %v4451 = vshrl.u32 %v4410, 16
        %v4454 = vshrl.u32 %v4411, 16
        %v4457 = vshrl.u32 %v4412, 16
        %v4460 = vshrl.u32 %v4413, 16
        %v4478 = vrot.slane %v4415, 7
        %v4479 = vshll.u32 %v4399, 16
        %v4481 = vor.u32 %v4478, %v4479
        %v4482 = vrot.slane %v4418, 7
        %v4483 = vshll.u32 %v4398, 16
        %v4485 = vor.u32 %v4482, %v4483
        %v4486 = vrot.slane %v4421, 7
        %v4487 = vshll.u32 %v4400, 16
        %v4489 = vor.u32 %v4486, %v4487
        %v4490 = vrot.slane %v4424, 7
        %v4491 = vshll.u32 %v4401, 16
        %v4493 = vor.u32 %v4490, %v4491
        %v4494 = vrot.slane %v4427, 7
        %v4495 = vshll.u32 %v4402, 16
        %v4497 = vor.u32 %v4494, %v4495
        %v4498 = vrot.slane %v4430, 7
        %v4499 = vshll.u32 %v4403, 16
        %v4501 = vor.u32 %v4498, %v4499
        %v4502 = vrot.slane %v4433, 7
        %v4503 = vshll.u32 %v4404, 16
        %v4505 = vor.u32 %v4502, %v4503
        %v4506 = vrot.slane %v4436, 7
        %v4507 = vshll.u32 %v4405, 16
        %v4509 = vor.u32 %v4506, %v4507
        %v4510 = vrot.slane %v4439, 7
        %v4511 = vshll.u32 %v4406, 16
        %v4513 = vor.u32 %v4510, %v4511
        %v4514 = vrot.slane %v4442, 7
        %v4515 = vshll.u32 %v4407, 16
        %v4517 = vor.u32 %v4514, %v4515
        %v4518 = vrot.slane %v4445, 7
        %v4519 = vshll.u32 %v4408, 16
        %v4521 = vor.u32 %v4518, %v4519
        %v4522 = vrot.slane %v4448, 7
        %v4523 = vshll.u32 %v4409, 16
        %v4525 = vor.u32 %v4522, %v4523
        %v4526 = vrot.slane %v4451, 7
        %v4527 = vshll.u32 %v4410, 16
        %v4529 = vor.u32 %v4526, %v4527
        %v4530 = vrot.slane %v4454, 7
        %v4531 = vshll.u32 %v4411, 16
        %v4533 = vor.u32 %v4530, %v4531
        %v4534 = vrot.slane %v4457, 7
        %v4535 = vshll.u32 %v4412, 16
        %v4537 = vor.u32 %v4534, %v4535
        %v4538 = vrot.slane %v4460, 7
        %v4539 = vshll.u32 %v4413, 16
        %v4541 = vor.u32 %v4538, %v4539
        %v4574 = vrot.slane %v4479, 7
        %v4575 = vrot.slane %v4483, 7
        %v4576 = vrot.slane %v4487, 7
        %v4577 = vrot.slane %v4491, 7
        %v4578 = vrot.slane %v4495, 7
        %v4579 = vrot.slane %v4499, 7
        %v4580 = vrot.slane %v4503, 7
        %v4581 = vrot.slane %v4507, 7
        %v4582 = vrot.slane %v4511, 7
        %v4583 = vrot.slane %v4515, 7
        %v4584 = vrot.slane %v4519, 7
        %v4585 = vrot.slane %v4523, 7
        %v4586 = vrot.slane %v4527, 7
        %v4587 = vrot.slane %v4531, 7
        %v4588 = vrot.slane %v4535, 7
        %v4589 = vrot.slane %v4539, 7
        %v4606 = vsel %vm983, %v4415, %v4481
        %v4607 = vsel %vm983, %v4418, %v4485
        %v4608 = vsel %vm983, %v4421, %v4489
        %v4609 = vsel %vm983, %v4424, %v4493
        %v4610 = vsel %vm983, %v4427, %v4497
        %v4611 = vsel %vm983, %v4430, %v4501
        %v4612 = vsel %vm983, %v4433, %v4505
        %v4613 = vsel %vm983, %v4436, %v4509
        %v4614 = vsel %vm983, %v4439, %v4513
        %v4615 = vsel %vm983, %v4442, %v4517
        %v4616 = vsel %vm983, %v4445, %v4521
        %v4617 = vsel %vm983, %v4448, %v4525
        %v4618 = vsel %vm983, %v4451, %v4529
        %v4619 = vsel %vm983, %v4454, %v4533
        %v4620 = vsel %vm983, %v4457, %v4537
        %v4621 = vsel %vm983, %v4460, %v4541
        %v4622 = vsel %vm983, %v4478, %v4574
        %v4623 = vsel %vm983, %v4482, %v4575
        %v4624 = vsel %vm983, %v4486, %v4576
        %v4625 = vsel %vm983, %v4490, %v4577
        %v4626 = vsel %vm983, %v4494, %v4578
        %v4627 = vsel %vm983, %v4498, %v4579
        %v4628 = vsel %vm983, %v4502, %v4580
        %v4629 = vsel %vm983, %v4506, %v4581
        %v4630 = vsel %vm983, %v4510, %v4582
        %v4631 = vsel %vm983, %v4514, %v4583
        %v4632 = vsel %vm983, %v4518, %v4584
        %v4633 = vsel %vm983, %v4522, %v4585
        %v4634 = vsel %vm983, %v4526, %v4586
        %v4635 = vsel %vm983, %v4530, %v4587
        %v4636 = vsel %vm983, %v4534, %v4588
        %v4637 = vsel %vm983, %v4538, %v4589
        %v4639 = vshrl.u32 %v4606, 16
        %v4641 = vshll.u32 %v4606, 16
        %v4643 = vrot.slane %v4641, 1
        %v4644 = vor.u32 %v4639, %v4643
        %v4646 = vshll.u32 %v4622, 16
        %v4648 = vrot.slane %v4646, 1
        %v4649 = vsel %vm1016, %v4644, %v4648
        %v4651 = vshrl.u32 %v4607, 16
        %v4653 = vshll.u32 %v4607, 16
        %v4655 = vrot.slane %v4653, 1
        %v4656 = vor.u32 %v4651, %v4655
        %v4658 = vshll.u32 %v4623, 16
        %v4660 = vrot.slane %v4658, 1
        %v4661 = vsel %vm1016, %v4656, %v4660
        %v4663 = vshrl.u32 %v4608, 16
        %v4665 = vshll.u32 %v4608, 16
        %v4667 = vrot.slane %v4665, 1
        %v4668 = vor.u32 %v4663, %v4667
        %v4670 = vshll.u32 %v4624, 16
        %v4672 = vrot.slane %v4670, 1
        %v4673 = vsel %vm1016, %v4668, %v4672
        %v4675 = vshrl.u32 %v4609, 16
        %v4677 = vshll.u32 %v4609, 16
        %v4679 = vrot.slane %v4677, 1
        %v4680 = vor.u32 %v4675, %v4679
        %v4682 = vshll.u32 %v4625, 16
        %v4684 = vrot.slane %v4682, 1
        %v4685 = vsel %vm1016, %v4680, %v4684
        %v4687 = vshrl.u32 %v4610, 16
        %v4689 = vshll.u32 %v4610, 16
        %v4691 = vrot.slane %v4689, 1
        %v4692 = vor.u32 %v4687, %v4691
        %v4694 = vshll.u32 %v4626, 16
        %v4696 = vrot.slane %v4694, 1
        %v4697 = vsel %vm1016, %v4692, %v4696
        %v4699 = vshrl.u32 %v4611, 16
        %v4701 = vshll.u32 %v4611, 16
        %v4703 = vrot.slane %v4701, 1
        %v4704 = vor.u32 %v4699, %v4703
        %v4706 = vshll.u32 %v4627, 16
        %v4708 = vrot.slane %v4706, 1
        %v4709 = vsel %vm1016, %v4704, %v4708
        %v4711 = vshrl.u32 %v4612, 16
        %v4713 = vshll.u32 %v4612, 16
        %v4715 = vrot.slane %v4713, 1
        %v4716 = vor.u32 %v4711, %v4715
        %v4718 = vshll.u32 %v4628, 16
        %v4720 = vrot.slane %v4718, 1
        %v4721 = vsel %vm1016, %v4716, %v4720
        %v4723 = vshrl.u32 %v4613, 16
        %v4725 = vshll.u32 %v4613, 16
        %v4727 = vrot.slane %v4725, 1
        %v4728 = vor.u32 %v4723, %v4727
        %v4730 = vshll.u32 %v4629, 16
        %v4732 = vrot.slane %v4730, 1
        %v4733 = vsel %vm1016, %v4728, %v4732
        %v4735 = vshrl.u32 %v4614, 16
        %v4737 = vshll.u32 %v4614, 16
        %v4739 = vrot.slane %v4737, 1
        %v4740 = vor.u32 %v4735, %v4739
        %v4742 = vshll.u32 %v4630, 16
        %v4744 = vrot.slane %v4742, 1
        %v4745 = vsel %vm1016, %v4740, %v4744
        %v4747 = vshrl.u32 %v4615, 16
        %v4749 = vshll.u32 %v4615, 16
        %v4751 = vrot.slane %v4749, 1
        %v4752 = vor.u32 %v4747, %v4751
        %v4754 = vshll.u32 %v4631, 16
        %v4756 = vrot.slane %v4754, 1
        %v4757 = vsel %vm1016, %v4752, %v4756
        %v4759 = vshrl.u32 %v4616, 16
        %v4761 = vshll.u32 %v4616, 16
        %v4763 = vrot.slane %v4761, 1
        %v4764 = vor.u32 %v4759, %v4763
        %v4766 = vshll.u32 %v4632, 16
        %v4768 = vrot.slane %v4766, 1
        %v4769 = vsel %vm1016, %v4764, %v4768
        %v4771 = vshrl.u32 %v4617, 16
        %v4773 = vshll.u32 %v4617, 16
        %v4775 = vrot.slane %v4773, 1
        %v4776 = vor.u32 %v4771, %v4775
        %v4778 = vshll.u32 %v4633, 16
        %v4780 = vrot.slane %v4778, 1
        %v4781 = vsel %vm1016, %v4776, %v4780
        %v4783 = vshrl.u32 %v4618, 16
        %v4785 = vshll.u32 %v4618, 16
        %v4787 = vrot.slane %v4785, 1
        %v4788 = vor.u32 %v4783, %v4787
        %v4790 = vshll.u32 %v4634, 16
        %v4792 = vrot.slane %v4790, 1
        %v4793 = vsel %vm1016, %v4788, %v4792
        %v4795 = vshrl.u32 %v4619, 16
        %v4797 = vshll.u32 %v4619, 16
        %v4799 = vrot.slane %v4797, 1
        %v4800 = vor.u32 %v4795, %v4799
        %v4802 = vshll.u32 %v4635, 16
        %v4804 = vrot.slane %v4802, 1
        %v4805 = vsel %vm1016, %v4800, %v4804
        %v4807 = vshrl.u32 %v4620, 16
        %v4809 = vshll.u32 %v4620, 16
        %v4811 = vrot.slane %v4809, 1
        %v4812 = vor.u32 %v4807, %v4811
        %v4814 = vshll.u32 %v4636, 16
        %v4816 = vrot.slane %v4814, 1
        %v4817 = vsel %vm1016, %v4812, %v4816
        %v4848 = vrot.slane %v4606, 1
        %v4849 = vrot.slane %v4622, 1
        %v4850 = vsel %vm1227, %v4848, %v4849
        %v4851 = vrot.slane %v4607, 1
        %v4852 = vrot.slane %v4623, 1
        %v4853 = vsel %vm1227, %v4851, %v4852
        %v4854 = vrot.slane %v4608, 1
        %v4855 = vrot.slane %v4624, 1
        %v4856 = vsel %vm1227, %v4854, %v4855
        %v4857 = vrot.slane %v4609, 1
        %v4858 = vrot.slane %v4625, 1
        %v4859 = vsel %vm1227, %v4857, %v4858
        %v4860 = vrot.slane %v4610, 1
        %v4861 = vrot.slane %v4626, 1
        %v4862 = vsel %vm1227, %v4860, %v4861
        %v4863 = vrot.slane %v4611, 1
        %v4864 = vrot.slane %v4627, 1
        %v4865 = vsel %vm1227, %v4863, %v4864
        %v4866 = vrot.slane %v4612, 1
        %v4867 = vrot.slane %v4628, 1
        %v4868 = vsel %vm1227, %v4866, %v4867
        %v4869 = vrot.slane %v4613, 1
        %v4870 = vrot.slane %v4629, 1
        %v4871 = vsel %vm1227, %v4869, %v4870
        %v4872 = vrot.slane %v4614, 1
        %v4873 = vrot.slane %v4630, 1
        %v4874 = vsel %vm1227, %v4872, %v4873
        %v4875 = vrot.slane %v4615, 1
        %v4876 = vrot.slane %v4631, 1
        %v4877 = vsel %vm1227, %v4875, %v4876
        %v4878 = vrot.slane %v4616, 1
        %v4879 = vrot.slane %v4632, 1
        %v4880 = vsel %vm1227, %v4878, %v4879
        %v4881 = vrot.slane %v4617, 1
        %v4882 = vrot.slane %v4633, 1
        %v4883 = vsel %vm1227, %v4881, %v4882
        %v4884 = vrot.slane %v4618, 1
        %v4885 = vrot.slane %v4634, 1
        %v4886 = vsel %vm1227, %v4884, %v4885
        %v4887 = vrot.slane %v4619, 1
        %v4888 = vrot.slane %v4635, 1
        %v4889 = vsel %vm1227, %v4887, %v4888
        %v4890 = vrot.slane %v4620, 1
        %v4891 = vrot.slane %v4636, 1
        %v4892 = vsel %vm1227, %v4890, %v4891
        %v4894 = vshrl.u32 %v4621, 16
        %v4896 = vshll.u32 %v4621, 16
        %v4898 = vrot.slane %v4896, 1
        %v4899 = vor.u32 %v4894, %v4898
        %v4901 = vshll.u32 %v4637, 16
        %v4903 = vrot.slane %v4901, 1
        %v4904 = vsel %vm1016, %v4899, %v4903
        %v4907 = vrot.slane %v4621, 1
        %v4908 = vrot.slane %v4637, 1
        %v4909 = vsel %vm1227, %v4907, %v4908
        %4910 = vrot.lane.b32.xlu0 %v4649, 64
        %v4911 = vpop.permute.xlu0 %4910
        %4912 = vrot.lane.b32.xlu0 %v4661, 64
        %v4913 = vpop.permute.xlu0 %4912
        %4914 = vrot.lane.b32.xlu0 %v4673, 64
        %v4915 = vpop.permute.xlu0 %4914
        %4916 = vrot.lane.b32.xlu0 %v4685, 64
        %v4917 = vpop.permute.xlu0 %4916
        %4918 = vrot.lane.b32.xlu0 %v4697, 64
        %v4919 = vpop.permute.xlu0 %4918
        %4920 = vrot.lane.b32.xlu0 %v4709, 64
        %v4921 = vpop.permute.xlu0 %4920
        %4922 = vrot.lane.b32.xlu0 %v4721, 64
        %v4923 = vpop.permute.xlu0 %4922
        %4924 = vrot.lane.b32.xlu0 %v4733, 64
        %v4925 = vpop.permute.xlu0 %4924
        %4926 = vrot.lane.b32.xlu0 %v4745, 64
        %v4927 = vpop.permute.xlu0 %4926
        %4928 = vrot.lane.b32.xlu0 %v4757, 64
        %v4929 = vpop.permute.xlu0 %4928
        %4930 = vrot.lane.b32.xlu0 %v4769, 64
        %v4931 = vpop.permute.xlu0 %4930
        %4932 = vrot.lane.b32.xlu0 %v4781, 64
        %v4933 = vpop.permute.xlu0 %4932
        %4934 = vrot.lane.b32.xlu0 %v4793, 64
        %v4935 = vpop.permute.xlu0 %4934
        %4936 = vrot.lane.b32.xlu0 %v4805, 64
        %v4937 = vpop.permute.xlu0 %4936
        %4938 = vrot.lane.b32.xlu0 %v4817, 64
        %v4939 = vpop.permute.xlu0 %4938
        %4940 = vrot.lane.b32.xlu0 %v4607, 64
        %v4941 = vpop.permute.xlu0 %4940
        %4942 = vrot.lane.b32.xlu0 %v4606, 64
        %v4943 = vpop.permute.xlu0 %4942
        %4944 = vrot.lane.b32.xlu0 %v4608, 64
        %v4945 = vpop.permute.xlu0 %4944
        %4946 = vrot.lane.b32.xlu0 %v4609, 64
        %v4947 = vpop.permute.xlu0 %4946
        %4948 = vrot.lane.b32.xlu0 %v4610, 64
        %v4949 = vpop.permute.xlu0 %4948
        %4950 = vrot.lane.b32.xlu0 %v4611, 64
        %v4951 = vpop.permute.xlu0 %4950
        %4952 = vrot.lane.b32.xlu0 %v4612, 64
        %v4953 = vpop.permute.xlu0 %4952
        %4954 = vrot.lane.b32.xlu0 %v4613, 64
        %v4955 = vpop.permute.xlu0 %4954
        %4956 = vrot.lane.b32.xlu0 %v4614, 64
        %v4957 = vpop.permute.xlu0 %4956
        %4958 = vrot.lane.b32.xlu0 %v4615, 64
        %v4959 = vpop.permute.xlu0 %4958
        %4960 = vrot.lane.b32.xlu0 %v4616, 64
        %v4961 = vpop.permute.xlu0 %4960
        %4962 = vrot.lane.b32.xlu0 %v4617, 64
        %v4963 = vpop.permute.xlu0 %4962
        %4964 = vrot.lane.b32.xlu0 %v4618, 64
        %v4965 = vpop.permute.xlu0 %4964
        %4966 = vrot.lane.b32.xlu0 %v4619, 64
        %v4967 = vpop.permute.xlu0 %4966
        %4968 = vrot.lane.b32.xlu0 %v4620, 64
        %v4969 = vpop.permute.xlu0 %4968
        %4970 = vrot.lane.b32.xlu0 %v4621, 64
        %v4971 = vpop.permute.xlu0 %4970
        %4972 = vrot.lane.b32.xlu0 %v4853, 64
        %v4973 = vpop.permute.xlu0 %4972
        %4974 = vrot.lane.b32.xlu0 %v4850, 64
        %v4975 = vpop.permute.xlu0 %4974
        %4976 = vrot.lane.b32.xlu0 %v4856, 64
        %v4977 = vpop.permute.xlu0 %4976
        %4978 = vrot.lane.b32.xlu0 %v4859, 64
        %v4979 = vpop.permute.xlu0 %4978
        %4980 = vrot.lane.b32.xlu0 %v4862, 64
        %v4981 = vpop.permute.xlu0 %4980
        %4982 = vrot.lane.b32.xlu0 %v4865, 64
        %v4983 = vpop.permute.xlu0 %4982
        %4984 = vrot.lane.b32.xlu0 %v4868, 64
        %v4985 = vpop.permute.xlu0 %4984
        %4986 = vrot.lane.b32.xlu0 %v4871, 64
        %v4987 = vpop.permute.xlu0 %4986
        %4988 = vrot.lane.b32.xlu0 %v4874, 64
        %v4989 = vpop.permute.xlu0 %4988
        %4990 = vrot.lane.b32.xlu0 %v4877, 64
        %v4991 = vpop.permute.xlu0 %4990
        %4992 = vrot.lane.b32.xlu0 %v4880, 64
        %v4993 = vpop.permute.xlu0 %4992
        %4994 = vrot.lane.b32.xlu0 %v4883, 64
        %v4995 = vpop.permute.xlu0 %4994
        %4996 = vrot.lane.b32.xlu0 %v4886, 64
        %v4997 = vpop.permute.xlu0 %4996
        %4998 = vrot.lane.b32.xlu0 %v4889, 64
        %v4999 = vpop.permute.xlu0 %4998
        %5000 = vrot.lane.b32.xlu0 %v4892, 64
        %v5001 = vpop.permute.xlu0 %5000
        %5002 = vrot.lane.b32.xlu0 %v4909, 64
        %v5003 = vpop.permute.xlu0 %5002
        %5004 = vrot.lane.b32.xlu0 %v4904, 64
        %v5005 = vpop.permute.xlu0 %5004
        %v5007 = vsel %vm419, %v4606, %v4911
        %v5010 = vsel %vm419, %v4607, %v4913
        %v5013 = vsel %vm419, %v4608, %v4915
        %v5016 = vsel %vm419, %v4609, %v4917
        %v5019 = vsel %vm419, %v4610, %v4919
        %v5022 = vsel %vm419, %v4611, %v4921
        %v5025 = vsel %vm419, %v4612, %v4923
        %v5028 = vsel %vm419, %v4613, %v4925
        %v5031 = vsel %vm419, %v4614, %v4927
        %v5034 = vsel %vm419, %v4615, %v4929
        %v5037 = vsel %vm419, %v4616, %v4931
        %v5040 = vsel %vm419, %v4617, %v4933
        %v5043 = vsel %vm419, %v4618, %v4935
        %v5046 = vsel %vm419, %v4619, %v4937
        %v5049 = vsel %vm419, %v4620, %v4939
        %v5053 = vsel %vm419, %v4850, %v4941
        %v5057 = vsel %vm419, %v4853, %v4943
        %v5060 = vsel %vm419, %v4850, %v4945
        %v5064 = vsel %vm419, %v4856, %v4947
        %v5068 = vsel %vm419, %v4859, %v4949
        %v5072 = vsel %vm419, %v4862, %v4951
        %v5076 = vsel %vm419, %v4865, %v4953
        %v5080 = vsel %vm419, %v4868, %v4955
        %v5084 = vsel %vm419, %v4871, %v4957
        %v5088 = vsel %vm419, %v4874, %v4959
        %v5092 = vsel %vm419, %v4877, %v4961
        %v5096 = vsel %vm419, %v4880, %v4963
        %v5100 = vsel %vm419, %v4883, %v4965
        %v5104 = vsel %vm419, %v4886, %v4967
        %v5108 = vsel %vm419, %v4889, %v4969
        %v5112 = vsel %vm419, %v4892, %v4971
        %v5116 = vsel %vm419, %v4661, %v4973
        %v5120 = vsel %vm419, %v4649, %v4975
        %v5124 = vsel %vm419, %v4673, %v4977
        %v5128 = vsel %vm419, %v4685, %v4979
        %v5132 = vsel %vm419, %v4697, %v4981
        %v5136 = vsel %vm419, %v4709, %v4983
        %v5140 = vsel %vm419, %v4721, %v4985
        %v5144 = vsel %vm419, %v4733, %v4987
        %v5148 = vsel %vm419, %v4745, %v4989
        %v5152 = vsel %vm419, %v4757, %v4991
        %v5156 = vsel %vm419, %v4769, %v4993
        %v5160 = vsel %vm419, %v4781, %v4995
        %v5164 = vsel %vm419, %v4793, %v4997
        %v5168 = vsel %vm419, %v4805, %v4999
        %v5172 = vsel %vm419, %v4817, %v5001
        %v5176 = vsel %vm419, %v4904, %v5003
        %v5179 = vsel %vm419, %v4621, %v5005
        %v5181 = vld [vmem:[%s7] sm:$0xf]
        %v5182 = vld [vmem:[%s7 + $0x4] sm:$0xf]
        %v5183 = vld [vmem:[%s7 + $0x8] sm:$0xf]
        %v5184 = vld [vmem:[%s7 + $0xc] sm:$0xf]
        %v5185 = vld [vmem:[%s7 + $0x10] sm:$0xf]
        %v5186 = vld [vmem:[%s7 + $0x14] sm:$0xf]
        %v5187 = vld [vmem:[%s7 + $0x18] sm:$0xf]
        %v5188 = vld [vmem:[%s7 + $0x1c] sm:$0xf]
        %v5189 = vld [vmem:[%s7 + $0x20] sm:$0xf]
        %v5190 = vld [vmem:[%s7 + $0x24] sm:$0xf]
        %v5191 = vld [vmem:[%s7 + $0x28] sm:$0xf]
        %v5192 = vld [vmem:[%s7 + $0x2c] sm:$0xf]
        %v5193 = vld [vmem:[%s7 + $0x30] sm:$0xf]
        %v5194 = vld [vmem:[%s7 + $0x34] sm:$0xf]
        %v5195 = vld [vmem:[%s7 + $0x38] sm:$0xf]
        %v5196 = vld [vmem:[%s7 + $0x3c] sm:$0xf]
        %v5197 = vld [vmem:[%s7 + $0x40] sm:$0xf]
        %v5198 = vld [vmem:[%s7 + $0x44] sm:$0xf]
        %v5199 = vld [vmem:[%s7 + $0x48] sm:$0xf]
        %v5200 = vld [vmem:[%s7 + $0x4c] sm:$0xf]
        %v5201 = vld [vmem:[%s7 + $0x50] sm:$0xf]
        %v5202 = vld [vmem:[%s7 + $0x54] sm:$0xf]
        %v5203 = vld [vmem:[%s7 + $0x58] sm:$0xf]
        %v5204 = vld [vmem:[%s7 + $0x5c] sm:$0xf]
        %v5205 = vld [vmem:[%s7 + $0x60] sm:$0xf]
        %v5206 = vld [vmem:[%s7 + $0x64] sm:$0xf]
        %v5207 = vld [vmem:[%s7 + $0x68] sm:$0xf]
        %v5208 = vld [vmem:[%s7 + $0x6c] sm:$0xf]
        %v5209 = vld [vmem:[%s7 + $0x70] sm:$0xf]
        %v5210 = vld [vmem:[%s7 + $0x74] sm:$0xf]
        %v5211 = vld [vmem:[%s7 + $0x78] sm:$0xf]
        %v5212 = vld [vmem:[%s7 + $0x7c] sm:$0xf]
        %v5213 = vld [vmem:[%s7 + $0x80] sm:$0xf]
        %v5214 = vld [vmem:[%s7 + $0x84] sm:$0xf]
        %v5215 = vld [vmem:[%s7 + $0x88] sm:$0xf]
        %v5216 = vld [vmem:[%s7 + $0x8c] sm:$0xf]
        %v5217 = vld [vmem:[%s7 + $0x90] sm:$0xf]
        %v5218 = vld [vmem:[%s7 + $0x94] sm:$0xf]
        %v5219 = vld [vmem:[%s7 + $0x98] sm:$0xf]
        %v5220 = vld [vmem:[%s7 + $0x9c] sm:$0xf]
        %v5221 = vld [vmem:[%s7 + $0xa0] sm:$0xf]
        %v5222 = vld [vmem:[%s7 + $0xa4] sm:$0xf]
        %v5223 = vld [vmem:[%s7 + $0xa8] sm:$0xf]
        %v5224 = vld [vmem:[%s7 + $0xac] sm:$0xf]
        %v5225 = vld [vmem:[%s7 + $0xb0] sm:$0xf]
        %v5226 = vld [vmem:[%s7 + $0xb4] sm:$0xf]
        %v5227 = vld [vmem:[%s7 + $0xb8] sm:$0xf]
        %v5228 = vld [vmem:[%s7 + $0xbc] sm:$0xf]
        %v5229 = vld [vmem:[%s7 + $0xc0] sm:$0xf]
        %v5230 = vld [vmem:[%s7 + $0xc4] sm:$0xf]
        %v5231 = vld [vmem:[%s7 + $0xc8] sm:$0xf]
        %v5232 = vld [vmem:[%s7 + $0xcc] sm:$0xf]
        %v5233 = vld [vmem:[%s7 + $0xd0] sm:$0xf]
        %v5234 = vld [vmem:[%s7 + $0xd4] sm:$0xf]
        %v5235 = vld [vmem:[%s7 + $0xd8] sm:$0xf]
        %v5236 = vld [vmem:[%s7 + $0xdc] sm:$0xf]
        %v5237 = vld [vmem:[%s7 + $0xe0] sm:$0xf]
        %v5238 = vld [vmem:[%s7 + $0xe4] sm:$0xf]
        %v5239 = vld [vmem:[%s7 + $0xe8] sm:$0xf]
        %v5240 = vld [vmem:[%s7 + $0xec] sm:$0xf]
        %v5241 = vld [vmem:[%s7 + $0xf0] sm:$0xf]
        %v5242 = vld [vmem:[%s7 + $0xf4] sm:$0xf]
        %v5243 = vld [vmem:[%s7 + $0xf8] sm:$0xf]
        %v5244 = vld [vmem:[%s7 + $0xfc] sm:$0xf]
        %v5245 = vld [vmem:[%s7 + $0x100] sm:$0xf]
        %v5246 = vld [vmem:[%s7 + $0x104] sm:$0xf]
        %v5247 = vld [vmem:[%s7 + $0x108] sm:$0xf]
        %v5248 = vld [vmem:[%s7 + $0x10c] sm:$0xf]
        %v5249 = vld [vmem:[%s7 + $0x110] sm:$0xf]
        %v5250 = vld [vmem:[%s7 + $0x114] sm:$0xf]
        %v5251 = vld [vmem:[%s7 + $0x118] sm:$0xf]
        %v5252 = vld [vmem:[%s7 + $0x11c] sm:$0xf]
        %v5325 = vunpack.c.l.b16 %v5181
        %v5326 = vunpack.c.l.b16 %v5182
        %v5327 = vunpack.c.l.b16 %v5183
        %v5328 = vunpack.c.l.b16 %v5184
        %v5329 = vunpack.c.l.b16 %v5185
        %v5330 = vunpack.c.l.b16 %v5186
        %v5331 = vunpack.c.l.b16 %v5187
        %v5332 = vunpack.c.l.b16 %v5188
        %v5333 = vunpack.c.l.b16 %v5189
        %v5334 = vunpack.c.l.b16 %v5190
        %v5335 = vunpack.c.l.b16 %v5191
        %v5336 = vunpack.c.l.b16 %v5192
        %v5337 = vunpack.c.l.b16 %v5193
        %v5338 = vunpack.c.l.b16 %v5194
        %v5339 = vunpack.c.l.b16 %v5195
        %v5340 = vunpack.c.l.b16 %v5196
        %v5341 = vunpack.c.l.b16 %v5197
        %v5342 = vunpack.c.l.b16 %v5198
        %v5343 = vunpack.c.l.b16 %v5199
        %v5344 = vunpack.c.l.b16 %v5200
        %v5345 = vunpack.c.l.b16 %v5201
        %v5346 = vunpack.c.l.b16 %v5202
        %v5347 = vunpack.c.l.b16 %v5203
        %v5348 = vunpack.c.l.b16 %v5204
        %v5349 = vunpack.c.l.b16 %v5205
        %v5350 = vunpack.c.l.b16 %v5206
        %v5351 = vunpack.c.l.b16 %v5207
        %v5352 = vunpack.c.l.b16 %v5208
        %v5353 = vunpack.c.l.b16 %v5209
        %v5354 = vunpack.c.l.b16 %v5210
        %v5355 = vunpack.c.l.b16 %v5211
        %v5356 = vunpack.c.l.b16 %v5212
        %v5357 = vunpack.c.l.b16 %v5213
        %v5358 = vunpack.c.l.b16 %v5214
        %v5359 = vunpack.c.l.b16 %v5215
        %v5360 = vunpack.c.l.b16 %v5216
        %v5361 = vunpack.c.l.b16 %v5217
        %v5362 = vunpack.c.l.b16 %v5218
        %v5363 = vunpack.c.l.b16 %v5219
        %v5364 = vunpack.c.l.b16 %v5220
        %v5365 = vunpack.c.l.b16 %v5221
        %v5366 = vunpack.c.l.b16 %v5222
        %v5367 = vunpack.c.l.b16 %v5223
        %v5368 = vunpack.c.l.b16 %v5224
        %v5369 = vunpack.c.l.b16 %v5225
        %v5370 = vunpack.c.l.b16 %v5226
        %v5371 = vunpack.c.l.b16 %v5227
        %v5372 = vunpack.c.l.b16 %v5228
        %v5373 = vunpack.c.l.b16 %v5229
        %v5374 = vunpack.c.l.b16 %v5230
        %v5375 = vunpack.c.l.b16 %v5231
        %v5376 = vunpack.c.l.b16 %v5232
        %v5377 = vunpack.c.l.b16 %v5233
        %v5378 = vunpack.c.l.b16 %v5234
        %v5379 = vunpack.c.l.b16 %v5235
        %v5380 = vunpack.c.l.b16 %v5236
        %v5381 = vunpack.c.l.b16 %v5237
        %v5382 = vunpack.c.l.b16 %v5238
        %v5383 = vunpack.c.l.b16 %v5239
        %v5384 = vunpack.c.l.b16 %v5240
        %v5385 = vunpack.c.l.b16 %v5241
        %v5386 = vunpack.c.l.b16 %v5242
        %v5387 = vunpack.c.l.b16 %v5243
        %v5388 = vunpack.c.l.b16 %v5244
        %v5389 = vunpack.c.l.b16 %v5245
        %v5390 = vunpack.c.l.b16 %v5246
        %v5391 = vunpack.c.l.b16 %v5247
        %v5392 = vunpack.c.l.b16 %v5248
        %v5393 = vunpack.c.l.b16 %v5249
        %v5394 = vunpack.c.l.b16 %v5250
        %v5395 = vunpack.c.l.b16 %v5251
        %v5396 = vunpack.c.l.b16 %v5252
        %v5397 = vpack.c.b16 %v5326, %v5325
        %v5398 = vpack.c.b16 %v5328, %v5327
        %v5399 = vpack.c.b16 %v5330, %v5329
        %v5400 = vpack.c.b16 %v5332, %v5331
        %v5401 = vpack.c.b16 %v5334, %v5333
        %v5402 = vpack.c.b16 %v5336, %v5335
        %v5403 = vpack.c.b16 %v5338, %v5337
        %v5404 = vpack.c.b16 %v5340, %v5339
        %v5405 = vpack.c.b16 %v5342, %v5341
        %v5406 = vpack.c.b16 %v5344, %v5343
        %v5407 = vpack.c.b16 %v5346, %v5345
        %v5408 = vpack.c.b16 %v5348, %v5347
        %v5409 = vpack.c.b16 %v5350, %v5349
        %v5410 = vpack.c.b16 %v5352, %v5351
        %v5411 = vpack.c.b16 %v5354, %v5353
        %v5412 = vpack.c.b16 %v5356, %v5355
        %v5413 = vpack.c.b16 %v5358, %v5357
        %v5414 = vpack.c.b16 %v5360, %v5359
        %v5415 = vpack.c.b16 %v5362, %v5361
        %v5416 = vpack.c.b16 %v5364, %v5363
        %v5417 = vpack.c.b16 %v5366, %v5365
        %v5418 = vpack.c.b16 %v5368, %v5367
        %v5419 = vpack.c.b16 %v5370, %v5369
        %v5420 = vpack.c.b16 %v5372, %v5371
        %v5421 = vpack.c.b16 %v5374, %v5373
        %v5422 = vpack.c.b16 %v5376, %v5375
        %v5423 = vpack.c.b16 %v5378, %v5377
        %v5424 = vpack.c.b16 %v5380, %v5379
        %v5425 = vpack.c.b16 %v5382, %v5381
        %v5426 = vpack.c.b16 %v5384, %v5383
        %v5427 = vpack.c.b16 %v5386, %v5385
        %v5428 = vpack.c.b16 %v5388, %v5387
        %v5429 = vpack.c.b16 %v5390, %v5389
        %v5430 = vpack.c.b16 %v5392, %v5391
        %v5431 = vpack.c.b16 %v5394, %v5393
        %v5432 = vpack.c.b16 %v5396, %v5395
        %v5469 = vsel %vm419, %v4850, 0
        %v5471 = vsel %vm419, %v4856, 0
        %v5473 = vsel %vm419, %v4859, 0
        %v5475 = vsel %vm419, %v4862, 0
        %v5477 = vsel %vm419, %v4865, 0
        %v5479 = vsel %vm419, %v4868, 0
        %v5481 = vsel %vm419, %v4871, 0
        %v5483 = vsel %vm419, %v4874, 0
        %v5485 = vsel %vm419, %v4877, 0
        %v5487 = vsel %vm419, %v4880, 0
        %v5489 = vsel %vm419, %v4883, 0
        %v5491 = vsel %vm419, %v4886, 0
        %v5493 = vsel %vm419, %v4889, 0
        %v5495 = vsel %vm419, %v4892, 0
        %v5498 = vsel %vm419, %v4909, 0
        %5500 = vmatprep.subr.bf16.mxu0 0
        %5501 = vmatpush1.bf16.msra.mxu0 %v5397
        %5502 = vmatprep.subr.bf16.mxu0 0
        %5503 = vmatpush1.bf16.msra.mxu0 %v5398
        %5504 = vmatprep.subr.bf16.mxu0 0
        %5505 = vmatpush1.bf16.msra.mxu0 %v5399
        %5506 = vmatprep.subr.bf16.mxu0 0
        %5507 = vmatpush1.bf16.msra.mxu0 %v5400
        %5508 = vmatprep.subr.bf16.mxu0 0
        %5509 = vmatpush1.bf16.msra.mxu0 %v5401
        %5510 = vmatprep.subr.bf16.mxu0 0
        %5511 = vmatpush1.bf16.msra.mxu0 %v5402
        %5512 = vmatprep.subr.bf16.mxu0 0
        %5513 = vmatpush1.bf16.msra.mxu0 %v5403
        %5514 = vmatprep.subr.bf16.mxu0 0
        %5515 = vmatpush1.bf16.msra.mxu0 %v5404
        %5516 = vmatprep.subr.bf16.mxu0 0
        %5517 = vmatpush1.bf16.msra.mxu0 %v5405
        %5518 = vmatprep.subr.bf16.mxu0 0
        %5519 = vmatpush1.bf16.msra.mxu0 %v5406
        %5520 = vmatprep.subr.bf16.mxu0 0
        %5521 = vmatpush1.bf16.msra.mxu0 %v5407
        %5522 = vmatprep.subr.bf16.mxu0 0
        %5523 = vmatpush1.bf16.msra.mxu0 %v5408
        %5524 = vmatprep.subr.bf16.mxu0 0
        %5525 = vmatpush1.bf16.msra.mxu0 %v5409
        %5526 = vmatprep.subr.bf16.mxu0 0
        %5527 = vmatpush1.bf16.msra.mxu0 %v5410
        %5528 = vmatprep.subr.bf16.mxu0 0
        %5529 = vmatpush1.bf16.msra.mxu0 %v5411
        %5530 = vmatprep.subr.bf16.mxu0 0
        %5531 = vmatpush1.bf16.msra.mxu0 %v5412
        %5532 = vmatprep.mubr.bf16.mxu0 %v5053
        %5533 = vmatmul.mubr.bf16.gmra.mrb[0].mxu0 %v5007
        %v5534 = vpop.f32.mrb[0].mxu0
        %v5535 = vadd.f32 0.0, %v5534
        %v5536 = vpop.f32.mrb[0].mxu0
        %v5537 = vpop.f32.mrb[0].mxu0
        %v5538 = vadd.f32 0.0, %v5537
        %v5539 = vpop.f32.mrb[0].mxu0
        %5540 = vmatprep.mubr.bf16.mxu0 %v5057
        %5541 = vmatmul.mubr.bf16.gmra.mrb[0].mxu0 %v5010
        %v5542 = vpop.f32.mrb[0].mxu0
        %v5543 = vadd.f32 0.0, %v5542
        %v5544 = vpop.f32.mrb[0].mxu0
        %v5545 = vpop.f32.mrb[0].mxu0
        %v5546 = vadd.f32 0.0, %v5545
        %v5547 = vpop.f32.mrb[0].mxu0
        %5548 = vmatprep.mubr.bf16.mxu0 %v5060
        %5549 = vmatmul.mubr.bf16.gmra.mrb[0].mxu0 %v5007
        %v5550 = vpop.f32.mrb[0].mxu0
        %v5551 = vadd.f32 0.0, %v5550
        %v5552 = vpop.f32.mrb[0].mxu0
        %v5553 = vpop.f32.mrb[0].mxu0
        %v5554 = vadd.f32 0.0, %v5553
        %v5555 = vpop.f32.mrb[0].mxu0
        %5556 = vmatprep.mubr.bf16.mxu0 %v5064
        %5557 = vmatmul.mubr.bf16.gmra.mrb[0].mxu0 %v5013
        %v5558 = vpop.f32.mrb[0].mxu0
        %v5559 = vadd.f32 0.0, %v5558
        %v5560 = vpop.f32.mrb[0].mxu0
        %v5561 = vpop.f32.mrb[0].mxu0
        %v5562 = vadd.f32 0.0, %v5561
        %v5563 = vpop.f32.mrb[0].mxu0
        %5564 = vmatprep.mubr.bf16.mxu0 %v5068
        %5565 = vmatmul.mubr.bf16.gmra.mrb[0].mxu0 %v5016
        %v5566 = vpop.f32.mrb[0].mxu0
        %v5567 = vadd.f32 0.0, %v5566
        %v5568 = vpop.f32.mrb[0].mxu0
        %v5569 = vpop.f32.mrb[0].mxu0
        %v5570 = vadd.f32 0.0, %v5569
        %v5571 = vpop.f32.mrb[0].mxu0
        %5572 = vmatprep.mubr.bf16.mxu0 %v5072
        %5573 = vmatmul.mubr.bf16.gmra.mrb[0].mxu0 %v5019
        %v5574 = vpop.f32.mrb[0].mxu0
        %v5575 = vadd.f32 0.0, %v5574
        %v5576 = vpop.f32.mrb[0].mxu0
        %v5577 = vpop.f32.mrb[0].mxu0
        %v5578 = vadd.f32 0.0, %v5577
        %v5579 = vpop.f32.mrb[0].mxu0
        %5580 = vmatprep.mubr.bf16.mxu0 %v5076
        %5581 = vmatmul.mubr.bf16.gmra.mrb[0].mxu0 %v5022
        %v5582 = vpop.f32.mrb[0].mxu0
        %v5583 = vadd.f32 0.0, %v5582
        %v5584 = vpop.f32.mrb[0].mxu0
        %v5585 = vpop.f32.mrb[0].mxu0
        %v5586 = vadd.f32 0.0, %v5585
        %v5587 = vpop.f32.mrb[0].mxu0
        %5588 = vmatprep.mubr.bf16.mxu0 %v5080
        %5589 = vmatmul.mubr.bf16.gmra.mrb[0].mxu0 %v5025
        %v5590 = vpop.f32.mrb[0].mxu0
        %v5591 = vadd.f32 0.0, %v5590
        %v5592 = vpop.f32.mrb[0].mxu0
        %v5593 = vpop.f32.mrb[0].mxu0
        %v5594 = vadd.f32 0.0, %v5593
        %v5595 = vpop.f32.mrb[0].mxu0
        %5596 = vmatprep.mubr.bf16.mxu0 %v5084
        %5597 = vmatmul.mubr.bf16.gmra.mrb[0].mxu0 %v5028
        %v5598 = vpop.f32.mrb[0].mxu0
        %v5599 = vadd.f32 0.0, %v5598
        %v5600 = vpop.f32.mrb[0].mxu0
        %v5601 = vpop.f32.mrb[0].mxu0
        %v5602 = vadd.f32 0.0, %v5601
        %v5603 = vpop.f32.mrb[0].mxu0
        %5604 = vmatprep.mubr.bf16.mxu0 %v5088
        %5605 = vmatmul.mubr.bf16.gmra.mrb[0].mxu0 %v5031
        %v5606 = vpop.f32.mrb[0].mxu0
        %v5607 = vadd.f32 0.0, %v5606
        %v5608 = vpop.f32.mrb[0].mxu0
        %v5609 = vpop.f32.mrb[0].mxu0
        %v5610 = vadd.f32 0.0, %v5609
        %v5611 = vpop.f32.mrb[0].mxu0
        %5612 = vmatprep.mubr.bf16.mxu0 %v5092
        %5613 = vmatmul.mubr.bf16.gmra.mrb[0].mxu0 %v5034
        %v5614 = vpop.f32.mrb[0].mxu0
        %v5615 = vadd.f32 0.0, %v5614
        %v5616 = vpop.f32.mrb[0].mxu0
        %v5617 = vpop.f32.mrb[0].mxu0
        %v5618 = vadd.f32 0.0, %v5617
        %v5619 = vpop.f32.mrb[0].mxu0
        %5620 = vmatprep.mubr.bf16.mxu0 %v5096
        %5621 = vmatmul.mubr.bf16.gmra.mrb[0].mxu0 %v5037
        %v5622 = vpop.f32.mrb[0].mxu0
        %v5623 = vadd.f32 0.0, %v5622
        %v5624 = vpop.f32.mrb[0].mxu0
        %v5625 = vpop.f32.mrb[0].mxu0
        %v5626 = vadd.f32 0.0, %v5625
        %v5627 = vpop.f32.mrb[0].mxu0
        %5628 = vmatprep.mubr.bf16.mxu0 %v5100
        %5629 = vmatmul.mubr.bf16.gmra.mrb[0].mxu0 %v5040
        %v5630 = vpop.f32.mrb[0].mxu0
        %v5631 = vadd.f32 0.0, %v5630
        %v5632 = vpop.f32.mrb[0].mxu0
        %v5633 = vpop.f32.mrb[0].mxu0
        %v5634 = vadd.f32 0.0, %v5633
        %v5635 = vpop.f32.mrb[0].mxu0
        %5636 = vmatprep.mubr.bf16.mxu0 %v5104
        %5637 = vmatmul.mubr.bf16.gmra.mrb[0].mxu0 %v5043
        %v5638 = vpop.f32.mrb[0].mxu0
        %v5639 = vadd.f32 0.0, %v5638
        %v5640 = vpop.f32.mrb[0].mxu0
        %v5641 = vpop.f32.mrb[0].mxu0
        %v5642 = vadd.f32 0.0, %v5641
        %v5643 = vpop.f32.mrb[0].mxu0
        %5644 = vmatprep.mubr.bf16.mxu0 %v5108
        %5645 = vmatmul.mubr.bf16.gmra.mrb[0].mxu0 %v5046
        %v5646 = vpop.f32.mrb[0].mxu0
        %v5647 = vadd.f32 0.0, %v5646
        %v5648 = vpop.f32.mrb[0].mxu0
        %v5649 = vpop.f32.mrb[0].mxu0
        %v5650 = vadd.f32 0.0, %v5649
        %v5651 = vpop.f32.mrb[0].mxu0
        %5652 = vmatprep.mubr.bf16.mxu0 %v5112
        %5653 = vmatmul.mubr.bf16.gmra.mrb[0].mxu0 %v5049
        %v5654 = vpop.f32.mrb[0].mxu0
        %v5655 = vadd.f32 0.0, %v5654
        %v5656 = vpop.f32.mrb[0].mxu0
        %v5657 = vpop.f32.mrb[0].mxu0
        %v5658 = vadd.f32 0.0, %v5657
        %v5659 = vpop.f32.mrb[0].mxu0
        %5660 = vdwg.mxu0
        %5661 = vmatprep.subr.bf16.mxu0 0
        %5662 = vmatpush1.bf16.msra.mxu0 %v5413
        %5663 = vmatprep.subr.bf16.mxu0 0
        %5664 = vmatpush1.bf16.msra.mxu0 %v5414
        %5665 = vmatprep.subr.bf16.mxu0 0
        %5666 = vmatpush1.bf16.msra.mxu0 %v5415
        %5667 = vmatprep.subr.bf16.mxu0 0
        %5668 = vmatpush1.bf16.msra.mxu0 %v5416
        %5669 = vmatprep.subr.bf16.mxu0 0
        %5670 = vmatpush1.bf16.msra.mxu0 %v5417
        %5671 = vmatprep.subr.bf16.mxu0 0
        %5672 = vmatpush1.bf16.msra.mxu0 %v5418
        %5673 = vmatprep.subr.bf16.mxu0 0
        %5674 = vmatpush1.bf16.msra.mxu0 %v5419
        %5675 = vmatprep.subr.bf16.mxu0 0
        %5676 = vmatpush1.bf16.msra.mxu0 %v5420
        %5677 = vmatprep.subr.bf16.mxu0 0
        %5678 = vmatpush1.bf16.msra.mxu0 %v5421
        %5679 = vmatprep.subr.bf16.mxu0 0
        %5680 = vmatpush1.bf16.msra.mxu0 %v5422
        %5681 = vmatprep.subr.bf16.mxu0 0
        %5682 = vmatpush1.bf16.msra.mxu0 %v5423
        %5683 = vmatprep.subr.bf16.mxu0 0
        %5684 = vmatpush1.bf16.msra.mxu0 %v5424
        %5685 = vmatprep.subr.bf16.mxu0 0
        %5686 = vmatpush1.bf16.msra.mxu0 %v5425
        %5687 = vmatprep.subr.bf16.mxu0 0
        %5688 = vmatpush1.bf16.msra.mxu0 %v5426
        %5689 = vmatprep.subr.bf16.mxu0 0
        %5690 = vmatpush1.bf16.msra.mxu0 %v5427
        %5691 = vmatprep.subr.bf16.mxu0 0
        %5692 = vmatpush1.bf16.msra.mxu0 %v5428
        %5693 = vmatprep.mubr.bf16.mxu0 %v5007
        %5694 = vmatmul.mubr.bf16.gmra.mrb[0].mxu0 %v5116
        %v5695 = vpop.f32.mrb[0].mxu0
        %v5696 = vadd.f32 %v5535, %v5695
        %v5697 = vpop.f32.mrb[0].mxu0
        %v5698 = vpop.f32.mrb[0].mxu0
        %v5699 = vadd.f32 %v5538, %v5698
        %v5700 = vpop.f32.mrb[0].mxu0
        %5701 = vmatprep.mubr.bf16.mxu0 %v5013
        %5702 = vmatmul.mubr.bf16.gmra.mrb[0].mxu0 %v5120
        %v5703 = vpop.f32.mrb[0].mxu0
        %v5704 = vadd.f32 %v5543, %v5703
        %v5705 = vpop.f32.mrb[0].mxu0
        %v5706 = vpop.f32.mrb[0].mxu0
        %v5707 = vadd.f32 %v5546, %v5706
        %v5708 = vpop.f32.mrb[0].mxu0
        %5709 = vmatprep.mubr.bf16.mxu0 %v5016
        %5710 = vmatmul.mubr.bf16.gmra.mrb[0].mxu0 %v5124
        %v5711 = vpop.f32.mrb[0].mxu0
        %v5712 = vadd.f32 %v5551, %v5711
        %v5713 = vpop.f32.mrb[0].mxu0
        %v5714 = vpop.f32.mrb[0].mxu0
        %v5715 = vadd.f32 %v5554, %v5714
        %v5716 = vpop.f32.mrb[0].mxu0
        %5717 = vmatprep.mubr.bf16.mxu0 %v5019
        %5718 = vmatmul.mubr.bf16.gmra.mrb[0].mxu0 %v5128
        %v5719 = vpop.f32.mrb[0].mxu0
        %v5720 = vadd.f32 %v5559, %v5719
        %v5721 = vpop.f32.mrb[0].mxu0
        %v5722 = vpop.f32.mrb[0].mxu0
        %v5723 = vadd.f32 %v5562, %v5722
        %v5724 = vpop.f32.mrb[0].mxu0
        %5725 = vmatprep.mubr.bf16.mxu0 %v5022
        %5726 = vmatmul.mubr.bf16.gmra.mrb[0].mxu0 %v5132
        %v5727 = vpop.f32.mrb[0].mxu0
        %v5728 = vadd.f32 %v5567, %v5727
        %v5729 = vpop.f32.mrb[0].mxu0
        %v5730 = vpop.f32.mrb[0].mxu0
        %v5731 = vadd.f32 %v5570, %v5730
        %v5732 = vpop.f32.mrb[0].mxu0
        %5733 = vmatprep.mubr.bf16.mxu0 %v5025
        %5734 = vmatmul.mubr.bf16.gmra.mrb[0].mxu0 %v5136
        %v5735 = vpop.f32.mrb[0].mxu0
        %v5736 = vadd.f32 %v5575, %v5735
        %v5737 = vpop.f32.mrb[0].mxu0
        %v5738 = vpop.f32.mrb[0].mxu0
        %v5739 = vadd.f32 %v5578, %v5738
        %v5740 = vpop.f32.mrb[0].mxu0
        %5741 = vmatprep.mubr.bf16.mxu0 %v5028
        %5742 = vmatmul.mubr.bf16.gmra.mrb[0].mxu0 %v5140
        %v5743 = vpop.f32.mrb[0].mxu0
        %v5744 = vadd.f32 %v5583, %v5743
        %v5745 = vpop.f32.mrb[0].mxu0
        %v5746 = vpop.f32.mrb[0].mxu0
        %v5747 = vadd.f32 %v5586, %v5746
        %v5748 = vpop.f32.mrb[0].mxu0
        %5749 = vmatprep.mubr.bf16.mxu0 %v5031
        %5750 = vmatmul.mubr.bf16.gmra.mrb[0].mxu0 %v5144
        %v5751 = vpop.f32.mrb[0].mxu0
        %v5752 = vadd.f32 %v5591, %v5751
        %v5753 = vpop.f32.mrb[0].mxu0
        %v5754 = vpop.f32.mrb[0].mxu0
        %v5755 = vadd.f32 %v5594, %v5754
        %v5756 = vpop.f32.mrb[0].mxu0
        %5757 = vmatprep.mubr.bf16.mxu0 %v5034
        %5758 = vmatmul.mubr.bf16.gmra.mrb[0].mxu0 %v5148
        %v5759 = vpop.f32.mrb[0].mxu0
        %v5760 = vadd.f32 %v5599, %v5759
        %v5761 = vpop.f32.mrb[0].mxu0
        %v5762 = vpop.f32.mrb[0].mxu0
        %v5763 = vadd.f32 %v5602, %v5762
        %v5764 = vpop.f32.mrb[0].mxu0
        %5765 = vmatprep.mubr.bf16.mxu0 %v5037
        %5766 = vmatmul.mubr.bf16.gmra.mrb[0].mxu0 %v5152
        %v5767 = vpop.f32.mrb[0].mxu0
        %v5768 = vadd.f32 %v5607, %v5767
        %v5769 = vpop.f32.mrb[0].mxu0
        %v5770 = vpop.f32.mrb[0].mxu0
        %v5771 = vadd.f32 %v5610, %v5770
        %v5772 = vpop.f32.mrb[0].mxu0
        %5773 = vmatprep.mubr.bf16.mxu0 %v5040
        %5774 = vmatmul.mubr.bf16.gmra.mrb[0].mxu0 %v5156
        %v5775 = vpop.f32.mrb[0].mxu0
        %v5776 = vadd.f32 %v5615, %v5775
        %v5777 = vpop.f32.mrb[0].mxu0
        %v5778 = vpop.f32.mrb[0].mxu0
        %v5779 = vadd.f32 %v5618, %v5778
        %v5780 = vpop.f32.mrb[0].mxu0
        %5781 = vmatprep.mubr.bf16.mxu0 %v5043
        %5782 = vmatmul.mubr.bf16.gmra.mrb[0].mxu0 %v5160
        %v5783 = vpop.f32.mrb[0].mxu0
        %v5784 = vadd.f32 %v5623, %v5783
        %v5785 = vpop.f32.mrb[0].mxu0
        %v5786 = vpop.f32.mrb[0].mxu0
        %v5787 = vadd.f32 %v5626, %v5786
        %v5788 = vpop.f32.mrb[0].mxu0
        %5789 = vmatprep.mubr.bf16.mxu0 %v5046
        %5790 = vmatmul.mubr.bf16.gmra.mrb[0].mxu0 %v5164
        %v5791 = vpop.f32.mrb[0].mxu0
        %v5792 = vadd.f32 %v5631, %v5791
        %v5793 = vpop.f32.mrb[0].mxu0
        %v5794 = vpop.f32.mrb[0].mxu0
        %v5795 = vadd.f32 %v5634, %v5794
        %v5796 = vpop.f32.mrb[0].mxu0
        %5797 = vmatprep.mubr.bf16.mxu0 %v5049
        %5798 = vmatmul.mubr.bf16.gmra.mrb[0].mxu0 %v5168
        %v5799 = vpop.f32.mrb[0].mxu0
        %v5800 = vadd.f32 %v5639, %v5799
        %v5801 = vpop.f32.mrb[0].mxu0
        %v5802 = vpop.f32.mrb[0].mxu0
        %v5803 = vadd.f32 %v5642, %v5802
        %v5804 = vpop.f32.mrb[0].mxu0
        %5805 = vmatprep.mubr.bf16.mxu0 %v5179
        %5806 = vmatmul.mubr.bf16.gmra.mrb[0].mxu0 %v5172
        %v5807 = vpop.f32.mrb[0].mxu0
        %v5808 = vadd.f32 %v5647, %v5807
        %v5809 = vpop.f32.mrb[0].mxu0
        %v5810 = vpop.f32.mrb[0].mxu0
        %v5811 = vadd.f32 %v5650, %v5810
        %v5812 = vpop.f32.mrb[0].mxu0
        %5813 = vmatprep.mubr.bf16.mxu0 %v5049
        %5814 = vmatmul.mubr.bf16.gmra.mrb[0].mxu0 %v5176
        %v5815 = vpop.f32.mrb[0].mxu0
        %v5816 = vadd.f32 %v5655, %v5815
        %v5817 = vpop.f32.mrb[0].mxu0
        %v5818 = vpop.f32.mrb[0].mxu0
        %v5819 = vadd.f32 %v5658, %v5818
        %v5820 = vpop.f32.mrb[0].mxu0
        %5821 = vdwg.mxu0
        %5822 = vmatprep.subr.bf16.mxu0 0
        %5823 = vmatpush1.bf16.msra.mxu0 %v5429
        %5824 = vmatprep.subr.bf16.mxu0 0
        %5825 = vmatpush1.bf16.msra.mxu0 %v5430
        %5826 = vmatprep.subr.bf16.mxu0 0
        %5827 = vmatpush1.bf16.msra.mxu0 %v5431
        %5828 = vmatprep.subr.bf16.mxu0 0
        %5829 = vmatpush1.bf16.msra.mxu0 %v5432
        %5830 = vmatprep.subr.bf16.mxu0 0
        %5831 = vmatpush1.bf16.msra.mxu0 0
        %5832 = vmatprep.subr.bf16.mxu0 0
        %5833 = vmatpush1.bf16.msra.mxu0 0
        %5834 = vmatprep.subr.bf16.mxu0 0
        %5835 = vmatpush1.bf16.msra.mxu0 0
        %5836 = vmatprep.subr.bf16.mxu0 0
        %5837 = vmatpush1.bf16.msra.mxu0 0
        %5838 = vmatprep.subr.bf16.mxu0 0
        %5839 = vmatpush1.bf16.msra.mxu0 0
        %5840 = vmatprep.subr.bf16.mxu0 0
        %5841 = vmatpush1.bf16.msra.mxu0 0
        %5842 = vmatprep.subr.bf16.mxu0 0
        %5843 = vmatpush1.bf16.msra.mxu0 0
        %5844 = vmatprep.subr.bf16.mxu0 0
        %5845 = vmatpush1.bf16.msra.mxu0 0
        %5846 = vmatprep.subr.bf16.mxu0 0
        %5847 = vmatpush1.bf16.msra.mxu0 0
        %5848 = vmatprep.subr.bf16.mxu0 0
        %5849 = vmatpush1.bf16.msra.mxu0 0
        %5850 = vmatprep.subr.bf16.mxu0 0
        %5851 = vmatpush1.bf16.msra.mxu0 0
        %5852 = vmatprep.subr.bf16.mxu0 0
        %5853 = vmatpush1.bf16.msra.mxu0 0
        %5854 = vmatprep.mubr.bf16.mxu0 0
        %5855 = vmatmul.mubr.bf16.gmra.mrb[0].mxu0 %v5469
        %v5856 = vpop.f32.mrb[0].mxu0
        %v5857 = vadd.f32 %v5696, %v5856
        %v5858 = vpop.f32.mrb[0].mxu0
        %v5859 = vpop.f32.mrb[0].mxu0
        %v5860 = vadd.f32 %v5699, %v5859
        %v5861 = vpop.f32.mrb[0].mxu0
        %5862 = vmatprep.mubr.bf16.mxu0 0
        %5863 = vmatmul.mubr.bf16.gmra.mrb[0].mxu0 %v5471
        %v5864 = vpop.f32.mrb[0].mxu0
        %v5865 = vadd.f32 %v5704, %v5864
        %v5866 = vpop.f32.mrb[0].mxu0
        %v5867 = vpop.f32.mrb[0].mxu0
        %v5868 = vadd.f32 %v5707, %v5867
        %v5869 = vpop.f32.mrb[0].mxu0
        %5870 = vmatprep.mubr.bf16.mxu0 0
        %5871 = vmatmul.mubr.bf16.gmra.mrb[0].mxu0 %v5473
        %v5872 = vpop.f32.mrb[0].mxu0
        %v5873 = vadd.f32 %v5712, %v5872
        %v5874 = vpop.f32.mrb[0].mxu0
        %v5875 = vpop.f32.mrb[0].mxu0
        %v5876 = vadd.f32 %v5715, %v5875
        %v5877 = vpop.f32.mrb[0].mxu0
        %5878 = vmatprep.mubr.bf16.mxu0 0
        %5879 = vmatmul.mubr.bf16.gmra.mrb[0].mxu0 %v5475
        %v5880 = vpop.f32.mrb[0].mxu0
        %v5881 = vadd.f32 %v5720, %v5880
        %v5882 = vpop.f32.mrb[0].mxu0
        %v5883 = vpop.f32.mrb[0].mxu0
        %v5884 = vadd.f32 %v5723, %v5883
        %v5885 = vpop.f32.mrb[0].mxu0
        %5886 = vmatprep.mubr.bf16.mxu0 0
        %5887 = vmatmul.mubr.bf16.gmra.mrb[0].mxu0 %v5477
        %v5888 = vpop.f32.mrb[0].mxu0
        %v5889 = vadd.f32 %v5728, %v5888
        %v5890 = vpop.f32.mrb[0].mxu0
        %v5891 = vpop.f32.mrb[0].mxu0
        %v5892 = vadd.f32 %v5731, %v5891
        %v5893 = vpop.f32.mrb[0].mxu0
        %5894 = vmatprep.mubr.bf16.mxu0 0
        %5895 = vmatmul.mubr.bf16.gmra.mrb[0].mxu0 %v5479
        %v5896 = vpop.f32.mrb[0].mxu0
        %v5897 = vadd.f32 %v5736, %v5896
        %v5898 = vpop.f32.mrb[0].mxu0
        %v5899 = vpop.f32.mrb[0].mxu0
        %v5900 = vadd.f32 %v5739, %v5899
        %v5901 = vpop.f32.mrb[0].mxu0
        %5902 = vmatprep.mubr.bf16.mxu0 0
        %5903 = vmatmul.mubr.bf16.gmra.mrb[0].mxu0 %v5481
        %v5904 = vpop.f32.mrb[0].mxu0
        %v5905 = vadd.f32 %v5744, %v5904
        %v5906 = vpop.f32.mrb[0].mxu0
        %v5907 = vpop.f32.mrb[0].mxu0
        %v5908 = vadd.f32 %v5747, %v5907
        %v5909 = vpop.f32.mrb[0].mxu0
        %5910 = vmatprep.mubr.bf16.mxu0 0
        %5911 = vmatmul.mubr.bf16.gmra.mrb[0].mxu0 %v5483
        %v5912 = vpop.f32.mrb[0].mxu0
        %v5913 = vadd.f32 %v5752, %v5912
        %v5914 = vpop.f32.mrb[0].mxu0
        %v5915 = vpop.f32.mrb[0].mxu0
        %v5916 = vadd.f32 %v5755, %v5915
        %v5917 = vpop.f32.mrb[0].mxu0
        %5918 = vmatprep.mubr.bf16.mxu0 0
        %5919 = vmatmul.mubr.bf16.gmra.mrb[0].mxu0 %v5485
        %v5920 = vpop.f32.mrb[0].mxu0
        %v5921 = vadd.f32 %v5760, %v5920
        %v5922 = vpop.f32.mrb[0].mxu0
        %v5923 = vpop.f32.mrb[0].mxu0
        %v5924 = vadd.f32 %v5763, %v5923
        %v5925 = vpop.f32.mrb[0].mxu0
        %5926 = vmatprep.mubr.bf16.mxu0 0
        %5927 = vmatmul.mubr.bf16.gmra.mrb[0].mxu0 %v5487
        %v5928 = vpop.f32.mrb[0].mxu0
        %v5929 = vadd.f32 %v5768, %v5928
        %v5930 = vpop.f32.mrb[0].mxu0
        %v5931 = vpop.f32.mrb[0].mxu0
        %v5932 = vadd.f32 %v5771, %v5931
        %v5933 = vpop.f32.mrb[0].mxu0
        %5934 = vmatprep.mubr.bf16.mxu0 0
        %5935 = vmatmul.mubr.bf16.gmra.mrb[0].mxu0 %v5489
        %v5936 = vpop.f32.mrb[0].mxu0
        %v5937 = vadd.f32 %v5776, %v5936
        %v5938 = vpop.f32.mrb[0].mxu0
        %v5939 = vpop.f32.mrb[0].mxu0
        %v5940 = vadd.f32 %v5779, %v5939
        %v5941 = vpop.f32.mrb[0].mxu0
        %5942 = vmatprep.mubr.bf16.mxu0 0
        %5943 = vmatmul.mubr.bf16.gmra.mrb[0].mxu0 %v5491
        %v5944 = vpop.f32.mrb[0].mxu0
        %v5945 = vadd.f32 %v5784, %v5944
        %v5946 = vpop.f32.mrb[0].mxu0
        %v5947 = vpop.f32.mrb[0].mxu0
        %v5948 = vadd.f32 %v5787, %v5947
        %v5949 = vpop.f32.mrb[0].mxu0
        %5950 = vmatprep.mubr.bf16.mxu0 0
        %5951 = vmatmul.mubr.bf16.gmra.mrb[0].mxu0 %v5493
        %v5952 = vpop.f32.mrb[0].mxu0
        %v5953 = vadd.f32 %v5792, %v5952
        %v5954 = vpop.f32.mrb[0].mxu0
        %v5955 = vpop.f32.mrb[0].mxu0
        %v5956 = vadd.f32 %v5795, %v5955
        %v5957 = vpop.f32.mrb[0].mxu0
        %5958 = vmatprep.mubr.bf16.mxu0 0
        %5959 = vmatmul.mubr.bf16.gmra.mrb[0].mxu0 %v5495
        %v5960 = vpop.f32.mrb[0].mxu0
        %v5961 = vadd.f32 %v5800, %v5960
        %v5962 = vpop.f32.mrb[0].mxu0
        %v5963 = vpop.f32.mrb[0].mxu0
        %v5964 = vadd.f32 %v5803, %v5963
        %v5965 = vpop.f32.mrb[0].mxu0
        %5966 = vmatprep.mubr.bf16.mxu0 0
        %5967 = vmatmul.mubr.bf16.gmra.mrb[0].mxu0 %v5498
        %v5968 = vpop.f32.mrb[0].mxu0
        %v5969 = vadd.f32 %v5808, %v5968
        %v5970 = vpop.f32.mrb[0].mxu0
        %v5971 = vpop.f32.mrb[0].mxu0
        %v5972 = vadd.f32 %v5811, %v5971
        %v5973 = vpop.f32.mrb[0].mxu0
        %5974 = vmatprep.mubr.bf16.mxu0 0
        %5975 = vmatmul.mubr.bf16.gmra.mrb[0].mxu0 %v5495
        %v5976 = vpop.f32.mrb[0].mxu0
        %v5977 = vadd.f32 %v5816, %v5976
        %v5978 = vpop.f32.mrb[0].mxu0
        %v5979 = vpop.f32.mrb[0].mxu0
        %v5980 = vadd.f32 %v5819, %v5979
        %v5981 = vpop.f32.mrb[0].mxu0
        %5982 = vdwg.mxu0
        %v5983 = vld [vmem:[%s8] sm:$0x1]
        %v5985 = vlaneseq
        %v5986 = vshrl.u32 %v5985, 7
        %v5987 = vsub.s32 0, %v5986
        %v5988 = vrot.slane %v5983, %v5987
        %v5990 = vmul.f32 %v5857, %v5988
        %v5991 = vmul.f32 %v5860, %v5988
        %v5992 = vmul.f32 %v5865, %v5988
        %v5993 = vmul.f32 %v5868, %v5988
        %v5994 = vmul.f32 %v5873, %v5988
        %v5995 = vmul.f32 %v5876, %v5988
        %v5996 = vmul.f32 %v5881, %v5988
        %v5997 = vmul.f32 %v5884, %v5988
        %v5998 = vmul.f32 %v5889, %v5988
        %v5999 = vmul.f32 %v5892, %v5988
        %v6000 = vmul.f32 %v5897, %v5988
        %v6001 = vmul.f32 %v5900, %v5988
        %v6002 = vmul.f32 %v5905, %v5988
        %v6003 = vmul.f32 %v5908, %v5988
        %v6004 = vmul.f32 %v5913, %v5988
        %v6005 = vmul.f32 %v5916, %v5988
        %v6006 = vmul.f32 %v5921, %v5988
        %v6007 = vmul.f32 %v5924, %v5988
        %v6008 = vmul.f32 %v5929, %v5988
        %v6009 = vmul.f32 %v5932, %v5988
        %v6010 = vmul.f32 %v5937, %v5988
        %v6011 = vmul.f32 %v5940, %v5988
        %v6012 = vmul.f32 %v5945, %v5988
        %v6013 = vmul.f32 %v5948, %v5988
        %v6014 = vmul.f32 %v5953, %v5988
        %v6015 = vmul.f32 %v5956, %v5988
        %v6016 = vmul.f32 %v5961, %v5988
        %v6017 = vmul.f32 %v5964, %v5988
        %v6018 = vmul.f32 %v5969, %v5988
        %v6019 = vmul.f32 %v5972, %v5988
        %v6020 = vmul.f32 %v5977, %v5988
        %v6021 = vmul.f32 %v5980, %v5988
        %v6022 = vld [vmem:[%s9] sm:$0x1]
        %v6024 = vlaneseq
        %v6025 = vshrl.u32 %v6024, 7
        %v6026 = vsub.s32 0, %v6025
        %v6027 = vrot.slane %v6022, %v6026
        %v6029 = vadd.f32 %v5990, %v6027
        %v6030 = vadd.f32 %v5991, %v6027
        %v6031 = vadd.f32 %v5992, %v6027
        %v6032 = vadd.f32 %v5993, %v6027
        %v6033 = vadd.f32 %v5994, %v6027
        %v6034 = vadd.f32 %v5995, %v6027
        %v6035 = vadd.f32 %v5996, %v6027
        %v6036 = vadd.f32 %v5997, %v6027
        %v6037 = vadd.f32 %v5998, %v6027
        %v6038 = vadd.f32 %v5999, %v6027
        %v6039 = vadd.f32 %v6000, %v6027
        %v6040 = vadd.f32 %v6001, %v6027
        %v6041 = vadd.f32 %v6002, %v6027
        %v6042 = vadd.f32 %v6003, %v6027
        %v6043 = vadd.f32 %v6004, %v6027
        %v6044 = vadd.f32 %v6005, %v6027
        %v6045 = vadd.f32 %v6006, %v6027
        %v6046 = vadd.f32 %v6007, %v6027
        %v6047 = vadd.f32 %v6008, %v6027
        %v6048 = vadd.f32 %v6009, %v6027
        %v6049 = vadd.f32 %v6010, %v6027
        %v6050 = vadd.f32 %v6011, %v6027
        %v6051 = vadd.f32 %v6012, %v6027
        %v6052 = vadd.f32 %v6013, %v6027
        %v6053 = vadd.f32 %v6014, %v6027
        %v6054 = vadd.f32 %v6015, %v6027
        %v6055 = vadd.f32 %v6016, %v6027
        %v6056 = vadd.f32 %v6017, %v6027
        %v6057 = vadd.f32 %v6018, %v6027
        %v6058 = vadd.f32 %v6019, %v6027
        %v6059 = vadd.f32 %v6020, %v6027
        %v6060 = vadd.f32 %v6021, %v6027
        %v6061 = vmax.f32 %v6029, 0.0
        %v6062 = vmax.f32 %v6030, 0.0
        %v6063 = vmax.f32 %v6031, 0.0
        %v6064 = vmax.f32 %v6032, 0.0
        %v6065 = vmax.f32 %v6033, 0.0
        %v6066 = vmax.f32 %v6034, 0.0
        %v6067 = vmax.f32 %v6035, 0.0
        %v6068 = vmax.f32 %v6036, 0.0
        %v6069 = vmax.f32 %v6037, 0.0
        %v6070 = vmax.f32 %v6038, 0.0
        %v6071 = vmax.f32 %v6039, 0.0
        %v6072 = vmax.f32 %v6040, 0.0
        %v6073 = vmax.f32 %v6041, 0.0
        %v6074 = vmax.f32 %v6042, 0.0
        %v6075 = vmax.f32 %v6043, 0.0
        %v6076 = vmax.f32 %v6044, 0.0
        %v6077 = vmax.f32 %v6045, 0.0
        %v6078 = vmax.f32 %v6046, 0.0
        %v6079 = vmax.f32 %v6047, 0.0
        %v6080 = vmax.f32 %v6048, 0.0
        %v6081 = vmax.f32 %v6049, 0.0
        %v6082 = vmax.f32 %v6050, 0.0
        %v6083 = vmax.f32 %v6051, 0.0
        %v6084 = vmax.f32 %v6052, 0.0
        %v6085 = vmax.f32 %v6053, 0.0
        %v6086 = vmax.f32 %v6054, 0.0
        %v6087 = vmax.f32 %v6055, 0.0
        %v6088 = vmax.f32 %v6056, 0.0
        %v6089 = vmax.f32 %v6057, 0.0
        %v6090 = vmax.f32 %v6058, 0.0
        %v6091 = vmax.f32 %v6059, 0.0
        %v6092 = vmax.f32 %v6060, 0.0
        %6093 = vst.msk [vmem:[%s367] sm:$0xff] %vm419, %v6061
        %6094 = vst.msk [vmem:[%s367 + $0x8] sm:$0xff] %vm419, %v6062
        %6095 = vst.msk [vmem:[%s367 + $0x10] sm:$0xff] %vm419, %v6063
        %6096 = vst.msk [vmem:[%s367 + $0x18] sm:$0xff] %vm419, %v6064
        %6097 = vst.msk [vmem:[%s367 + $0x20] sm:$0xff] %vm419, %v6065
        %6098 = vst.msk [vmem:[%s367 + $0x28] sm:$0xff] %vm419, %v6066
        %6099 = vst.msk [vmem:[%s367 + $0x30] sm:$0xff] %vm419, %v6067
        %6100 = vst.msk [vmem:[%s367 + $0x38] sm:$0xff] %vm419, %v6068
        %6101 = vst.msk [vmem:[%s367 + $0x40] sm:$0xff] %vm419, %v6069
        %6102 = vst.msk [vmem:[%s367 + $0x48] sm:$0xff] %vm419, %v6070
        %6103 = vst.msk [vmem:[%s367 + $0x50] sm:$0xff] %vm419, %v6071
        %6104 = vst.msk [vmem:[%s367 + $0x58] sm:$0xff] %vm419, %v6072
        %6105 = vst.msk [vmem:[%s367 + $0x60] sm:$0xff] %vm419, %v6073
        %6106 = vst.msk [vmem:[%s367 + $0x68] sm:$0xff] %vm419, %v6074
        %6107 = vst.msk [vmem:[%s367 + $0x70] sm:$0xff] %vm419, %v6075
        %6108 = vst.msk [vmem:[%s367 + $0x78] sm:$0xff] %vm419, %v6076
        %6109 = vst.msk [vmem:[%s367 + $0x80] sm:$0xff] %vm419, %v6077
        %6110 = vst.msk [vmem:[%s367 + $0x88] sm:$0xff] %vm419, %v6078
        %6111 = vst.msk [vmem:[%s367 + $0x90] sm:$0xff] %vm419, %v6079
        %6112 = vst.msk [vmem:[%s367 + $0x98] sm:$0xff] %vm419, %v6080
        %6113 = vst.msk [vmem:[%s367 + $0xa0] sm:$0xff] %vm419, %v6081
        %6114 = vst.msk [vmem:[%s367 + $0xa8] sm:$0xff] %vm419, %v6082
        %6115 = vst.msk [vmem:[%s367 + $0xb0] sm:$0xff] %vm419, %v6083
        %6116 = vst.msk [vmem:[%s367 + $0xb8] sm:$0xff] %vm419, %v6084
        %6117 = vst.msk [vmem:[%s367 + $0xc0] sm:$0xff] %vm419, %v6085
        %6118 = vst.msk [vmem:[%s367 + $0xc8] sm:$0xff] %vm419, %v6086
        %6119 = vst.msk [vmem:[%s367 + $0xd0] sm:$0xff] %vm419, %v6087
        %6120 = vst.msk [vmem:[%s367 + $0xd8] sm:$0xff] %vm419, %v6088
        %6121 = vst.msk [vmem:[%s367 + $0xe0] sm:$0xff] %vm419, %v6089
        %6122 = vst.msk [vmem:[%s367 + $0xe8] sm:$0xff] %vm419, %v6090
        %6123 = vst.msk [vmem:[%s367 + $0xf0] sm:$0xff] %vm419, %v6091
        %6124 = vst.msk [vmem:[%s367 + $0xf8] sm:$0xff] %vm419, %v6092
        %s6125 = sand.u32 %s252, 1
        %s6126 = scalar_lea.sflag [#allocation3], %s6125
        %s6127 = sand.u32 %s252, 1
        %s6128 = smul.addr %s6127, 256
        %s6129 = scalar_lea.vmem [#allocation2], %s6128
        // Predicated region
        $region61: #{up2_forward.1} parent=59 // pred_check
          %p6130 = pneg %p262
        $region62: #{up2_forward.1} parent=59 // pred_check_branch
          %6132 = sbr.rel (%p6130) target = $region64
        $region63: #{up2_forward.1} parent=59 // pred_region
          %s6134 = ssub.s32 4096, 4096
          %6135 = vsyncadd %s6126, %s6134
          %s6136 = smul.addr %s24, 32
          %s6137 = smul.addr %s6136, 128
          %s6138 = scalar_lea.hbm %s10, %s6137
          %s6139 = sshll.u32 %s6129, 4
          %s6140 = int_to_ptr.vmem [resolvable:$true] %s6139
          %6145 = dma.vmem_to_hbm [thread:$0]  %s6140, 4096, %s6138, %s6126, 128, 128, 8
        $region64: #{up2_forward.1} parent=59 // pred_fallthru
          _
      $region60: #{up2_forward.1} parent=5 // pred_fallthru
        _
      %p6146 = scmp.le.s32.totalorder 2, %s19
      // Predicated region
      $region65: #{up2_forward.1} parent=5 // pred_check
        %p6147 = pneg %p6146
      $region66: #{up2_forward.1} parent=5 // pred_check_branch
        %6149 = sbr.rel (%p6147) target = $region68
      $region67: #{up2_forward.1} parent=5 // pred_region
        %s6150 = ssub.s32 %s19, 2
        // Predicated region
        $region69: #{up2_forward.1} parent=67 // pred_check
          %p6151 = pneg %p268
        $region70: #{up2_forward.1} parent=67 // pred_check_branch
          %6153 = sbr.rel (%p6151) target = $region72
        $region71: #{up2_forward.1} parent=67 // pred_region
          %s6154 = sand.u32 %s253, 1
          %s6155 = scalar_lea.sflag [#allocation3], %s6154
          %s6156 = sand.u32 %s253, 1
          %s6157 = smul.addr %s6156, 256
          %s6158 = scalar_lea.vmem [#allocation2], %s6157
          %6159 = dma.done %s6155, 4096
        $region72: #{up2_forward.1} parent=67 // pred_fallthru
          _
      $region68: #{up2_forward.1} parent=5 // pred_fallthru
        _
    $region6: #{up2_forward.1} parent=1 // loop_footer
      %s23 = sadd.s32 1, %s19
    $region7: #{up2_forward.1} parent=1 // loop_footer_branch
      %18 = sbr.rel target = $region3
    $region8: #{up2_forward.1} parent=1 // loop_exit
      _
    %6160 = vsyncpa [#allocation3], 1
    %s6161 = scalar_lea.sflag [#allocation3], 1
    %6162 = vsyncpa %s6161, 1

</llo_original>
